<compile_context>
chip_gen: v7x
topology: tpu7x:2x2x1
jax: 0.10.0
libtpu: 0.0.40
codegen_flags: <defaults>
</compile_context>

<pallas_src>
import math
import numpy as np
import jax
import jax.numpy as jnp
from jax import lax
from jax.experimental import pallas as pl
from jax.experimental.pallas import tpu as pltpu

EPS_LN = 1e-5
NEG_INF = -1e9


def _layer_norm(x, g, b):
    mu = jnp.mean(x, axis=-1, keepdims=True)
    var = jnp.mean((x - mu) ** 2, axis=-1, keepdims=True)
    return (x - mu) * lax.rsqrt(var + EPS_LN) * g + b


def _gelu(x):
    # BERT-style tanh approximation of GELU
    return 0.5 * x * (1.0 + jnp.tanh(0.7978845608028654 * (x + 0.044715 * x * x * x)))


def _softplus(x):
    # stable softplus, matches BCEWithLogitsLoss formulation
    return jnp.maximum(x, 0.0) + jnp.log1p(jnp.exp(-jnp.abs(x)))


def _sum_all_2d(x):
    # sum all elements of a 2-D array -> (1, 1): lane reduce, then sublane reduce
    return jnp.sum(jnp.sum(x, axis=-1, keepdims=True), axis=0, keepdims=True)


def make_kernel(n_layers, n_heads, Bt, L, D):
    dh = D // n_heads
    scale = 1.0 / math.sqrt(dh)
    T = Bt * L
    bf16 = jnp.bfloat16

    def kernel(logs_ref, tpos_ref, tneg_ref, mask_ref, posemb_ref,
               ln0g_ref, ln0b_ref,
               wq_ref, bq_ref, wk_ref, bk_ref, wv_ref, bv_ref, wo_ref, bo_ref,
               ln1g_ref, ln1b_ref, ln2g_ref, ln2b_ref,
               w1_ref, b1_ref, w2_ref, b2_ref,
               pos_out_ref, neg_out_ref, cnt_out_ref):
        x = logs_ref[...]                       # (Bt, L, D) f32
        key_valid = mask_ref[...] != 0.0        # (Bt, L)

        # additive attention mask (Bt, L, L): causal AND key-valid
        row_ids = lax.broadcasted_iota(jnp.int32, (L, L), 0)
        col_ids = lax.broadcasted_iota(jnp.int32, (L, L), 1)
        causal = col_ids <= row_ids
        allow = causal[None, :, :] & key_valid[:, None, :]
        add_mask = jnp.where(allow, 0.0, NEG_INF)        # (Bt, L, L) f32

        # TransformerEncoder input: LayerNorm(input_embs + position_embedding)
        x = _layer_norm(x + posemb_ref[...][None], ln0g_ref[...], ln0b_ref[...])
        x2 = x.reshape(T, D)                    # flatten (batch, seq) for MXU row fill

        # TODO(synk): for n_layers >> 2 convert this unrolled Python loop to
        # lax.fori_loop with dynamic wq_ref[l] indexing to bound vreg pressure.
        for l in range(n_layers):
            # --- multi-head self-attention sublayer (pre-norm residual) ---
            h = _layer_norm(x2, ln1g_ref[l], ln1b_ref[l])
            hb = h.astype(bf16)
            q2 = jnp.dot(hb, wq_ref[l], preferred_element_type=jnp.float32) + bq_ref[l]
            k2 = jnp.dot(hb, wk_ref[l], preferred_element_type=jnp.float32) + bk_ref[l]
            v2 = jnp.dot(hb, wv_ref[l], preferred_element_type=jnp.float32) + bv_ref[l]
            q3 = q2.reshape(Bt, L, D).astype(bf16)
            k3 = k2.reshape(Bt, L, D).astype(bf16)
            v3 = v2.reshape(Bt, L, D).astype(bf16)

            attn_out = jnp.zeros((T, D), jnp.float32)
            # short fixed head loop; attention itself is batched over the Bt
            # sequences in the tile (single batch-dim einsums), and the per-head
            # context is projected straight through wo[l, hd] (no concatenate).
            for hd in range(n_heads):
                sl = slice(hd * dh, (hd + 1) * dh)
                qh, kh, vh = q3[:, :, sl], k3[:, :, sl], v3[:, :, sl]
                sc = jnp.einsum('bqd,bkd->bqk', qh, kh,
                                preferred_element_type=jnp.float32)
                sc = sc * scale + add_mask
                sc = sc - jnp.max(sc, axis=-1, keepdims=True)
                e = jnp.exp(sc)
                inv_denom = pl.reciprocal(jnp.sum(e, axis=-1, keepdims=True),
                                          approx=True)
                attn = e * inv_denom
                ctx = jnp.einsum('bqk,bkd->bqd', attn.astype(bf16), vh,
                                 preferred_element_type=jnp.float32)
                attn_out = attn_out + jnp.dot(
                    ctx.reshape(T, dh).astype(bf16), wo_ref[l, hd],
                    preferred_element_type=jnp.float32)
            x2 = x2 + attn_out + bo_ref[l]

            # --- position-wise feed-forward sublayer (pre-norm residual) ---
            h2 = _layer_norm(x2, ln2g_ref[l], ln2b_ref[l])
            ff = _gelu(jnp.dot(h2.astype(bf16), w1_ref[l],
                               preferred_element_type=jnp.float32) + b1_ref[l])
            ff = jnp.dot(ff.astype(bf16), w2_ref[l],
                         preferred_element_type=jnp.float32) + b2_ref[l]
            x2 = x2 + ff

        prec = x2.reshape(Bt, L, D)
        pos_score = jnp.sum(prec * tpos_ref[...], axis=-1)   # (Bt, L)
        neg_score = jnp.sum(prec * tneg_ref[...], axis=-1)   # (Bt, L)
        valid = key_valid.astype(jnp.float32)                # (Bt, L)

        # per-block partial sums; final reduce + divide happens outside the kernel
        pos_out_ref[...] = _sum_all_2d(_softplus(-pos_score) * valid)  # BCE(., 1)
        neg_out_ref[...] = _sum_all_2d(_softplus(neg_score) * valid)   # BCE(., 0)
        cnt_out_ref[...] = _sum_all_2d(valid)

    return kernel


def model_forward_loss(params, sample_items_id, input_embs_content, log_mask,
                       n_heads, batch_tile=8):
    # use_modal=False: input_embs_all = id_embedding(sample_items_id)
    del input_embs_content
    D = params["id_emb"].shape[1]
    B, L = log_mask.shape
    max_seq_len = L + 1
    n_layers = params["wq"].shape[0]
    dh = D // n_heads

    # glue: embedding gather + view/slicing in plain JAX (already f32, no casts)
    embs = jnp.take(params["id_emb"], sample_items_id, axis=0)      # (B*max_seq_len*2, D)
    input_embs = embs.reshape(B, max_seq_len, 2, D)
    pos_items = input_embs[:, :, 0]
    neg_items = input_embs[:, :, 1]
    input_logs = pos_items[:, :-1, :]
    target_pos = pos_items[:, 1:, :]
    target_neg = neg_items[:, :-1, :]

    # batch tile: largest divisor of B not exceeding batch_tile
    Bt = 1
    for c in range(1, min(B, batch_tile) + 1):
        if B % c == 0:
            Bt = c
    nb = B // Bt

    # matmul weights in bf16 (f32 accumulation in-kernel); everything else f32
    bf16 = jnp.bfloat16
    wq = params["wq"].astype(bf16)
    wk = params["wk"].astype(bf16)
    wv = params["wv"].astype(bf16)
    wo_h = params["wo"].reshape(n_layers, n_heads, dh, D).astype(bf16)
    w1 = params["w1"].astype(bf16)
    w2 = params["w2"].astype(bf16)

    kernel = make_kernel(n_layers, n_heads, Bt, L, D)

    def full(shape):
        zeros = (0,) * len(shape)
        # TODO(synk): at production sizes add pipeline_mode=pl.Buffered(1) here
        # (constant index_map -> no double-buffering of the weight set on v7x).
        return pl.BlockSpec(shape, lambda b: zeros)

    seq_spec = pl.BlockSpec((Bt, L, D), lambda b: (b, 0, 0))
    mask_spec = pl.BlockSpec((Bt, L), lambda b: (b, 0))
    out_spec = pl.BlockSpec((1, 1), lambda b: (b, 0))

    in_specs = [
        seq_spec, seq_spec, seq_spec,
        mask_spec,
        full((L, D)),
        full((1, D)), full((1, D)),
        full((n_layers, D, D)), full((n_layers, 1, D)),
        full((n_layers, D, D)), full((n_layers, 1, D)),
        full((n_layers, D, D)), full((n_layers, 1, D)),
        full((n_layers, n_heads, dh, D)), full((n_layers, 1, D)),
        full((n_layers, 1, D)), full((n_layers, 1, D)),
        full((n_layers, 1, D)), full((n_layers, 1, D)),
        full((n_layers, D, 4 * D)), full((n_layers, 1, 4 * D)),
        full((n_layers, 4 * D, D)), full((n_layers, 1, D)),
    ]

    part_shape = jax.ShapeDtypeStruct((nb, 1), jnp.float32)
    pos_parts, neg_parts, cnt_parts = pl.pallas_call(
        kernel,
        out_shape=(part_shape, part_shape, part_shape),
        grid_spec=pltpu.PrefetchScalarGridSpec(
            num_scalar_prefetch=0,
            grid=(nb,),
            in_specs=in_specs,
            out_specs=[out_spec, out_spec, out_spec],
        ),
        compiler_params=pltpu.CompilerParams(dimension_semantics=("parallel",)),
    )(input_logs, target_pos, target_neg, log_mask,
      params["pos_emb"], params["ln0_g"], params["ln0_b"],
      wq, params["bq"], wk, params["bk"], wv, params["bv"], wo_h, params["bo"],
      params["ln1_g"], params["ln1_b"], params["ln2_g"], params["ln2_b"],
      w1, params["b1"], w2, params["b2"])

    cnt = jnp.sum(cnt_parts)
    return jnp.sum(pos_parts) / cnt + jnp.sum(neg_parts) / cnt


def reference_loss(params, sample_items_id, log_mask, n_heads):
    # pure-JAX mirror of the kernel math (bf16 operands at dot boundaries,
    # f32 accumulation), used as a correctness check
    bf16 = jnp.bfloat16
    f32 = jnp.float32
    D = params["id_emb"].shape[1]
    B, L = log_mask.shape
    max_seq_len = L + 1
    embs = jnp.take(params["id_emb"], sample_items_id, axis=0).reshape(B, max_seq_len, 2, D)
    pos_items, neg_items = embs[:, :, 0], embs[:, :, 1]
    logs, tpos, tneg = pos_items[:, :-1], pos_items[:, 1:], neg_items[:, :-1]
    n_layers = params["wq"].shape[0]
    dh = D // n_heads

    def mm(a, w):
        return jnp.einsum('...ld,dk->...lk', a.astype(bf16), w.astype(bf16),
                          preferred_element_type=f32)

    key_valid = log_mask != 0
    causal = jnp.tril(jnp.ones((L, L), bool))
    allow = causal[None] & key_valid[:, None, :]
    add_mask = jnp.where(allow, 0.0, NEG_INF)          # (B, L, L)

    x = _layer_norm(logs + params["pos_emb"][None], params["ln0_g"], params["ln0_b"])
    for l in range(n_layers):
        h = _layer_norm(x, params["ln1_g"][l], params["ln1_b"][l])
        q = mm(h, params["wq"][l]) + params["bq"][l]
        k = mm(h, params["wk"][l]) + params["bk"][l]
        v = mm(h, params["wv"][l]) + params["bv"][l]
        qh = q.reshape(B, L, n_heads, dh)
        kh = k.reshape(B, L, n_heads, dh)
        vh = v.reshape(B, L, n_heads, dh)
        sc = jnp.einsum('bqhd,bkhd->bhqk', qh.astype(bf16), kh.astype(bf16),
                        preferred_element_type=f32) / math.sqrt(dh) + add_mask[:, None]
        attn = jax.nn.softmax(sc, axis=-1)
        ctx = jnp.einsum('bhqk,bkhd->bqhd', attn.astype(bf16), vh.astype(bf16),
                         preferred_element_type=f32).reshape(B, L, D)
        x = x + mm(ctx, params["wo"][l]) + params["bo"][l]
        h2 = _layer_norm(x, params["ln2_g"][l], params["ln2_b"][l])
        ff = _gelu(mm(h2, params["w1"][l]) + params["b1"][l])
        x = x + mm(ff, params["w2"][l]) + params["b2"][l]

    pos_score = jnp.sum(x * tpos, -1)
    neg_score = jnp.sum(x * tneg, -1)
    m = key_valid.astype(f32)
    cnt = jnp.sum(m)
    return jnp.sum(_softplus(-pos_score) * m) / cnt + jnp.sum(_softplus(neg_score) * m) / cnt


def init_params(key, item_num, D, L, n_layers):
    ks = jax.random.split(key, 8)

    def nrm(k, shape, scale):
        return (jax.random.normal(k, shape) * scale).astype(jnp.float32)

    xavier_emb = math.sqrt(2.0 / (item_num + 1 + D))
    w_scale = 0.05
    return dict(
        id_emb=nrm(ks[0], (item_num + 1, D), xavier_emb),
        pos_emb=nrm(ks[1], (L, D), 0.02),
        ln0_g=jnp.ones((1, D), jnp.float32), ln0_b=jnp.zeros((1, D), jnp.float32),
        wq=nrm(ks[2], (n_layers, D, D), w_scale), bq=jnp.zeros((n_layers, 1, D), jnp.float32),
        wk=nrm(ks[3], (n_layers, D, D), w_scale), bk=jnp.zeros((n_layers, 1, D), jnp.float32),
        wv=nrm(ks[4], (n_layers, D, D), w_scale), bv=jnp.zeros((n_layers, 1, D), jnp.float32),
        wo=nrm(ks[5], (n_layers, D, D), w_scale), bo=jnp.zeros((n_layers, 1, D), jnp.float32),
        ln1_g=jnp.ones((n_layers, 1, D), jnp.float32), ln1_b=jnp.zeros((n_layers, 1, D), jnp.float32),
        ln2_g=jnp.ones((n_layers, 1, D), jnp.float32), ln2_b=jnp.zeros((n_layers, 1, D), jnp.float32),
        w1=nrm(ks[6], (n_layers, D, 4 * D), w_scale), b1=jnp.zeros((n_layers, 1, 4 * D), jnp.float32),
        w2=nrm(ks[7], (n_layers, 4 * D, D), w_scale), b2=jnp.zeros((n_layers, 1, D), jnp.float32),
    )


if __name__ == "__main__":
    # small shapes consistent with the module's forward:
    # args.max_seq_len=8 -> model max_seq_len=9, embedding_dim=32, 2 heads, 2 blocks
    B, L, D = 2, 8, 32
    n_heads, n_layers = 2, 2
    item_num = 50
    max_seq_len = L + 1
    word_embedding_dim = 64

    key = jax.random.PRNGKey(0)
    k_param, k_ids, k_content = jax.random.split(key, 3)
    params = init_params(k_param, item_num, D, L, n_layers)

    sample_items_id = jax.random.randint(k_ids, (B * max_seq_len * 2,), 0, item_num + 1,
                                         dtype=jnp.int32)
    input_embs_content = jax.random.normal(k_content, (B * max_seq_len * 2, word_embedding_dim),
                                           jnp.float32)  # unused (use_modal=False)
    log_mask = jnp.array([[0, 0, 0, 1, 1, 1, 1, 1],
                          [1, 1, 1, 1, 1, 1, 1, 1]], dtype=jnp.float32)

    loss = model_forward_loss(params, sample_items_id, input_embs_content, log_mask, n_heads)
    loss = jax.block_until_ready(loss)

    ref = reference_loss(params, sample_items_id, log_mask, n_heads)
    assert np.isfinite(float(loss))
    assert abs(float(loss) - float(ref)) < 1e-2, (float(loss), float(ref))
    print("KERNEL_OK")
</pallas_src>

<mosaic_0001>
module attributes {stable_mosaic.version = 11 : i64} {
  func.func @kernel(%arg0: i32, %arg1: memref<2x8x32xf32, #tpu.memory_space<vmem>>, %arg2: memref<2x8x32xf32, #tpu.memory_space<vmem>>, %arg3: memref<2x8x32xf32, #tpu.memory_space<vmem>>, %arg4: memref<2x8xf32, #tpu.memory_space<vmem>>, %arg5: memref<8x32xf32, #tpu.memory_space<vmem>>, %arg6: memref<1x32xf32, #tpu.memory_space<vmem>>, %arg7: memref<1x32xf32, #tpu.memory_space<vmem>>, %arg8: memref<2x32x32xbf16, #tpu.memory_space<vmem>>, %arg9: memref<2x1x32xf32, #tpu.memory_space<vmem>>, %arg10: memref<2x32x32xbf16, #tpu.memory_space<vmem>>, %arg11: memref<2x1x32xf32, #tpu.memory_space<vmem>>, %arg12: memref<2x32x32xbf16, #tpu.memory_space<vmem>>, %arg13: memref<2x1x32xf32, #tpu.memory_space<vmem>>, %arg14: memref<2x2x16x32xbf16, #tpu.memory_space<vmem>>, %arg15: memref<2x1x32xf32, #tpu.memory_space<vmem>>, %arg16: memref<2x1x32xf32, #tpu.memory_space<vmem>>, %arg17: memref<2x1x32xf32, #tpu.memory_space<vmem>>, %arg18: memref<2x1x32xf32, #tpu.memory_space<vmem>>, %arg19: memref<2x1x32xf32, #tpu.memory_space<vmem>>, %arg20: memref<2x32x128xbf16, #tpu.memory_space<vmem>>, %arg21: memref<2x1x128xf32, #tpu.memory_space<vmem>>, %arg22: memref<2x128x32xbf16, #tpu.memory_space<vmem>>, %arg23: memref<2x1x32xf32, #tpu.memory_space<vmem>>, %arg24: memref<1x1xf32, #tpu.memory_space<vmem>>, %arg25: memref<1x1xf32, #tpu.memory_space<vmem>>, %arg26: memref<1x1xf32, #tpu.memory_space<vmem>>) attributes {dimension_semantics = [#tpu.dimension_semantics<parallel>], iteration_bounds = array<i64: 1>, scalar_prefetch = 0 : i64, scratch_operands = 0 : i64, tpu.core_type = #tpu.core_type<tc>, window_params = [{transform_indices = @transform_0, window_bounds = array<i64: 2, 8, 32>}, {transform_indices = @transform_1, window_bounds = array<i64: 2, 8, 32>}, {transform_indices = @transform_2, window_bounds = array<i64: 2, 8, 32>}, {transform_indices = @transform_3, window_bounds = array<i64: 2, 8>}, {pipeline_mode = #tpu.pipeline_mode<synchronous>, transform_indices = @transform_4, window_bounds = array<i64: 8, 32>}, {pipeline_mode = #tpu.pipeline_mode<synchronous>, transform_indices = @transform_5, window_bounds = array<i64: 1, 32>}, {pipeline_mode = #tpu.pipeline_mode<synchronous>, transform_indices = @transform_6, window_bounds = array<i64: 1, 32>}, {pipeline_mode = #tpu.pipeline_mode<synchronous>, transform_indices = @transform_7, window_bounds = array<i64: 2, 32, 32>}, {pipeline_mode = #tpu.pipeline_mode<synchronous>, transform_indices = @transform_8, window_bounds = array<i64: 2, 1, 32>}, {pipeline_mode = #tpu.pipeline_mode<synchronous>, transform_indices = @transform_9, window_bounds = array<i64: 2, 32, 32>}, {pipeline_mode = #tpu.pipeline_mode<synchronous>, transform_indices = @transform_10, window_bounds = array<i64: 2, 1, 32>}, {pipeline_mode = #tpu.pipeline_mode<synchronous>, transform_indices = @transform_11, window_bounds = array<i64: 2, 32, 32>}, {pipeline_mode = #tpu.pipeline_mode<synchronous>, transform_indices = @transform_12, window_bounds = array<i64: 2, 1, 32>}, {pipeline_mode = #tpu.pipeline_mode<synchronous>, transform_indices = @transform_13, window_bounds = array<i64: 2, 2, 16, 32>}, {pipeline_mode = #tpu.pipeline_mode<synchronous>, transform_indices = @transform_14, window_bounds = array<i64: 2, 1, 32>}, {pipeline_mode = #tpu.pipeline_mode<synchronous>, transform_indices = @transform_15, window_bounds = array<i64: 2, 1, 32>}, {pipeline_mode = #tpu.pipeline_mode<synchronous>, transform_indices = @transform_16, window_bounds = array<i64: 2, 1, 32>}, {pipeline_mode = #tpu.pipeline_mode<synchronous>, transform_indices = @transform_17, window_bounds = array<i64: 2, 1, 32>}, {pipeline_mode = #tpu.pipeline_mode<synchronous>, transform_indices = @transform_18, window_bounds = array<i64: 2, 1, 32>}, {pipeline_mode = #tpu.pipeline_mode<synchronous>, transform_indices = @transform_19, window_bounds = array<i64: 2, 32, 128>}, {pipeline_mode = #tpu.pipeline_mode<synchronous>, transform_indices = @transform_20, window_bounds = array<i64: 2, 1, 128>}, {pipeline_mode = #tpu.pipeline_mode<synchronous>, transform_indices = @transform_21, window_bounds = array<i64: 2, 128, 32>}, {pipeline_mode = #tpu.pipeline_mode<synchronous>, transform_indices = @transform_22, window_bounds = array<i64: 2, 1, 32>}, {transform_indices = @transform_23, window_bounds = array<i64: 1, 1>}, {transform_indices = @transform_24, window_bounds = array<i64: 1, 1>}, {transform_indices = @transform_25, window_bounds = array<i64: 1, 1>}]} {
    %c0 = arith.constant 0 : index
    %c0_0 = arith.constant 0 : index
    %c0_1 = arith.constant 0 : index
    %0 = vector.load %arg1[%c0, %c0_0, %c0_1] : memref<2x8x32xf32, #tpu.memory_space<vmem>>, vector<2x8x32xf32>
    %c0_2 = arith.constant 0 : index
    %c0_3 = arith.constant 0 : index
    %1 = vector.load %arg4[%c0_2, %c0_3] : memref<2x8xf32, #tpu.memory_space<vmem>>, vector<2x8xf32>
    %cst = arith.constant 0.000000e+00 : f32
    %2 = vector.broadcast %cst : f32 to vector<2x8xf32>
    %3 = arith.cmpf one, %1, %2 : vector<2x8xf32>
    %4 = tpu.iota {dimensions = array<i32: 0>} : vector<8x8xi32>
    %5 = tpu.iota {dimensions = array<i32: 1>} : vector<8x8xi32>
    %6 = arith.cmpi sle, %5, %4 : vector<8x8xi32>
    %7 = vector.shape_cast %6 : vector<8x8xi1> to vector<1x8x8xi1>
    %8 = vector.shape_cast %3 : vector<2x8xi1> to vector<2x1x8xi1>
    %9 = vector.broadcast %7 : vector<1x8x8xi1> to vector<2x8x8xi1>
    %10 = vector.broadcast %8 : vector<2x1x8xi1> to vector<2x8x8xi1>
    %11 = arith.andi %9, %10 : vector<2x8x8xi1>
    %cst_4 = arith.constant 0.000000e+00 : f32
    %cst_5 = arith.constant -1.000000e+09 : f32
    %12 = vector.broadcast %cst_4 : f32 to vector<2x8x8xf32>
    %13 = vector.broadcast %cst_5 : f32 to vector<2x8x8xf32>
    %14 = arith.select %11, %12, %13 : vector<2x8x8xi1>, vector<2x8x8xf32>
    %c0_6 = arith.constant 0 : index
    %c0_7 = arith.constant 0 : index
    %15 = vector.load %arg5[%c0_6, %c0_7] : memref<8x32xf32, #tpu.memory_space<vmem>>, vector<8x32xf32>
    %16 = vector.shape_cast %15 : vector<8x32xf32> to vector<1x8x32xf32>
    %17 = vector.broadcast %16 : vector<1x8x32xf32> to vector<2x8x32xf32>
    %18 = arith.addf %0, %17 : vector<2x8x32xf32>
    %c0_8 = arith.constant 0 : index
    %c0_9 = arith.constant 0 : index
    %19 = vector.load %arg6[%c0_8, %c0_9] : memref<1x32xf32, #tpu.memory_space<vmem>>, vector<1x32xf32>
    %c0_10 = arith.constant 0 : index
    %c0_11 = arith.constant 0 : index
    %20 = vector.load %arg7[%c0_10, %c0_11] : memref<1x32xf32, #tpu.memory_space<vmem>>, vector<1x32xf32>
    %cst_12 = arith.constant dense<0.000000e+00> : vector<2x8xf32>
    %21 = vector.multi_reduction <add>, %18, %cst_12 [2] : vector<2x8x32xf32> to vector<2x8xf32>
    %22 = vector.shape_cast %21 : vector<2x8xf32> to vector<2x8x1xf32>
    %cst_13 = arith.constant 3.200000e+01 : f32
    %23 = vector.broadcast %cst_13 : f32 to vector<2x8x1xf32>
    %24 = arith.divf %22, %23 : vector<2x8x1xf32>
    %25 = vector.broadcast %24 : vector<2x8x1xf32> to vector<2x8x32xf32>
    %26 = arith.subf %18, %25 : vector<2x8x32xf32>
    %27 = arith.mulf %26, %26 : vector<2x8x32xf32>
    %cst_14 = arith.constant dense<0.000000e+00> : vector<2x8xf32>
    %28 = vector.multi_reduction <add>, %27, %cst_14 [2] : vector<2x8x32xf32> to vector<2x8xf32>
    %29 = vector.shape_cast %28 : vector<2x8xf32> to vector<2x8x1xf32>
    %cst_15 = arith.constant 3.200000e+01 : f32
    %30 = vector.broadcast %cst_15 : f32 to vector<2x8x1xf32>
    %31 = arith.divf %29, %30 : vector<2x8x1xf32>
    %32 = vector.broadcast %24 : vector<2x8x1xf32> to vector<2x8x32xf32>
    %33 = arith.subf %18, %32 : vector<2x8x32xf32>
    %cst_16 = arith.constant 9.99999974E-6 : f32
    %34 = vector.broadcast %cst_16 : f32 to vector<2x8x1xf32>
    %35 = arith.addf %31, %34 : vector<2x8x1xf32>
    %36 = math.rsqrt %35 : vector<2x8x1xf32>
    %37 = vector.broadcast %36 : vector<2x8x1xf32> to vector<2x8x32xf32>
    %38 = arith.mulf %33, %37 : vector<2x8x32xf32>
    %39 = vector.shape_cast %19 : vector<1x32xf32> to vector<1x1x32xf32>
    %40 = vector.broadcast %39 : vector<1x1x32xf32> to vector<2x8x32xf32>
    %41 = arith.mulf %38, %40 : vector<2x8x32xf32>
    %42 = vector.shape_cast %20 : vector<1x32xf32> to vector<1x1x32xf32>
    %43 = vector.broadcast %42 : vector<1x1x32xf32> to vector<2x8x32xf32>
    %44 = arith.addf %41, %43 : vector<2x8x32xf32>
    %45 = vector.shape_cast %44 : vector<2x8x32xf32> to vector<16x32xf32>
    %c0_17 = arith.constant 0 : index
    %c0_18 = arith.constant 0 : index
    %c0_19 = arith.constant 0 : index
    %46 = vector.load %arg16[%c0_17, %c0_18, %c0_19] : memref<2x1x32xf32, #tpu.memory_space<vmem>>, vector<1x1x32xf32>
    %47 = vector.shape_cast %46 : vector<1x1x32xf32> to vector<1x32xf32>
    %c0_20 = arith.constant 0 : index
    %c0_21 = arith.constant 0 : index
    %c0_22 = arith.constant 0 : index
    %48 = vector.load %arg17[%c0_20, %c0_21, %c0_22] : memref<2x1x32xf32, #tpu.memory_space<vmem>>, vector<1x1x32xf32>
    %49 = vector.shape_cast %48 : vector<1x1x32xf32> to vector<1x32xf32>
    %cst_23 = arith.constant dense<0.000000e+00> : vector<16xf32>
    %50 = vector.multi_reduction <add>, %45, %cst_23 [1] : vector<16x32xf32> to vector<16xf32>
    %51 = vector.shape_cast %50 : vector<16xf32> to vector<16x1xf32>
    %cst_24 = arith.constant 3.200000e+01 : f32
    %52 = vector.broadcast %cst_24 : f32 to vector<16x1xf32>
    %53 = arith.divf %51, %52 : vector<16x1xf32>
    %54 = vector.broadcast %53 : vector<16x1xf32> to vector<16x32xf32>
    %55 = arith.subf %45, %54 : vector<16x32xf32>
    %56 = arith.mulf %55, %55 : vector<16x32xf32>
    %cst_25 = arith.constant dense<0.000000e+00> : vector<16xf32>
    %57 = vector.multi_reduction <add>, %56, %cst_25 [1] : vector<16x32xf32> to vector<16xf32>
    %58 = vector.shape_cast %57 : vector<16xf32> to vector<16x1xf32>
    %cst_26 = arith.constant 3.200000e+01 : f32
    %59 = vector.broadcast %cst_26 : f32 to vector<16x1xf32>
    %60 = arith.divf %58, %59 : vector<16x1xf32>
    %61 = vector.broadcast %53 : vector<16x1xf32> to vector<16x32xf32>
    %62 = arith.subf %45, %61 : vector<16x32xf32>
    %cst_27 = arith.constant 9.99999974E-6 : f32
    %63 = vector.broadcast %cst_27 : f32 to vector<16x1xf32>
    %64 = arith.addf %60, %63 : vector<16x1xf32>
    %65 = math.rsqrt %64 : vector<16x1xf32>
    %66 = vector.broadcast %65 : vector<16x1xf32> to vector<16x32xf32>
    %67 = arith.mulf %62, %66 : vector<16x32xf32>
    %68 = vector.broadcast %47 : vector<1x32xf32> to vector<16x32xf32>
    %69 = arith.mulf %67, %68 : vector<16x32xf32>
    %70 = vector.broadcast %49 : vector<1x32xf32> to vector<16x32xf32>
    %71 = arith.addf %69, %70 : vector<16x32xf32>
    %72 = arith.truncf %71 : vector<16x32xf32> to vector<16x32xbf16>
    %c0_28 = arith.constant 0 : index
    %c0_29 = arith.constant 0 : index
    %c0_30 = arith.constant 0 : index
    %73 = vector.load %arg8[%c0_28, %c0_29, %c0_30] : memref<2x32x32xbf16, #tpu.memory_space<vmem>>, vector<1x32x32xbf16>
    %74 = vector.shape_cast %73 : vector<1x32x32xbf16> to vector<32x32xbf16>
    %cst_31 = arith.constant dense<0.000000e+00> : vector<16x32xf32>
    %75 = tpu.matmul %72, %74, %cst_31 {dimension_numbers = #tpu.dot_dimension_numbers<[1], [0], [0], [1], [0, 0, 1, 1], [], []>} : vector<16x32xbf16>, vector<32x32xbf16>, vector<16x32xf32> -> vector<16x32xf32>
    %c0_32 = arith.constant 0 : index
    %c0_33 = arith.constant 0 : index
    %c0_34 = arith.constant 0 : index
    %76 = vector.load %arg9[%c0_32, %c0_33, %c0_34] : memref<2x1x32xf32, #tpu.memory_space<vmem>>, vector<1x1x32xf32>
    %77 = vector.shape_cast %76 : vector<1x1x32xf32> to vector<1x32xf32>
    %78 = vector.broadcast %77 : vector<1x32xf32> to vector<16x32xf32>
    %79 = arith.addf %75, %78 : vector<16x32xf32>
    %c0_35 = arith.constant 0 : index
    %c0_36 = arith.constant 0 : index
    %c0_37 = arith.constant 0 : index
    %80 = vector.load %arg10[%c0_35, %c0_36, %c0_37] : memref<2x32x32xbf16, #tpu.memory_space<vmem>>, vector<1x32x32xbf16>
    %81 = vector.shape_cast %80 : vector<1x32x32xbf16> to vector<32x32xbf16>
    %cst_38 = arith.constant dense<0.000000e+00> : vector<16x32xf32>
    %82 = tpu.matmul %72, %81, %cst_38 {dimension_numbers = #tpu.dot_dimension_numbers<[1], [0], [0], [1], [0, 0, 1, 1], [], []>} : vector<16x32xbf16>, vector<32x32xbf16>, vector<16x32xf32> -> vector<16x32xf32>
    %c0_39 = arith.constant 0 : index
    %c0_40 = arith.constant 0 : index
    %c0_41 = arith.constant 0 : index
    %83 = vector.load %arg11[%c0_39, %c0_40, %c0_41] : memref<2x1x32xf32, #tpu.memory_space<vmem>>, vector<1x1x32xf32>
    %84 = vector.shape_cast %83 : vector<1x1x32xf32> to vector<1x32xf32>
    %85 = vector.broadcast %84 : vector<1x32xf32> to vector<16x32xf32>
    %86 = arith.addf %82, %85 : vector<16x32xf32>
    %c0_42 = arith.constant 0 : index
    %c0_43 = arith.constant 0 : index
    %c0_44 = arith.constant 0 : index
    %87 = vector.load %arg12[%c0_42, %c0_43, %c0_44] : memref<2x32x32xbf16, #tpu.memory_space<vmem>>, vector<1x32x32xbf16>
    %88 = vector.shape_cast %87 : vector<1x32x32xbf16> to vector<32x32xbf16>
    %cst_45 = arith.constant dense<0.000000e+00> : vector<16x32xf32>
    %89 = tpu.matmul %72, %88, %cst_45 {dimension_numbers = #tpu.dot_dimension_numbers<[1], [0], [0], [1], [0, 0, 1, 1], [], []>} : vector<16x32xbf16>, vector<32x32xbf16>, vector<16x32xf32> -> vector<16x32xf32>
    %c0_46 = arith.constant 0 : index
    %c0_47 = arith.constant 0 : index
    %c0_48 = arith.constant 0 : index
    %90 = vector.load %arg13[%c0_46, %c0_47, %c0_48] : memref<2x1x32xf32, #tpu.memory_space<vmem>>, vector<1x1x32xf32>
    %91 = vector.shape_cast %90 : vector<1x1x32xf32> to vector<1x32xf32>
    %92 = vector.broadcast %91 : vector<1x32xf32> to vector<16x32xf32>
    %93 = arith.addf %89, %92 : vector<16x32xf32>
    %94 = vector.shape_cast %79 : vector<16x32xf32> to vector<2x8x32xf32>
    %95 = arith.truncf %94 : vector<2x8x32xf32> to vector<2x8x32xbf16>
    %96 = vector.shape_cast %86 : vector<16x32xf32> to vector<2x8x32xf32>
    %97 = arith.truncf %96 : vector<2x8x32xf32> to vector<2x8x32xbf16>
    %98 = vector.shape_cast %93 : vector<16x32xf32> to vector<2x8x32xf32>
    %99 = arith.truncf %98 : vector<2x8x32xf32> to vector<2x8x32xbf16>
    %cst_49 = arith.constant 0.000000e+00 : f32
    %100 = vector.broadcast %cst_49 : f32 to vector<16x32xf32>
    %101 = vector.extract_strided_slice %95 {offsets = [0, 0, 0], sizes = [2, 8, 16], strides = [1, 1, 1]} : vector<2x8x32xbf16> to vector<2x8x16xbf16>
    %102 = vector.extract_strided_slice %97 {offsets = [0, 0, 0], sizes = [2, 8, 16], strides = [1, 1, 1]} : vector<2x8x32xbf16> to vector<2x8x16xbf16>
    %103 = vector.extract_strided_slice %99 {offsets = [0, 0, 0], sizes = [2, 8, 16], strides = [1, 1, 1]} : vector<2x8x32xbf16> to vector<2x8x16xbf16>
    "tpu.trace_start"() <{level = 10 : i32, message = "bqd,bkd->bqk"}> : () -> ()
    %cst_50 = arith.constant dense<0.000000e+00> : vector<2x8x8xf32>
    %104 = tpu.matmul %101, %102, %cst_50 {dimension_numbers = #tpu.dot_dimension_numbers<[2], [2], [1], [1], [0, 0, 0, 1, 1, 1], [0], [0]>} : vector<2x8x16xbf16>, vector<2x8x16xbf16>, vector<2x8x8xf32> -> vector<2x8x8xf32>
    "tpu.trace_stop"() : () -> ()
    %cst_51 = arith.constant 2.500000e-01 : f32
    %105 = vector.broadcast %cst_51 : f32 to vector<2x8x8xf32>
    %106 = arith.mulf %104, %105 : vector<2x8x8xf32>
    %107 = arith.addf %106, %14 : vector<2x8x8xf32>
    %cst_52 = arith.constant dense<0xFF800000> : vector<2x8xf32>
    %108 = vector.multi_reduction <maximumf>, %107, %cst_52 [2] : vector<2x8x8xf32> to vector<2x8xf32>
    %109 = vector.shape_cast %108 : vector<2x8xf32> to vector<2x8x1xf32>
    %110 = vector.broadcast %109 : vector<2x8x1xf32> to vector<2x8x8xf32>
    %111 = arith.subf %107, %110 : vector<2x8x8xf32>
    %112 = math.exp %111 : vector<2x8x8xf32>
    %cst_53 = arith.constant dense<0.000000e+00> : vector<2x8xf32>
    %113 = vector.multi_reduction <add>, %112, %cst_53 [2] : vector<2x8x8xf32> to vector<2x8xf32>
    %114 = vector.shape_cast %113 : vector<2x8xf32> to vector<2x8x1xf32>
    %115 = tpu.reciprocal %114 {approx = true} : vector<2x8x1xf32> -> vector<2x8x1xf32>
    %116 = vector.broadcast %115 : vector<2x8x1xf32> to vector<2x8x8xf32>
    %117 = arith.mulf %112, %116 : vector<2x8x8xf32>
    %118 = arith.truncf %117 : vector<2x8x8xf32> to vector<2x8x8xbf16>
    "tpu.trace_start"() <{level = 10 : i32, message = "bqk,bkd->bqd"}> : () -> ()
    %cst_54 = arith.constant dense<0.000000e+00> : vector<2x8x16xf32>
    %119 = tpu.matmul %118, %103, %cst_54 {dimension_numbers = #tpu.dot_dimension_numbers<[2], [1], [1], [2], [0, 0, 0, 1, 1, 2], [0], [0]>} : vector<2x8x8xbf16>, vector<2x8x16xbf16>, vector<2x8x16xf32> -> vector<2x8x16xf32>
    "tpu.trace_stop"() : () -> ()
    %120 = vector.shape_cast %119 : vector<2x8x16xf32> to vector<16x16xf32>
    %121 = arith.truncf %120 : vector<16x16xf32> to vector<16x16xbf16>
    %c0_55 = arith.constant 0 : index
    %c0_56 = arith.constant 0 : index
    %c0_57 = arith.constant 0 : index
    %c0_58 = arith.constant 0 : index
    %122 = vector.load %arg14[%c0_55, %c0_56, %c0_57, %c0_58] : memref<2x2x16x32xbf16, #tpu.memory_space<vmem>>, vector<1x1x16x32xbf16>
    %123 = vector.shape_cast %122 : vector<1x1x16x32xbf16> to vector<16x32xbf16>
    %cst_59 = arith.constant dense<0.000000e+00> : vector<16x32xf32>
    %124 = tpu.matmul %121, %123, %cst_59 {dimension_numbers = #tpu.dot_dimension_numbers<[1], [0], [0], [1], [0, 0, 1, 1], [], []>} : vector<16x16xbf16>, vector<16x32xbf16>, vector<16x32xf32> -> vector<16x32xf32>
    %125 = arith.addf %100, %124 : vector<16x32xf32>
    %126 = vector.extract_strided_slice %95 {offsets = [0, 0, 16], sizes = [2, 8, 16], strides = [1, 1, 1]} : vector<2x8x32xbf16> to vector<2x8x16xbf16>
    %127 = vector.extract_strided_slice %97 {offsets = [0, 0, 16], sizes = [2, 8, 16], strides = [1, 1, 1]} : vector<2x8x32xbf16> to vector<2x8x16xbf16>
    %128 = vector.extract_strided_slice %99 {offsets = [0, 0, 16], sizes = [2, 8, 16], strides = [1, 1, 1]} : vector<2x8x32xbf16> to vector<2x8x16xbf16>
    "tpu.trace_start"() <{level = 10 : i32, message = "bqd,bkd->bqk"}> : () -> ()
    %cst_60 = arith.constant dense<0.000000e+00> : vector<2x8x8xf32>
    %129 = tpu.matmul %126, %127, %cst_60 {dimension_numbers = #tpu.dot_dimension_numbers<[2], [2], [1], [1], [0, 0, 0, 1, 1, 1], [0], [0]>} : vector<2x8x16xbf16>, vector<2x8x16xbf16>, vector<2x8x8xf32> -> vector<2x8x8xf32>
    "tpu.trace_stop"() : () -> ()
    %cst_61 = arith.constant 2.500000e-01 : f32
    %130 = vector.broadcast %cst_61 : f32 to vector<2x8x8xf32>
    %131 = arith.mulf %129, %130 : vector<2x8x8xf32>
    %132 = arith.addf %131, %14 : vector<2x8x8xf32>
    %cst_62 = arith.constant dense<0xFF800000> : vector<2x8xf32>
    %133 = vector.multi_reduction <maximumf>, %132, %cst_62 [2] : vector<2x8x8xf32> to vector<2x8xf32>
    %134 = vector.shape_cast %133 : vector<2x8xf32> to vector<2x8x1xf32>
    %135 = vector.broadcast %134 : vector<2x8x1xf32> to vector<2x8x8xf32>
    %136 = arith.subf %132, %135 : vector<2x8x8xf32>
    %137 = math.exp %136 : vector<2x8x8xf32>
    %cst_63 = arith.constant dense<0.000000e+00> : vector<2x8xf32>
    %138 = vector.multi_reduction <add>, %137, %cst_63 [2] : vector<2x8x8xf32> to vector<2x8xf32>
    %139 = vector.shape_cast %138 : vector<2x8xf32> to vector<2x8x1xf32>
    %140 = tpu.reciprocal %139 {approx = true} : vector<2x8x1xf32> -> vector<2x8x1xf32>
    %141 = vector.broadcast %140 : vector<2x8x1xf32> to vector<2x8x8xf32>
    %142 = arith.mulf %137, %141 : vector<2x8x8xf32>
    %143 = arith.truncf %142 : vector<2x8x8xf32> to vector<2x8x8xbf16>
    "tpu.trace_start"() <{level = 10 : i32, message = "bqk,bkd->bqd"}> : () -> ()
    %cst_64 = arith.constant dense<0.000000e+00> : vector<2x8x16xf32>
    %144 = tpu.matmul %143, %128, %cst_64 {dimension_numbers = #tpu.dot_dimension_numbers<[2], [1], [1], [2], [0, 0, 0, 1, 1, 2], [0], [0]>} : vector<2x8x8xbf16>, vector<2x8x16xbf16>, vector<2x8x16xf32> -> vector<2x8x16xf32>
    "tpu.trace_stop"() : () -> ()
    %145 = vector.shape_cast %144 : vector<2x8x16xf32> to vector<16x16xf32>
    %146 = arith.truncf %145 : vector<16x16xf32> to vector<16x16xbf16>
    %c0_65 = arith.constant 0 : index
    %c1 = arith.constant 1 : index
    %c0_66 = arith.constant 0 : index
    %c0_67 = arith.constant 0 : index
    %147 = vector.load %arg14[%c0_65, %c1, %c0_66, %c0_67] : memref<2x2x16x32xbf16, #tpu.memory_space<vmem>>, vector<1x1x16x32xbf16>
    %148 = vector.shape_cast %147 : vector<1x1x16x32xbf16> to vector<16x32xbf16>
    %cst_68 = arith.constant dense<0.000000e+00> : vector<16x32xf32>
    %149 = tpu.matmul %146, %148, %cst_68 {dimension_numbers = #tpu.dot_dimension_numbers<[1], [0], [0], [1], [0, 0, 1, 1], [], []>} : vector<16x16xbf16>, vector<16x32xbf16>, vector<16x32xf32> -> vector<16x32xf32>
    %150 = arith.addf %125, %149 : vector<16x32xf32>
    %151 = arith.addf %45, %150 : vector<16x32xf32>
    %c0_69 = arith.constant 0 : index
    %c0_70 = arith.constant 0 : index
    %c0_71 = arith.constant 0 : index
    %152 = vector.load %arg15[%c0_69, %c0_70, %c0_71] : memref<2x1x32xf32, #tpu.memory_space<vmem>>, vector<1x1x32xf32>
    %153 = vector.shape_cast %152 : vector<1x1x32xf32> to vector<1x32xf32>
    %154 = vector.broadcast %153 : vector<1x32xf32> to vector<16x32xf32>
    %155 = arith.addf %151, %154 : vector<16x32xf32>
    %c0_72 = arith.constant 0 : index
    %c0_73 = arith.constant 0 : index
    %c0_74 = arith.constant 0 : index
    %156 = vector.load %arg18[%c0_72, %c0_73, %c0_74] : memref<2x1x32xf32, #tpu.memory_space<vmem>>, vector<1x1x32xf32>
    %157 = vector.shape_cast %156 : vector<1x1x32xf32> to vector<1x32xf32>
    %c0_75 = arith.constant 0 : index
    %c0_76 = arith.constant 0 : index
    %c0_77 = arith.constant 0 : index
    %158 = vector.load %arg19[%c0_75, %c0_76, %c0_77] : memref<2x1x32xf32, #tpu.memory_space<vmem>>, vector<1x1x32xf32>
    %159 = vector.shape_cast %158 : vector<1x1x32xf32> to vector<1x32xf32>
    %cst_78 = arith.constant dense<0.000000e+00> : vector<16xf32>
    %160 = vector.multi_reduction <add>, %155, %cst_78 [1] : vector<16x32xf32> to vector<16xf32>
    %161 = vector.shape_cast %160 : vector<16xf32> to vector<16x1xf32>
    %cst_79 = arith.constant 3.200000e+01 : f32
    %162 = vector.broadcast %cst_79 : f32 to vector<16x1xf32>
    %163 = arith.divf %161, %162 : vector<16x1xf32>
    %164 = vector.broadcast %163 : vector<16x1xf32> to vector<16x32xf32>
    %165 = arith.subf %155, %164 : vector<16x32xf32>
    %166 = arith.mulf %165, %165 : vector<16x32xf32>
    %cst_80 = arith.constant dense<0.000000e+00> : vector<16xf32>
    %167 = vector.multi_reduction <add>, %166, %cst_80 [1] : vector<16x32xf32> to vector<16xf32>
    %168 = vector.shape_cast %167 : vector<16xf32> to vector<16x1xf32>
    %cst_81 = arith.constant 3.200000e+01 : f32
    %169 = vector.broadcast %cst_81 : f32 to vector<16x1xf32>
    %170 = arith.divf %168, %169 : vector<16x1xf32>
    %171 = vector.broadcast %163 : vector<16x1xf32> to vector<16x32xf32>
    %172 = arith.subf %155, %171 : vector<16x32xf32>
    %cst_82 = arith.constant 9.99999974E-6 : f32
    %173 = vector.broadcast %cst_82 : f32 to vector<16x1xf32>
    %174 = arith.addf %170, %173 : vector<16x1xf32>
    %175 = math.rsqrt %174 : vector<16x1xf32>
    %176 = vector.broadcast %175 : vector<16x1xf32> to vector<16x32xf32>
    %177 = arith.mulf %172, %176 : vector<16x32xf32>
    %178 = vector.broadcast %157 : vector<1x32xf32> to vector<16x32xf32>
    %179 = arith.mulf %177, %178 : vector<16x32xf32>
    %180 = vector.broadcast %159 : vector<1x32xf32> to vector<16x32xf32>
    %181 = arith.addf %179, %180 : vector<16x32xf32>
    %182 = arith.truncf %181 : vector<16x32xf32> to vector<16x32xbf16>
    %c0_83 = arith.constant 0 : index
    %c0_84 = arith.constant 0 : index
    %c0_85 = arith.constant 0 : index
    %183 = vector.load %arg20[%c0_83, %c0_84, %c0_85] : memref<2x32x128xbf16, #tpu.memory_space<vmem>>, vector<1x32x128xbf16>
    %184 = vector.shape_cast %183 : vector<1x32x128xbf16> to vector<32x128xbf16>
    %cst_86 = arith.constant dense<0.000000e+00> : vector<16x128xf32>
    %185 = tpu.matmul %182, %184, %cst_86 {dimension_numbers = #tpu.dot_dimension_numbers<[1], [0], [0], [1], [0, 0, 1, 1], [], []>} : vector<16x32xbf16>, vector<32x128xbf16>, vector<16x128xf32> -> vector<16x128xf32>
    %c0_87 = arith.constant 0 : index
    %c0_88 = arith.constant 0 : index
    %c0_89 = arith.constant 0 : index
    %186 = vector.load %arg21[%c0_87, %c0_88, %c0_89] : memref<2x1x128xf32, #tpu.memory_space<vmem>>, vector<1x1x128xf32>
    %187 = vector.shape_cast %186 : vector<1x1x128xf32> to vector<1x128xf32>
    %188 = vector.broadcast %187 : vector<1x128xf32> to vector<16x128xf32>
    %189 = arith.addf %185, %188 : vector<16x128xf32>
    %cst_90 = arith.constant 5.000000e-01 : f32
    %190 = vector.broadcast %cst_90 : f32 to vector<16x128xf32>
    %191 = arith.mulf %190, %189 : vector<16x128xf32>
    %cst_91 = arith.constant 4.471500e-02 : f32
    %192 = vector.broadcast %cst_91 : f32 to vector<16x128xf32>
    %193 = arith.mulf %192, %189 : vector<16x128xf32>
    %194 = arith.mulf %193, %189 : vector<16x128xf32>
    %195 = arith.mulf %194, %189 : vector<16x128xf32>
    %196 = arith.addf %189, %195 : vector<16x128xf32>
    %cst_92 = arith.constant 0.797884583 : f32
    %197 = vector.broadcast %cst_92 : f32 to vector<16x128xf32>
    %198 = arith.mulf %197, %196 : vector<16x128xf32>
    %199 = math.tanh %198 : vector<16x128xf32>
    %cst_93 = arith.constant 1.000000e+00 : f32
    %200 = vector.broadcast %cst_93 : f32 to vector<16x128xf32>
    %201 = arith.addf %200, %199 : vector<16x128xf32>
    %202 = arith.mulf %191, %201 : vector<16x128xf32>
    %203 = arith.truncf %202 : vector<16x128xf32> to vector<16x128xbf16>
    %c0_94 = arith.constant 0 : index
    %c0_95 = arith.constant 0 : index
    %c0_96 = arith.constant 0 : index
    %204 = vector.load %arg22[%c0_94, %c0_95, %c0_96] : memref<2x128x32xbf16, #tpu.memory_space<vmem>>, vector<1x128x32xbf16>
    %205 = vector.shape_cast %204 : vector<1x128x32xbf16> to vector<128x32xbf16>
    %cst_97 = arith.constant dense<0.000000e+00> : vector<16x32xf32>
    %206 = tpu.matmul %203, %205, %cst_97 {dimension_numbers = #tpu.dot_dimension_numbers<[1], [0], [0], [1], [0, 0, 1, 1], [], []>} : vector<16x128xbf16>, vector<128x32xbf16>, vector<16x32xf32> -> vector<16x32xf32>
    %c0_98 = arith.constant 0 : index
    %c0_99 = arith.constant 0 : index
    %c0_100 = arith.constant 0 : index
    %207 = vector.load %arg23[%c0_98, %c0_99, %c0_100] : memref<2x1x32xf32, #tpu.memory_space<vmem>>, vector<1x1x32xf32>
    %208 = vector.shape_cast %207 : vector<1x1x32xf32> to vector<1x32xf32>
    %209 = vector.broadcast %208 : vector<1x32xf32> to vector<16x32xf32>
    %210 = arith.addf %206, %209 : vector<16x32xf32>
    %211 = arith.addf %155, %210 : vector<16x32xf32>
    %c1_101 = arith.constant 1 : index
    %c0_102 = arith.constant 0 : index
    %c0_103 = arith.constant 0 : index
    %212 = vector.load %arg16[%c1_101, %c0_102, %c0_103] : memref<2x1x32xf32, #tpu.memory_space<vmem>>, vector<1x1x32xf32>
    %213 = vector.shape_cast %212 : vector<1x1x32xf32> to vector<1x32xf32>
    %c1_104 = arith.constant 1 : index
    %c0_105 = arith.constant 0 : index
    %c0_106 = arith.constant 0 : index
    %214 = vector.load %arg17[%c1_104, %c0_105, %c0_106] : memref<2x1x32xf32, #tpu.memory_space<vmem>>, vector<1x1x32xf32>
    %215 = vector.shape_cast %214 : vector<1x1x32xf32> to vector<1x32xf32>
    %cst_107 = arith.constant dense<0.000000e+00> : vector<16xf32>
    %216 = vector.multi_reduction <add>, %211, %cst_107 [1] : vector<16x32xf32> to vector<16xf32>
    %217 = vector.shape_cast %216 : vector<16xf32> to vector<16x1xf32>
    %cst_108 = arith.constant 3.200000e+01 : f32
    %218 = vector.broadcast %cst_108 : f32 to vector<16x1xf32>
    %219 = arith.divf %217, %218 : vector<16x1xf32>
    %220 = vector.broadcast %219 : vector<16x1xf32> to vector<16x32xf32>
    %221 = arith.subf %211, %220 : vector<16x32xf32>
    %222 = arith.mulf %221, %221 : vector<16x32xf32>
    %cst_109 = arith.constant dense<0.000000e+00> : vector<16xf32>
    %223 = vector.multi_reduction <add>, %222, %cst_109 [1] : vector<16x32xf32> to vector<16xf32>
    %224 = vector.shape_cast %223 : vector<16xf32> to vector<16x1xf32>
    %cst_110 = arith.constant 3.200000e+01 : f32
    %225 = vector.broadcast %cst_110 : f32 to vector<16x1xf32>
    %226 = arith.divf %224, %225 : vector<16x1xf32>
    %227 = vector.broadcast %219 : vector<16x1xf32> to vector<16x32xf32>
    %228 = arith.subf %211, %227 : vector<16x32xf32>
    %cst_111 = arith.constant 9.99999974E-6 : f32
    %229 = vector.broadcast %cst_111 : f32 to vector<16x1xf32>
    %230 = arith.addf %226, %229 : vector<16x1xf32>
    %231 = math.rsqrt %230 : vector<16x1xf32>
    %232 = vector.broadcast %231 : vector<16x1xf32> to vector<16x32xf32>
    %233 = arith.mulf %228, %232 : vector<16x32xf32>
    %234 = vector.broadcast %213 : vector<1x32xf32> to vector<16x32xf32>
    %235 = arith.mulf %233, %234 : vector<16x32xf32>
    %236 = vector.broadcast %215 : vector<1x32xf32> to vector<16x32xf32>
    %237 = arith.addf %235, %236 : vector<16x32xf32>
    %238 = arith.truncf %237 : vector<16x32xf32> to vector<16x32xbf16>
    %c1_112 = arith.constant 1 : index
    %c0_113 = arith.constant 0 : index
    %c0_114 = arith.constant 0 : index
    %239 = vector.load %arg8[%c1_112, %c0_113, %c0_114] : memref<2x32x32xbf16, #tpu.memory_space<vmem>>, vector<1x32x32xbf16>
    %240 = vector.shape_cast %239 : vector<1x32x32xbf16> to vector<32x32xbf16>
    %cst_115 = arith.constant dense<0.000000e+00> : vector<16x32xf32>
    %241 = tpu.matmul %238, %240, %cst_115 {dimension_numbers = #tpu.dot_dimension_numbers<[1], [0], [0], [1], [0, 0, 1, 1], [], []>} : vector<16x32xbf16>, vector<32x32xbf16>, vector<16x32xf32> -> vector<16x32xf32>
    %c1_116 = arith.constant 1 : index
    %c0_117 = arith.constant 0 : index
    %c0_118 = arith.constant 0 : index
    %242 = vector.load %arg9[%c1_116, %c0_117, %c0_118] : memref<2x1x32xf32, #tpu.memory_space<vmem>>, vector<1x1x32xf32>
    %243 = vector.shape_cast %242 : vector<1x1x32xf32> to vector<1x32xf32>
    %244 = vector.broadcast %243 : vector<1x32xf32> to vector<16x32xf32>
    %245 = arith.addf %241, %244 : vector<16x32xf32>
    %c1_119 = arith.constant 1 : index
    %c0_120 = arith.constant 0 : index
    %c0_121 = arith.constant 0 : index
    %246 = vector.load %arg10[%c1_119, %c0_120, %c0_121] : memref<2x32x32xbf16, #tpu.memory_space<vmem>>, vector<1x32x32xbf16>
    %247 = vector.shape_cast %246 : vector<1x32x32xbf16> to vector<32x32xbf16>
    %cst_122 = arith.constant dense<0.000000e+00> : vector<16x32xf32>
    %248 = tpu.matmul %238, %247, %cst_122 {dimension_numbers = #tpu.dot_dimension_numbers<[1], [0], [0], [1], [0, 0, 1, 1], [], []>} : vector<16x32xbf16>, vector<32x32xbf16>, vector<16x32xf32> -> vector<16x32xf32>
    %c1_123 = arith.constant 1 : index
    %c0_124 = arith.constant 0 : index
    %c0_125 = arith.constant 0 : index
    %249 = vector.load %arg11[%c1_123, %c0_124, %c0_125] : memref<2x1x32xf32, #tpu.memory_space<vmem>>, vector<1x1x32xf32>
    %250 = vector.shape_cast %249 : vector<1x1x32xf32> to vector<1x32xf32>
    %251 = vector.broadcast %250 : vector<1x32xf32> to vector<16x32xf32>
    %252 = arith.addf %248, %251 : vector<16x32xf32>
    %c1_126 = arith.constant 1 : index
    %c0_127 = arith.constant 0 : index
    %c0_128 = arith.constant 0 : index
    %253 = vector.load %arg12[%c1_126, %c0_127, %c0_128] : memref<2x32x32xbf16, #tpu.memory_space<vmem>>, vector<1x32x32xbf16>
    %254 = vector.shape_cast %253 : vector<1x32x32xbf16> to vector<32x32xbf16>
    %cst_129 = arith.constant dense<0.000000e+00> : vector<16x32xf32>
    %255 = tpu.matmul %238, %254, %cst_129 {dimension_numbers = #tpu.dot_dimension_numbers<[1], [0], [0], [1], [0, 0, 1, 1], [], []>} : vector<16x32xbf16>, vector<32x32xbf16>, vector<16x32xf32> -> vector<16x32xf32>
    %c1_130 = arith.constant 1 : index
    %c0_131 = arith.constant 0 : index
    %c0_132 = arith.constant 0 : index
    %256 = vector.load %arg13[%c1_130, %c0_131, %c0_132] : memref<2x1x32xf32, #tpu.memory_space<vmem>>, vector<1x1x32xf32>
    %257 = vector.shape_cast %256 : vector<1x1x32xf32> to vector<1x32xf32>
    %258 = vector.broadcast %257 : vector<1x32xf32> to vector<16x32xf32>
    %259 = arith.addf %255, %258 : vector<16x32xf32>
    %260 = vector.shape_cast %245 : vector<16x32xf32> to vector<2x8x32xf32>
    %261 = arith.truncf %260 : vector<2x8x32xf32> to vector<2x8x32xbf16>
    %262 = vector.shape_cast %252 : vector<16x32xf32> to vector<2x8x32xf32>
    %263 = arith.truncf %262 : vector<2x8x32xf32> to vector<2x8x32xbf16>
    %264 = vector.shape_cast %259 : vector<16x32xf32> to vector<2x8x32xf32>
    %265 = arith.truncf %264 : vector<2x8x32xf32> to vector<2x8x32xbf16>
    %cst_133 = arith.constant 0.000000e+00 : f32
    %266 = vector.broadcast %cst_133 : f32 to vector<16x32xf32>
    %267 = vector.extract_strided_slice %261 {offsets = [0, 0, 0], sizes = [2, 8, 16], strides = [1, 1, 1]} : vector<2x8x32xbf16> to vector<2x8x16xbf16>
    %268 = vector.extract_strided_slice %263 {offsets = [0, 0, 0], sizes = [2, 8, 16], strides = [1, 1, 1]} : vector<2x8x32xbf16> to vector<2x8x16xbf16>
    %269 = vector.extract_strided_slice %265 {offsets = [0, 0, 0], sizes = [2, 8, 16], strides = [1, 1, 1]} : vector<2x8x32xbf16> to vector<2x8x16xbf16>
    "tpu.trace_start"() <{level = 10 : i32, message = "bqd,bkd->bqk"}> : () -> ()
    %cst_134 = arith.constant dense<0.000000e+00> : vector<2x8x8xf32>
    %270 = tpu.matmul %267, %268, %cst_134 {dimension_numbers = #tpu.dot_dimension_numbers<[2], [2], [1], [1], [0, 0, 0, 1, 1, 1], [0], [0]>} : vector<2x8x16xbf16>, vector<2x8x16xbf16>, vector<2x8x8xf32> -> vector<2x8x8xf32>
    "tpu.trace_stop"() : () -> ()
    %cst_135 = arith.constant 2.500000e-01 : f32
    %271 = vector.broadcast %cst_135 : f32 to vector<2x8x8xf32>
    %272 = arith.mulf %270, %271 : vector<2x8x8xf32>
    %273 = arith.addf %272, %14 : vector<2x8x8xf32>
    %cst_136 = arith.constant dense<0xFF800000> : vector<2x8xf32>
    %274 = vector.multi_reduction <maximumf>, %273, %cst_136 [2] : vector<2x8x8xf32> to vector<2x8xf32>
    %275 = vector.shape_cast %274 : vector<2x8xf32> to vector<2x8x1xf32>
    %276 = vector.broadcast %275 : vector<2x8x1xf32> to vector<2x8x8xf32>
    %277 = arith.subf %273, %276 : vector<2x8x8xf32>
    %278 = math.exp %277 : vector<2x8x8xf32>
    %cst_137 = arith.constant dense<0.000000e+00> : vector<2x8xf32>
    %279 = vector.multi_reduction <add>, %278, %cst_137 [2] : vector<2x8x8xf32> to vector<2x8xf32>
    %280 = vector.shape_cast %279 : vector<2x8xf32> to vector<2x8x1xf32>
    %281 = tpu.reciprocal %280 {approx = true} : vector<2x8x1xf32> -> vector<2x8x1xf32>
    %282 = vector.broadcast %281 : vector<2x8x1xf32> to vector<2x8x8xf32>
    %283 = arith.mulf %278, %282 : vector<2x8x8xf32>
    %284 = arith.truncf %283 : vector<2x8x8xf32> to vector<2x8x8xbf16>
    "tpu.trace_start"() <{level = 10 : i32, message = "bqk,bkd->bqd"}> : () -> ()
    %cst_138 = arith.constant dense<0.000000e+00> : vector<2x8x16xf32>
    %285 = tpu.matmul %284, %269, %cst_138 {dimension_numbers = #tpu.dot_dimension_numbers<[2], [1], [1], [2], [0, 0, 0, 1, 1, 2], [0], [0]>} : vector<2x8x8xbf16>, vector<2x8x16xbf16>, vector<2x8x16xf32> -> vector<2x8x16xf32>
    "tpu.trace_stop"() : () -> ()
    %286 = vector.shape_cast %285 : vector<2x8x16xf32> to vector<16x16xf32>
    %287 = arith.truncf %286 : vector<16x16xf32> to vector<16x16xbf16>
    %c1_139 = arith.constant 1 : index
    %c0_140 = arith.constant 0 : index
    %c0_141 = arith.constant 0 : index
    %c0_142 = arith.constant 0 : index
    %288 = vector.load %arg14[%c1_139, %c0_140, %c0_141, %c0_142] : memref<2x2x16x32xbf16, #tpu.memory_space<vmem>>, vector<1x1x16x32xbf16>
    %289 = vector.shape_cast %288 : vector<1x1x16x32xbf16> to vector<16x32xbf16>
    %cst_143 = arith.constant dense<0.000000e+00> : vector<16x32xf32>
    %290 = tpu.matmul %287, %289, %cst_143 {dimension_numbers = #tpu.dot_dimension_numbers<[1], [0], [0], [1], [0, 0, 1, 1], [], []>} : vector<16x16xbf16>, vector<16x32xbf16>, vector<16x32xf32> -> vector<16x32xf32>
    %291 = arith.addf %266, %290 : vector<16x32xf32>
    %292 = vector.extract_strided_slice %261 {offsets = [0, 0, 16], sizes = [2, 8, 16], strides = [1, 1, 1]} : vector<2x8x32xbf16> to vector<2x8x16xbf16>
    %293 = vector.extract_strided_slice %263 {offsets = [0, 0, 16], sizes = [2, 8, 16], strides = [1, 1, 1]} : vector<2x8x32xbf16> to vector<2x8x16xbf16>
    %294 = vector.extract_strided_slice %265 {offsets = [0, 0, 16], sizes = [2, 8, 16], strides = [1, 1, 1]} : vector<2x8x32xbf16> to vector<2x8x16xbf16>
    "tpu.trace_start"() <{level = 10 : i32, message = "bqd,bkd->bqk"}> : () -> ()
    %cst_144 = arith.constant dense<0.000000e+00> : vector<2x8x8xf32>
    %295 = tpu.matmul %292, %293, %cst_144 {dimension_numbers = #tpu.dot_dimension_numbers<[2], [2], [1], [1], [0, 0, 0, 1, 1, 1], [0], [0]>} : vector<2x8x16xbf16>, vector<2x8x16xbf16>, vector<2x8x8xf32> -> vector<2x8x8xf32>
    "tpu.trace_stop"() : () -> ()
    %cst_145 = arith.constant 2.500000e-01 : f32
    %296 = vector.broadcast %cst_145 : f32 to vector<2x8x8xf32>
    %297 = arith.mulf %295, %296 : vector<2x8x8xf32>
    %298 = arith.addf %297, %14 : vector<2x8x8xf32>
    %cst_146 = arith.constant dense<0xFF800000> : vector<2x8xf32>
    %299 = vector.multi_reduction <maximumf>, %298, %cst_146 [2] : vector<2x8x8xf32> to vector<2x8xf32>
    %300 = vector.shape_cast %299 : vector<2x8xf32> to vector<2x8x1xf32>
    %301 = vector.broadcast %300 : vector<2x8x1xf32> to vector<2x8x8xf32>
    %302 = arith.subf %298, %301 : vector<2x8x8xf32>
    %303 = math.exp %302 : vector<2x8x8xf32>
    %cst_147 = arith.constant dense<0.000000e+00> : vector<2x8xf32>
    %304 = vector.multi_reduction <add>, %303, %cst_147 [2] : vector<2x8x8xf32> to vector<2x8xf32>
    %305 = vector.shape_cast %304 : vector<2x8xf32> to vector<2x8x1xf32>
    %306 = tpu.reciprocal %305 {approx = true} : vector<2x8x1xf32> -> vector<2x8x1xf32>
    %307 = vector.broadcast %306 : vector<2x8x1xf32> to vector<2x8x8xf32>
    %308 = arith.mulf %303, %307 : vector<2x8x8xf32>
    %309 = arith.truncf %308 : vector<2x8x8xf32> to vector<2x8x8xbf16>
    "tpu.trace_start"() <{level = 10 : i32, message = "bqk,bkd->bqd"}> : () -> ()
    %cst_148 = arith.constant dense<0.000000e+00> : vector<2x8x16xf32>
    %310 = tpu.matmul %309, %294, %cst_148 {dimension_numbers = #tpu.dot_dimension_numbers<[2], [1], [1], [2], [0, 0, 0, 1, 1, 2], [0], [0]>} : vector<2x8x8xbf16>, vector<2x8x16xbf16>, vector<2x8x16xf32> -> vector<2x8x16xf32>
    "tpu.trace_stop"() : () -> ()
    %311 = vector.shape_cast %310 : vector<2x8x16xf32> to vector<16x16xf32>
    %312 = arith.truncf %311 : vector<16x16xf32> to vector<16x16xbf16>
    %c1_149 = arith.constant 1 : index
    %c1_150 = arith.constant 1 : index
    %c0_151 = arith.constant 0 : index
    %c0_152 = arith.constant 0 : index
    %313 = vector.load %arg14[%c1_149, %c1_150, %c0_151, %c0_152] : memref<2x2x16x32xbf16, #tpu.memory_space<vmem>>, vector<1x1x16x32xbf16>
    %314 = vector.shape_cast %313 : vector<1x1x16x32xbf16> to vector<16x32xbf16>
    %cst_153 = arith.constant dense<0.000000e+00> : vector<16x32xf32>
    %315 = tpu.matmul %312, %314, %cst_153 {dimension_numbers = #tpu.dot_dimension_numbers<[1], [0], [0], [1], [0, 0, 1, 1], [], []>} : vector<16x16xbf16>, vector<16x32xbf16>, vector<16x32xf32> -> vector<16x32xf32>
    %316 = arith.addf %291, %315 : vector<16x32xf32>
    %317 = arith.addf %211, %316 : vector<16x32xf32>
    %c1_154 = arith.constant 1 : index
    %c0_155 = arith.constant 0 : index
    %c0_156 = arith.constant 0 : index
    %318 = vector.load %arg15[%c1_154, %c0_155, %c0_156] : memref<2x1x32xf32, #tpu.memory_space<vmem>>, vector<1x1x32xf32>
    %319 = vector.shape_cast %318 : vector<1x1x32xf32> to vector<1x32xf32>
    %320 = vector.broadcast %319 : vector<1x32xf32> to vector<16x32xf32>
    %321 = arith.addf %317, %320 : vector<16x32xf32>
    %c1_157 = arith.constant 1 : index
    %c0_158 = arith.constant 0 : index
    %c0_159 = arith.constant 0 : index
    %322 = vector.load %arg18[%c1_157, %c0_158, %c0_159] : memref<2x1x32xf32, #tpu.memory_space<vmem>>, vector<1x1x32xf32>
    %323 = vector.shape_cast %322 : vector<1x1x32xf32> to vector<1x32xf32>
    %c1_160 = arith.constant 1 : index
    %c0_161 = arith.constant 0 : index
    %c0_162 = arith.constant 0 : index
    %324 = vector.load %arg19[%c1_160, %c0_161, %c0_162] : memref<2x1x32xf32, #tpu.memory_space<vmem>>, vector<1x1x32xf32>
    %325 = vector.shape_cast %324 : vector<1x1x32xf32> to vector<1x32xf32>
    %cst_163 = arith.constant dense<0.000000e+00> : vector<16xf32>
    %326 = vector.multi_reduction <add>, %321, %cst_163 [1] : vector<16x32xf32> to vector<16xf32>
    %327 = vector.shape_cast %326 : vector<16xf32> to vector<16x1xf32>
    %cst_164 = arith.constant 3.200000e+01 : f32
    %328 = vector.broadcast %cst_164 : f32 to vector<16x1xf32>
    %329 = arith.divf %327, %328 : vector<16x1xf32>
    %330 = vector.broadcast %329 : vector<16x1xf32> to vector<16x32xf32>
    %331 = arith.subf %321, %330 : vector<16x32xf32>
    %332 = arith.mulf %331, %331 : vector<16x32xf32>
    %cst_165 = arith.constant dense<0.000000e+00> : vector<16xf32>
    %333 = vector.multi_reduction <add>, %332, %cst_165 [1] : vector<16x32xf32> to vector<16xf32>
    %334 = vector.shape_cast %333 : vector<16xf32> to vector<16x1xf32>
    %cst_166 = arith.constant 3.200000e+01 : f32
    %335 = vector.broadcast %cst_166 : f32 to vector<16x1xf32>
    %336 = arith.divf %334, %335 : vector<16x1xf32>
    %337 = vector.broadcast %329 : vector<16x1xf32> to vector<16x32xf32>
    %338 = arith.subf %321, %337 : vector<16x32xf32>
    %cst_167 = arith.constant 9.99999974E-6 : f32
    %339 = vector.broadcast %cst_167 : f32 to vector<16x1xf32>
    %340 = arith.addf %336, %339 : vector<16x1xf32>
    %341 = math.rsqrt %340 : vector<16x1xf32>
    %342 = vector.broadcast %341 : vector<16x1xf32> to vector<16x32xf32>
    %343 = arith.mulf %338, %342 : vector<16x32xf32>
    %344 = vector.broadcast %323 : vector<1x32xf32> to vector<16x32xf32>
    %345 = arith.mulf %343, %344 : vector<16x32xf32>
    %346 = vector.broadcast %325 : vector<1x32xf32> to vector<16x32xf32>
    %347 = arith.addf %345, %346 : vector<16x32xf32>
    %348 = arith.truncf %347 : vector<16x32xf32> to vector<16x32xbf16>
    %c1_168 = arith.constant 1 : index
    %c0_169 = arith.constant 0 : index
    %c0_170 = arith.constant 0 : index
    %349 = vector.load %arg20[%c1_168, %c0_169, %c0_170] : memref<2x32x128xbf16, #tpu.memory_space<vmem>>, vector<1x32x128xbf16>
    %350 = vector.shape_cast %349 : vector<1x32x128xbf16> to vector<32x128xbf16>
    %cst_171 = arith.constant dense<0.000000e+00> : vector<16x128xf32>
    %351 = tpu.matmul %348, %350, %cst_171 {dimension_numbers = #tpu.dot_dimension_numbers<[1], [0], [0], [1], [0, 0, 1, 1], [], []>} : vector<16x32xbf16>, vector<32x128xbf16>, vector<16x128xf32> -> vector<16x128xf32>
    %c1_172 = arith.constant 1 : index
    %c0_173 = arith.constant 0 : index
    %c0_174 = arith.constant 0 : index
    %352 = vector.load %arg21[%c1_172, %c0_173, %c0_174] : memref<2x1x128xf32, #tpu.memory_space<vmem>>, vector<1x1x128xf32>
    %353 = vector.shape_cast %352 : vector<1x1x128xf32> to vector<1x128xf32>
    %354 = vector.broadcast %353 : vector<1x128xf32> to vector<16x128xf32>
    %355 = arith.addf %351, %354 : vector<16x128xf32>
    %cst_175 = arith.constant 5.000000e-01 : f32
    %356 = vector.broadcast %cst_175 : f32 to vector<16x128xf32>
    %357 = arith.mulf %356, %355 : vector<16x128xf32>
    %cst_176 = arith.constant 4.471500e-02 : f32
    %358 = vector.broadcast %cst_176 : f32 to vector<16x128xf32>
    %359 = arith.mulf %358, %355 : vector<16x128xf32>
    %360 = arith.mulf %359, %355 : vector<16x128xf32>
    %361 = arith.mulf %360, %355 : vector<16x128xf32>
    %362 = arith.addf %355, %361 : vector<16x128xf32>
    %cst_177 = arith.constant 0.797884583 : f32
    %363 = vector.broadcast %cst_177 : f32 to vector<16x128xf32>
    %364 = arith.mulf %363, %362 : vector<16x128xf32>
    %365 = math.tanh %364 : vector<16x128xf32>
    %cst_178 = arith.constant 1.000000e+00 : f32
    %366 = vector.broadcast %cst_178 : f32 to vector<16x128xf32>
    %367 = arith.addf %366, %365 : vector<16x128xf32>
    %368 = arith.mulf %357, %367 : vector<16x128xf32>
    %369 = arith.truncf %368 : vector<16x128xf32> to vector<16x128xbf16>
    %c1_179 = arith.constant 1 : index
    %c0_180 = arith.constant 0 : index
    %c0_181 = arith.constant 0 : index
    %370 = vector.load %arg22[%c1_179, %c0_180, %c0_181] : memref<2x128x32xbf16, #tpu.memory_space<vmem>>, vector<1x128x32xbf16>
    %371 = vector.shape_cast %370 : vector<1x128x32xbf16> to vector<128x32xbf16>
    %cst_182 = arith.constant dense<0.000000e+00> : vector<16x32xf32>
    %372 = tpu.matmul %369, %371, %cst_182 {dimension_numbers = #tpu.dot_dimension_numbers<[1], [0], [0], [1], [0, 0, 1, 1], [], []>} : vector<16x128xbf16>, vector<128x32xbf16>, vector<16x32xf32> -> vector<16x32xf32>
    %c1_183 = arith.constant 1 : index
    %c0_184 = arith.constant 0 : index
    %c0_185 = arith.constant 0 : index
    %373 = vector.load %arg23[%c1_183, %c0_184, %c0_185] : memref<2x1x32xf32, #tpu.memory_space<vmem>>, vector<1x1x32xf32>
    %374 = vector.shape_cast %373 : vector<1x1x32xf32> to vector<1x32xf32>
    %375 = vector.broadcast %374 : vector<1x32xf32> to vector<16x32xf32>
    %376 = arith.addf %372, %375 : vector<16x32xf32>
    %377 = arith.addf %321, %376 : vector<16x32xf32>
    %378 = vector.shape_cast %377 : vector<16x32xf32> to vector<2x8x32xf32>
    %c0_186 = arith.constant 0 : index
    %c0_187 = arith.constant 0 : index
    %c0_188 = arith.constant 0 : index
    %379 = vector.load %arg2[%c0_186, %c0_187, %c0_188] : memref<2x8x32xf32, #tpu.memory_space<vmem>>, vector<2x8x32xf32>
    %380 = arith.mulf %378, %379 : vector<2x8x32xf32>
    %cst_189 = arith.constant dense<0.000000e+00> : vector<2x8xf32>
    %381 = vector.multi_reduction <add>, %380, %cst_189 [2] : vector<2x8x32xf32> to vector<2x8xf32>
    %c0_190 = arith.constant 0 : index
    %c0_191 = arith.constant 0 : index
    %c0_192 = arith.constant 0 : index
    %382 = vector.load %arg3[%c0_190, %c0_191, %c0_192] : memref<2x8x32xf32, #tpu.memory_space<vmem>>, vector<2x8x32xf32>
    %383 = arith.mulf %378, %382 : vector<2x8x32xf32>
    %cst_193 = arith.constant dense<0.000000e+00> : vector<2x8xf32>
    %384 = vector.multi_reduction <add>, %383, %cst_193 [2] : vector<2x8x32xf32> to vector<2x8xf32>
    %385 = arith.extui %3 : vector<2x8xi1> to vector<2x8xi32>
    %386 = arith.sitofp %385 : vector<2x8xi32> to vector<2x8xf32>
    %cst_194 = arith.constant 0.000000e+00 : f32
    %387 = vector.broadcast %cst_194 : f32 to vector<2x8xf32>
    %388 = arith.subf %387, %381 : vector<2x8xf32>
    %cst_195 = arith.constant 0.000000e+00 : f32
    %389 = vector.broadcast %cst_195 : f32 to vector<2x8xf32>
    %390 = arith.maximumf %388, %389 : vector<2x8xf32>
    %391 = math.absf %388 : vector<2x8xf32>
    %cst_196 = arith.constant 0.000000e+00 : f32
    %392 = vector.broadcast %cst_196 : f32 to vector<2x8xf32>
    %393 = arith.subf %392, %391 : vector<2x8xf32>
    %394 = math.exp %393 : vector<2x8xf32>
    %395 = math.log1p %394 : vector<2x8xf32>
    %396 = arith.addf %390, %395 : vector<2x8xf32>
    %397 = arith.mulf %396, %386 : vector<2x8xf32>
    %cst_197 = arith.constant dense<0.000000e+00> : vector<2xf32>
    %398 = vector.multi_reduction <add>, %397, %cst_197 [1] : vector<2x8xf32> to vector<2xf32>
    %399 = vector.shape_cast %398 : vector<2xf32> to vector<2x1xf32>
    %cst_198 = arith.constant dense<0.000000e+00> : vector<1xf32>
    %400 = vector.multi_reduction <add>, %399, %cst_198 [0] : vector<2x1xf32> to vector<1xf32>
    %401 = vector.shape_cast %400 : vector<1xf32> to vector<1x1xf32>
    %c0_199 = arith.constant 0 : index
    %c0_200 = arith.constant 0 : index
    %402 = vector.load %arg24[%c0_199, %c0_200] : memref<1x1xf32, #tpu.memory_space<vmem>>, vector<1x1xf32>
    tpu.vector_store %arg24[%c0_199, %c0_200], %401 {strides = array<i32>} : memref<1x1xf32, #tpu.memory_space<vmem>>, vector<1x1xf32>,
    %cst_201 = arith.constant 0.000000e+00 : f32
    %403 = vector.broadcast %cst_201 : f32 to vector<2x8xf32>
    %404 = arith.maximumf %384, %403 : vector<2x8xf32>
    %405 = math.absf %384 : vector<2x8xf32>
    %cst_202 = arith.constant 0.000000e+00 : f32
    %406 = vector.broadcast %cst_202 : f32 to vector<2x8xf32>
    %407 = arith.subf %406, %405 : vector<2x8xf32>
    %408 = math.exp %407 : vector<2x8xf32>
    %409 = math.log1p %408 : vector<2x8xf32>
    %410 = arith.addf %404, %409 : vector<2x8xf32>
    %411 = arith.mulf %410, %386 : vector<2x8xf32>
    %cst_203 = arith.constant dense<0.000000e+00> : vector<2xf32>
    %412 = vector.multi_reduction <add>, %411, %cst_203 [1] : vector<2x8xf32> to vector<2xf32>
    %413 = vector.shape_cast %412 : vector<2xf32> to vector<2x1xf32>
    %cst_204 = arith.constant dense<0.000000e+00> : vector<1xf32>
    %414 = vector.multi_reduction <add>, %413, %cst_204 [0] : vector<2x1xf32> to vector<1xf32>
    %415 = vector.shape_cast %414 : vector<1xf32> to vector<1x1xf32>
    %c0_205 = arith.constant 0 : index
    %c0_206 = arith.constant 0 : index
    %416 = vector.load %arg25[%c0_205, %c0_206] : memref<1x1xf32, #tpu.memory_space<vmem>>, vector<1x1xf32>
    tpu.vector_store %arg25[%c0_205, %c0_206], %415 {strides = array<i32>} : memref<1x1xf32, #tpu.memory_space<vmem>>, vector<1x1xf32>,
    %cst_207 = arith.constant dense<0.000000e+00> : vector<2xf32>
    %417 = vector.multi_reduction <add>, %386, %cst_207 [1] : vector<2x8xf32> to vector<2xf32>
    %418 = vector.shape_cast %417 : vector<2xf32> to vector<2x1xf32>
    %cst_208 = arith.constant dense<0.000000e+00> : vector<1xf32>
    %419 = vector.multi_reduction <add>, %418, %cst_208 [0] : vector<2x1xf32> to vector<1xf32>
    %420 = vector.shape_cast %419 : vector<1xf32> to vector<1x1xf32>
    %c0_209 = arith.constant 0 : index
    %c0_210 = arith.constant 0 : index
    %421 = vector.load %arg26[%c0_209, %c0_210] : memref<1x1xf32, #tpu.memory_space<vmem>>, vector<1x1xf32>
    tpu.vector_store %arg26[%c0_209, %c0_210], %420 {strides = array<i32>} : memref<1x1xf32, #tpu.memory_space<vmem>>, vector<1x1xf32>,
    return
  }
  func.func @transform_0(%arg0: i32) -> (i32, i32, i32) {
    %c0_i32 = arith.constant 0 : i32
    %c0_i32_0 = arith.constant 0 : i32
    %c0_i32_1 = arith.constant 0 : i32
    return %arg0, %c0_i32, %c0_i32_0 : i32, i32, i32
  }
  func.func @transform_1(%arg0: i32) -> (i32, i32, i32) {
    %c0_i32 = arith.constant 0 : i32
    %c0_i32_0 = arith.constant 0 : i32
    %c0_i32_1 = arith.constant 0 : i32
    return %arg0, %c0_i32, %c0_i32_0 : i32, i32, i32
  }
  func.func @transform_2(%arg0: i32) -> (i32, i32, i32) {
    %c0_i32 = arith.constant 0 : i32
    %c0_i32_0 = arith.constant 0 : i32
    %c0_i32_1 = arith.constant 0 : i32
    return %arg0, %c0_i32, %c0_i32_0 : i32, i32, i32
  }
  func.func @transform_3(%arg0: i32) -> (i32, i32) {
    %c0_i32 = arith.constant 0 : i32
    %c0_i32_0 = arith.constant 0 : i32
    return %arg0, %c0_i32 : i32, i32
  }
  func.func @transform_4(%arg0: i32) -> (i32, i32) {
    %c0_i32 = arith.constant 0 : i32
    %c0_i32_0 = arith.constant 0 : i32
    %c0_i32_1 = arith.constant 0 : i32
    return %c0_i32, %c0_i32_0 : i32, i32
  }
  func.func @transform_5(%arg0: i32) -> (i32, i32) {
    %c0_i32 = arith.constant 0 : i32
    %c0_i32_0 = arith.constant 0 : i32
    %c0_i32_1 = arith.constant 0 : i32
    return %c0_i32, %c0_i32_0 : i32, i32
  }
  func.func @transform_6(%arg0: i32) -> (i32, i32) {
    %c0_i32 = arith.constant 0 : i32
    %c0_i32_0 = arith.constant 0 : i32
    %c0_i32_1 = arith.constant 0 : i32
    return %c0_i32, %c0_i32_0 : i32, i32
  }
  func.func @transform_7(%arg0: i32) -> (i32, i32, i32) {
    %c0_i32 = arith.constant 0 : i32
    %c0_i32_0 = arith.constant 0 : i32
    %c0_i32_1 = arith.constant 0 : i32
    %c0_i32_2 = arith.constant 0 : i32
    return %c0_i32, %c0_i32_0, %c0_i32_1 : i32, i32, i32
  }
  func.func @transform_8(%arg0: i32) -> (i32, i32, i32) {
    %c0_i32 = arith.constant 0 : i32
    %c0_i32_0 = arith.constant 0 : i32
    %c0_i32_1 = arith.constant 0 : i32
    %c0_i32_2 = arith.constant 0 : i32
    return %c0_i32, %c0_i32_0, %c0_i32_1 : i32, i32, i32
  }
  func.func @transform_9(%arg0: i32) -> (i32, i32, i32) {
    %c0_i32 = arith.constant 0 : i32
    %c0_i32_0 = arith.constant 0 : i32
    %c0_i32_1 = arith.constant 0 : i32
    %c0_i32_2 = arith.constant 0 : i32
    return %c0_i32, %c0_i32_0, %c0_i32_1 : i32, i32, i32
  }
  func.func @transform_10(%arg0: i32) -> (i32, i32, i32) {
    %c0_i32 = arith.constant 0 : i32
    %c0_i32_0 = arith.constant 0 : i32
    %c0_i32_1 = arith.constant 0 : i32
    %c0_i32_2 = arith.constant 0 : i32
    return %c0_i32, %c0_i32_0, %c0_i32_1 : i32, i32, i32
  }
  func.func @transform_11(%arg0: i32) -> (i32, i32, i32) {
    %c0_i32 = arith.constant 0 : i32
    %c0_i32_0 = arith.constant 0 : i32
    %c0_i32_1 = arith.constant 0 : i32
    %c0_i32_2 = arith.constant 0 : i32
    return %c0_i32, %c0_i32_0, %c0_i32_1 : i32, i32, i32
  }
  func.func @transform_12(%arg0: i32) -> (i32, i32, i32) {
    %c0_i32 = arith.constant 0 : i32
    %c0_i32_0 = arith.constant 0 : i32
    %c0_i32_1 = arith.constant 0 : i32
    %c0_i32_2 = arith.constant 0 : i32
    return %c0_i32, %c0_i32_0, %c0_i32_1 : i32, i32, i32
  }
  func.func @transform_13(%arg0: i32) -> (i32, i32, i32, i32) {
    %c0_i32 = arith.constant 0 : i32
    %c0_i32_0 = arith.constant 0 : i32
    %c0_i32_1 = arith.constant 0 : i32
    %c0_i32_2 = arith.constant 0 : i32
    %c0_i32_3 = arith.constant 0 : i32
    return %c0_i32, %c0_i32_0, %c0_i32_1, %c0_i32_2 : i32, i32, i32, i32
  }
  func.func @transform_14(%arg0: i32) -> (i32, i32, i32) {
    %c0_i32 = arith.constant 0 : i32
    %c0_i32_0 = arith.constant 0 : i32
    %c0_i32_1 = arith.constant 0 : i32
    %c0_i32_2 = arith.constant 0 : i32
    return %c0_i32, %c0_i32_0, %c0_i32_1 : i32, i32, i32
  }
  func.func @transform_15(%arg0: i32) -> (i32, i32, i32) {
    %c0_i32 = arith.constant 0 : i32
    %c0_i32_0 = arith.constant 0 : i32
    %c0_i32_1 = arith.constant 0 : i32
    %c0_i32_2 = arith.constant 0 : i32
    return %c0_i32, %c0_i32_0, %c0_i32_1 : i32, i32, i32
  }
  func.func @transform_16(%arg0: i32) -> (i32, i32, i32) {
    %c0_i32 = arith.constant 0 : i32
    %c0_i32_0 = arith.constant 0 : i32
    %c0_i32_1 = arith.constant 0 : i32
    %c0_i32_2 = arith.constant 0 : i32
    return %c0_i32, %c0_i32_0, %c0_i32_1 : i32, i32, i32
  }
  func.func @transform_17(%arg0: i32) -> (i32, i32, i32) {
    %c0_i32 = arith.constant 0 : i32
    %c0_i32_0 = arith.constant 0 : i32
    %c0_i32_1 = arith.constant 0 : i32
    %c0_i32_2 = arith.constant 0 : i32
    return %c0_i32, %c0_i32_0, %c0_i32_1 : i32, i32, i32
  }
  func.func @transform_18(%arg0: i32) -> (i32, i32, i32) {
    %c0_i32 = arith.constant 0 : i32
    %c0_i32_0 = arith.constant 0 : i32
    %c0_i32_1 = arith.constant 0 : i32
    %c0_i32_2 = arith.constant 0 : i32
    return %c0_i32, %c0_i32_0, %c0_i32_1 : i32, i32, i32
  }
  func.func @transform_19(%arg0: i32) -> (i32, i32, i32) {
    %c0_i32 = arith.constant 0 : i32
    %c0_i32_0 = arith.constant 0 : i32
    %c0_i32_1 = arith.constant 0 : i32
    %c0_i32_2 = arith.constant 0 : i32
    return %c0_i32, %c0_i32_0, %c0_i32_1 : i32, i32, i32
  }
  func.func @transform_20(%arg0: i32) -> (i32, i32, i32) {
    %c0_i32 = arith.constant 0 : i32
    %c0_i32_0 = arith.constant 0 : i32
    %c0_i32_1 = arith.constant 0 : i32
    %c0_i32_2 = arith.constant 0 : i32
    return %c0_i32, %c0_i32_0, %c0_i32_1 : i32, i32, i32
  }
  func.func @transform_21(%arg0: i32) -> (i32, i32, i32) {
    %c0_i32 = arith.constant 0 : i32
    %c0_i32_0 = arith.constant 0 : i32
    %c0_i32_1 = arith.constant 0 : i32
    %c0_i32_2 = arith.constant 0 : i32
    return %c0_i32, %c0_i32_0, %c0_i32_1 : i32, i32, i32
  }
  func.func @transform_22(%arg0: i32) -> (i32, i32, i32) {
    %c0_i32 = arith.constant 0 : i32
    %c0_i32_0 = arith.constant 0 : i32
    %c0_i32_1 = arith.constant 0 : i32
    %c0_i32_2 = arith.constant 0 : i32
    return %c0_i32, %c0_i32_0, %c0_i32_1 : i32, i32, i32
  }
  func.func @transform_23(%arg0: i32) -> (i32, i32) {
    %c0_i32 = arith.constant 0 : i32
    %c0_i32_0 = arith.constant 0 : i32
    return %arg0, %c0_i32 : i32, i32
  }
  func.func @transform_24(%arg0: i32) -> (i32, i32) {
    %c0_i32 = arith.constant 0 : i32
    %c0_i32_0 = arith.constant 0 : i32
    return %arg0, %c0_i32 : i32, i32
  }
  func.func @transform_25(%arg0: i32) -> (i32, i32) {
    %c0_i32 = arith.constant 0 : i32
    %c0_i32_0 = arith.constant 0 : i32
    return %arg0, %c0_i32 : i32, i32
  }
}

</mosaic_0001>

<llo_original>
// kernel: tpu_custom_call.1
$region0: #{tpu_custom_call.1}
  #allocation0 [shape = 'u32[]', space=smem, size = 0x4, offset = 0x4, fixed_abs, tag = 'smem constant byte address 0x4 - core index']
  #allocation1 [shape = 'u32[144,128]{1,0:T(1,128)}', space=vmem, size = 0x12000, scoped, tag = 'internal scratch']
  %s0 = inlined_call_operand.hbm [shape: f32[2,8,32], index: 0, kind: input, shape index: {}]
  %s1 = inlined_call_operand.hbm [shape: f32[2,8,32], index: 1, kind: input, shape index: {}]
  %s2 = inlined_call_operand.hbm [shape: f32[2,8,32], index: 2, kind: input, shape index: {}]
  %s3 = inlined_call_operand.vmem [shape: f32[2,8], index: 3, kind: input, shape index: {}]
  %s4 = inlined_call_operand.vmem [shape: f32[8,32], index: 4, kind: input, shape index: {}]
  %s5 = inlined_call_operand.hbm [shape: f32[1,32], index: 5, kind: input, shape index: {}]
  %s6 = inlined_call_operand.hbm [shape: f32[1,32], index: 6, kind: input, shape index: {}]
  %s7 = inlined_call_operand.vmem [shape: bf16[2,32,32], index: 7, kind: input, shape index: {}]
  %s8 = inlined_call_operand.vmem [shape: f32[2,1,32], index: 8, kind: input, shape index: {}]
  %s9 = inlined_call_operand.vmem [shape: bf16[2,32,32], index: 9, kind: input, shape index: {}]
  %s10 = inlined_call_operand.vmem [shape: f32[2,1,32], index: 10, kind: input, shape index: {}]
  %s11 = inlined_call_operand.vmem [shape: bf16[2,32,32], index: 11, kind: input, shape index: {}]
  %s12 = inlined_call_operand.vmem [shape: f32[2,1,32], index: 12, kind: input, shape index: {}]
  %s13 = inlined_call_operand.vmem [shape: bf16[2,2,16,32], index: 13, kind: input, shape index: {}]
  %s14 = inlined_call_operand.vmem [shape: f32[2,1,32], index: 14, kind: input, shape index: {}]
  %s15 = inlined_call_operand.vmem [shape: f32[2,1,32], index: 15, kind: input, shape index: {}]
  %s16 = inlined_call_operand.vmem [shape: f32[2,1,32], index: 16, kind: input, shape index: {}]
  %s17 = inlined_call_operand.vmem [shape: f32[2,1,32], index: 17, kind: input, shape index: {}]
  %s18 = inlined_call_operand.vmem [shape: f32[2,1,32], index: 18, kind: input, shape index: {}]
  %s19 = inlined_call_operand.vmem [shape: bf16[2,32,128], index: 19, kind: input, shape index: {}]
  %s20 = inlined_call_operand.vmem [shape: f32[2,1,128], index: 20, kind: input, shape index: {}]
  %s21 = inlined_call_operand.vmem [shape: bf16[2,128,32], index: 21, kind: input, shape index: {}]
  %s22 = inlined_call_operand.vmem [shape: f32[2,1,32], index: 22, kind: input, shape index: {}]
  %s23 = inlined_call_operand.hbm [shape: f32[1,1], index: 23, kind: output, shape index: {0}]
  %s24 = inlined_call_operand.hbm [shape: f32[1,1], index: 24, kind: output, shape index: {1}]
  %s25 = inlined_call_operand.hbm [shape: f32[1,1], index: 25, kind: output, shape index: {2}]
  %26 = xla_tuple %s23, %s24, %s25
  %s27 = sld [smem:[#allocation0]]
  $region138: #{tpu_custom_call.1} parent=0
    _
  %s29 = ssub.s32 1, %s27
  %s30 = scalar_select 0, %s29, %s27
  $region1: #{tpu_custom_call.1} parent=0
    #allocation2 [shape = 'u8[8192]{0}', space=vmem, size = 0x2000, scoped, tag = 'input window, operand 0, single buffered']
    #allocation3 [shape = 's32[1]{0}', space=sflag, size = 0x4, scoped, tag = 'scoped memory for tpu_custom_call.1']
    #allocation4 [shape = 's32[1]{0}', space=sflag, size = 0x4, scoped, tag = 'scoped memory for tpu_custom_call.1']
    #allocation5 [shape = 'u8[8192]{0}', space=vmem, size = 0x2000, scoped, tag = 'input window, operand 1, single buffered']
    #allocation6 [shape = 's32[1]{0}', space=sflag, size = 0x4, scoped, tag = 'scoped memory for tpu_custom_call.1']
    #allocation7 [shape = 'u8[8192]{0}', space=vmem, size = 0x2000, scoped, tag = 'input window, operand 2, single buffered']
    #allocation8 [shape = 'u8[512]{0}', space=vmem, size = 0x400, scoped, tag = 'input window, operand 5, single buffered']
    #allocation9 [shape = 's32[1]{0}', space=sflag, size = 0x4, scoped, tag = 'scoped memory for tpu_custom_call.1']
    #allocation10 [shape = 'u8[512]{0}', space=vmem, size = 0x400, scoped, tag = 'input window, operand 6, single buffered']
    #allocation11 [shape = 'u8[512]{0}', space=vmem, size = 0x400, scoped, tag = 'output window, operand 0, single buffered']
    #allocation12 [shape = 'u8[512]{0}', space=vmem, size = 0x400, scoped, tag = 'output window, operand 1, single buffered']
    #allocation13 [shape = 's32[1]{0}', space=sflag, size = 0x4, scoped, tag = 'scoped memory for tpu_custom_call.1']
    #allocation14 [shape = 'u8[512]{0}', space=vmem, size = 0x400, scoped, tag = 'output window, operand 2, single buffered']
    %31 = vsyncpa [#allocation3], 0
    %32 = vsyncpa [#allocation6], 0
    %33 = vsyncpa [#allocation9], 0
    %34 = vsyncpa [#allocation4], 0
    %35 = vsyncpa [#allocation13], 0
    // Predicated region
    $region2: #{tpu_custom_call.1} parent=1 // pred_check
      _
    $region3: #{tpu_custom_call.1} parent=1 // pred_check_branch
      %37 = sbr.rel (0) target = $region5
    $region4: #{tpu_custom_call.1} parent=1 // pred_region
      %s39 = ssub.s32 256, 256
      %40 = vsyncadd [#allocation3], %s39
      %s41 = sshll.u32 [#allocation2], 4
      %s42 = int_to_ptr.vmem [resolvable:$true] %s41
      %47 = dma.hbm_to_vmem [thread:$0]  %s0, 256, %s42, [#allocation3], 128, 128, 8
    $region5: #{tpu_custom_call.1} parent=1 // pred_fallthru
      _
    // Predicated region
    $region6: #{tpu_custom_call.1} parent=1 // pred_check
      _
    $region7: #{tpu_custom_call.1} parent=1 // pred_check_branch
      %49 = sbr.rel (0) target = $region9
    $region8: #{tpu_custom_call.1} parent=1 // pred_region
      %s51 = ssub.s32 256, 256
      %52 = vsyncadd [#allocation6], %s51
      %s53 = sshll.u32 [#allocation5], 4
      %s54 = int_to_ptr.vmem [resolvable:$true] %s53
      %59 = dma.hbm_to_vmem [thread:$0]  %s1, 256, %s54, [#allocation6], 128, 128, 8
    $region9: #{tpu_custom_call.1} parent=1 // pred_fallthru
      _
    // Predicated region
    $region10: #{tpu_custom_call.1} parent=1 // pred_check
      _
    $region11: #{tpu_custom_call.1} parent=1 // pred_check_branch
      %61 = sbr.rel (0) target = $region13
    $region12: #{tpu_custom_call.1} parent=1 // pred_region
      %s63 = ssub.s32 256, 256
      %64 = vsyncadd [#allocation6], %s63
      %s65 = sshll.u32 [#allocation7], 4
      %s66 = int_to_ptr.vmem [resolvable:$true] %s65
      %71 = dma.hbm_to_vmem [thread:$0]  %s2, 256, %s66, [#allocation6], 128, 128, 8
    $region13: #{tpu_custom_call.1} parent=1 // pred_fallthru
      _
    // Predicated region
    $region14: #{tpu_custom_call.1} parent=1 // pred_check
      _
    $region15: #{tpu_custom_call.1} parent=1 // pred_check_branch
      %73 = sbr.rel (0) target = $region17
    $region16: #{tpu_custom_call.1} parent=1 // pred_region
      _
    $region17: #{tpu_custom_call.1} parent=1 // pred_fallthru
      _
    // Predicated region
    $region18: #{tpu_custom_call.1} parent=1 // pred_check
      _
    $region19: #{tpu_custom_call.1} parent=1 // pred_check_branch
      %75 = sbr.rel (0) target = $region21
    $region20: #{tpu_custom_call.1} parent=1 // pred_region
      _
    $region21: #{tpu_custom_call.1} parent=1 // pred_fallthru
      _
    // Predicated region
    $region22: #{tpu_custom_call.1} parent=1 // pred_check
      _
    $region23: #{tpu_custom_call.1} parent=1 // pred_check_branch
      %77 = sbr.rel (0) target = $region25
    $region24: #{tpu_custom_call.1} parent=1 // pred_region
      %s79 = ssub.s32 16, 16
      %80 = vsyncadd [#allocation9], %s79
      %s82 = sshll.u32 [#allocation8], 4
      %s83 = int_to_ptr.vmem [resolvable:$true] %s82
      %85 = dma.hbm_to_vmem [thread:$0]  %s5, 16, %s83, [#allocation9]
    $region25: #{tpu_custom_call.1} parent=1 // pred_fallthru
      _
    // Predicated region
    $region26: #{tpu_custom_call.1} parent=1 // pred_check
      _
    $region27: #{tpu_custom_call.1} parent=1 // pred_check_branch
      %87 = sbr.rel (0) target = $region29
    $region28: #{tpu_custom_call.1} parent=1 // pred_region
      %s89 = ssub.s32 16, 16
      %90 = vsyncadd [#allocation9], %s89
      %s92 = sshll.u32 [#allocation10], 4
      %s93 = int_to_ptr.vmem [resolvable:$true] %s92
      %95 = dma.hbm_to_vmem [thread:$0]  %s6, 16, %s93, [#allocation9]
    $region29: #{tpu_custom_call.1} parent=1 // pred_fallthru
      _
    // Predicated region
    $region30: #{tpu_custom_call.1} parent=1 // pred_check
      _
    $region31: #{tpu_custom_call.1} parent=1 // pred_check_branch
      %97 = sbr.rel (0) target = $region33
    $region32: #{tpu_custom_call.1} parent=1 // pred_region
      _
    $region33: #{tpu_custom_call.1} parent=1 // pred_fallthru
      _
    // Predicated region
    $region34: #{tpu_custom_call.1} parent=1 // pred_check
      _
    $region35: #{tpu_custom_call.1} parent=1 // pred_check_branch
      %99 = sbr.rel (0) target = $region37
    $region36: #{tpu_custom_call.1} parent=1 // pred_region
      _
    $region37: #{tpu_custom_call.1} parent=1 // pred_fallthru
      _
    // Predicated region
    $region38: #{tpu_custom_call.1} parent=1 // pred_check
      _
    $region39: #{tpu_custom_call.1} parent=1 // pred_check_branch
      %101 = sbr.rel (0) target = $region41
    $region40: #{tpu_custom_call.1} parent=1 // pred_region
      _
    $region41: #{tpu_custom_call.1} parent=1 // pred_fallthru
      _
    // Predicated region
    $region42: #{tpu_custom_call.1} parent=1 // pred_check
      _
    $region43: #{tpu_custom_call.1} parent=1 // pred_check_branch
      %103 = sbr.rel (0) target = $region45
    $region44: #{tpu_custom_call.1} parent=1 // pred_region
      _
    $region45: #{tpu_custom_call.1} parent=1 // pred_fallthru
      _
    // Predicated region
    $region46: #{tpu_custom_call.1} parent=1 // pred_check
      _
    $region47: #{tpu_custom_call.1} parent=1 // pred_check_branch
      %105 = sbr.rel (0) target = $region49
    $region48: #{tpu_custom_call.1} parent=1 // pred_region
      _
    $region49: #{tpu_custom_call.1} parent=1 // pred_fallthru
      _
    // Predicated region
    $region50: #{tpu_custom_call.1} parent=1 // pred_check
      _
    $region51: #{tpu_custom_call.1} parent=1 // pred_check_branch
      %107 = sbr.rel (0) target = $region53
    $region52: #{tpu_custom_call.1} parent=1 // pred_region
      _
    $region53: #{tpu_custom_call.1} parent=1 // pred_fallthru
      _
    // Predicated region
    $region54: #{tpu_custom_call.1} parent=1 // pred_check
      _
    $region55: #{tpu_custom_call.1} parent=1 // pred_check_branch
      %109 = sbr.rel (0) target = $region57
    $region56: #{tpu_custom_call.1} parent=1 // pred_region
      _
    $region57: #{tpu_custom_call.1} parent=1 // pred_fallthru
      _
    // Predicated region
    $region58: #{tpu_custom_call.1} parent=1 // pred_check
      _
    $region59: #{tpu_custom_call.1} parent=1 // pred_check_branch
      %111 = sbr.rel (0) target = $region61
    $region60: #{tpu_custom_call.1} parent=1 // pred_region
      _
    $region61: #{tpu_custom_call.1} parent=1 // pred_fallthru
      _
    // Predicated region
    $region62: #{tpu_custom_call.1} parent=1 // pred_check
      _
    $region63: #{tpu_custom_call.1} parent=1 // pred_check_branch
      %113 = sbr.rel (0) target = $region65
    $region64: #{tpu_custom_call.1} parent=1 // pred_region
      _
    $region65: #{tpu_custom_call.1} parent=1 // pred_fallthru
      _
    // Predicated region
    $region66: #{tpu_custom_call.1} parent=1 // pred_check
      _
    $region67: #{tpu_custom_call.1} parent=1 // pred_check_branch
      %115 = sbr.rel (0) target = $region69
    $region68: #{tpu_custom_call.1} parent=1 // pred_region
      _
    $region69: #{tpu_custom_call.1} parent=1 // pred_fallthru
      _
    // Predicated region
    $region70: #{tpu_custom_call.1} parent=1 // pred_check
      _
    $region71: #{tpu_custom_call.1} parent=1 // pred_check_branch
      %117 = sbr.rel (0) target = $region73
    $region72: #{tpu_custom_call.1} parent=1 // pred_region
      _
    $region73: #{tpu_custom_call.1} parent=1 // pred_fallthru
      _
    // Predicated region
    $region74: #{tpu_custom_call.1} parent=1 // pred_check
      _
    $region75: #{tpu_custom_call.1} parent=1 // pred_check_branch
      %119 = sbr.rel (0) target = $region77
    $region76: #{tpu_custom_call.1} parent=1 // pred_region
      _
    $region77: #{tpu_custom_call.1} parent=1 // pred_fallthru
      _
    // Predicated region
    $region78: #{tpu_custom_call.1} parent=1 // pred_check
      _
    $region79: #{tpu_custom_call.1} parent=1 // pred_check_branch
      %121 = sbr.rel (0) target = $region81
    $region80: #{tpu_custom_call.1} parent=1 // pred_region
      _
    $region81: #{tpu_custom_call.1} parent=1 // pred_fallthru
      _
    // Predicated region
    $region82: #{tpu_custom_call.1} parent=1 // pred_check
      _
    $region83: #{tpu_custom_call.1} parent=1 // pred_check_branch
      %123 = sbr.rel (0) target = $region85
    $region84: #{tpu_custom_call.1} parent=1 // pred_region
      _
    $region85: #{tpu_custom_call.1} parent=1 // pred_fallthru
      _
    // Predicated region
    $region86: #{tpu_custom_call.1} parent=1 // pred_check
      _
    $region87: #{tpu_custom_call.1} parent=1 // pred_check_branch
      %125 = sbr.rel (0) target = $region89
    $region88: #{tpu_custom_call.1} parent=1 // pred_region
      _
    $region89: #{tpu_custom_call.1} parent=1 // pred_fallthru
      _
    // Predicated region
    $region90: #{tpu_custom_call.1} parent=1 // pred_check
      _
    $region91: #{tpu_custom_call.1} parent=1 // pred_check_branch
      %127 = sbr.rel (0) target = $region93
    $region92: #{tpu_custom_call.1} parent=1 // pred_region
      _
    $region93: #{tpu_custom_call.1} parent=1 // pred_fallthru
      _
    // Predicated region
    $region94: #{tpu_custom_call.1} parent=1 // pred_check
      _
    $region95: #{tpu_custom_call.1} parent=1 // pred_check_branch
      %129 = sbr.rel (0) target = $region97
    $region96: #{tpu_custom_call.1} parent=1 // pred_region
      %130 = dma.done [#allocation3], 256
    $region97: #{tpu_custom_call.1} parent=1 // pred_fallthru
      _
    // Predicated region
    $region98: #{tpu_custom_call.1} parent=1 // pred_check
      _
    $region99: #{tpu_custom_call.1} parent=1 // pred_check_branch
      %132 = sbr.rel (0) target = $region101
    $region100: #{tpu_custom_call.1} parent=1 // pred_region
      %133 = dma.done [#allocation6], 256
    $region101: #{tpu_custom_call.1} parent=1 // pred_fallthru
      _
    // Predicated region
    $region102: #{tpu_custom_call.1} parent=1 // pred_check
      _
    $region103: #{tpu_custom_call.1} parent=1 // pred_check_branch
      %135 = sbr.rel (0) target = $region105
    $region104: #{tpu_custom_call.1} parent=1 // pred_region
      %136 = dma.done [#allocation6], 256
    $region105: #{tpu_custom_call.1} parent=1 // pred_fallthru
      _
    // Predicated region
    $region106: #{tpu_custom_call.1} parent=1 // pred_check
      _
    $region107: #{tpu_custom_call.1} parent=1 // pred_check_branch
      %138 = sbr.rel (0) target = $region109
    $region108: #{tpu_custom_call.1} parent=1 // pred_region
      %139 = dma.done [#allocation9], 16
    $region109: #{tpu_custom_call.1} parent=1 // pred_fallthru
      _
    // Predicated region
    $region110: #{tpu_custom_call.1} parent=1 // pred_check
      _
    $region111: #{tpu_custom_call.1} parent=1 // pred_check_branch
      %141 = sbr.rel (0) target = $region113
    $region112: #{tpu_custom_call.1} parent=1 // pred_region
      %142 = dma.done [#allocation9], 16
    $region113: #{tpu_custom_call.1} parent=1 // pred_fallthru
      _
    %v144 = vld [vmem:[#allocation2] sm:$0xff]
    %v145 = vld [vmem:[#allocation2 + $0x8] sm:$0xff]
    %v146 = vld [vmem:[%s3] sm:$0x3]
    %vm147 = vcmp.ne.f32.partialorder %v146, 0.0
    %v148 = vlaneseq
    %v149 = vshrl.u32 %v148, 7
    %v150 = vlaneseq
    %v151 = vand.u32 %v150, 127
    %vm152 = vcmp.le.s32.totalorder %v151, %v149
    %v153 = vsel %vm147, 1, 0
    %v155 = vunpack.c.l.s4 1966171168
    %v156 = vunpack.c.0.s8 %v155
    %v157 = vlaneseq
    %v158 = vshrl.u32 %v157, 7
    %v159 = vsub.s32 %v156, %v158
    %v160 = vrot.slane %v153, %v159
    %v161 = vcombine.high %v160, %v160
    %v163 = vunpack.c.l.s4 1966171168
    %v164 = vunpack.c.0.s8 %v163
    %v165 = vlaneseq
    %v166 = vshrl.u32 %v165, 7
    %v167 = vsub.s32 %v164, %v166
    %v168 = vrot.slane %v160, %v167
    %v170 = vunpack.c.l.s4 1966171168
    %v171 = vunpack.c.0.s8 %v170
    %v172 = vlaneseq
    %v173 = vshrl.u32 %v172, 7
    %v174 = vsub.s32 %v171, %v173
    %v175 = vrot.slane %v161, %v174
    %vm176 = vcmp.ne.s32.totalorder %v168, 0
    %vm177 = vcmp.ne.s32.totalorder %v175, 0
    %v178 = vsel %vm152, 1, 0
    %vm179 = vcmp.eq.s32.totalorder %v178, 1
    %v180 = vsel %vm176, 1, 0
    %v181 = vsel %vm177, 1, 0
    %v182 = vlaneseq
    %v183 = vshrl.u32 %v182, 7
    %v184 = vsub.s32 0, %v183
    %v185 = vrot.slane %v180, %v184
    %v186 = vlaneseq
    %v187 = vshrl.u32 %v186, 7
    %v188 = vsub.s32 0, %v187
    %v189 = vrot.slane %v181, %v188
    %vm190 = vcmp.eq.s32.totalorder %v185, 1
    %vm191 = vcmp.eq.s32.totalorder %v189, 1
    %vm192 = vmand %vm179, %vm190
    %vm193 = vmand %vm179, %vm191
    %v194 = vsel %vm192, 0.0, -1e+09
    %v195 = vsel %vm193, 0.0, -1e+09
    %v196 = vld [vmem:[%s4] sm:$0xff]
    %v197 = vadd.f32 %v144, %v196
    %v198 = vadd.f32 %v145, %v196
    %v199 = vld [vmem:[#allocation8] sm:$0x1]
    %v200 = vld [vmem:[#allocation10] sm:$0x1]
    %vm201 = vcmask 261120
    %v202 = vsel %vm201, %v197, 0.0
    %203 = vadd.xlane.f32.xlu0 %v202
    %v204 = vpop.xlane.xlu0 %203
    %v205 = vsel %vm201, %v198, 0.0
    %206 = vadd.xlane.f32.xlu0 %v205
    %v207 = vpop.xlane.xlu0 %206
    %v208 = vrcp.pop 32.0
    %v209 = vmul.f32 %v204, %v208
    %v210 = vmul.f32 %v207, %v208
    %v211 = vsub.f32 %v197, %v209
    %v212 = vsub.f32 %v198, %v210
    %v213 = vmul.f32 %v211, %v211
    %v214 = vmul.f32 %v212, %v212
    %v215 = vsel %vm201, %v213, 0.0
    %216 = vadd.xlane.f32.xlu0 %v215
    %v217 = vpop.xlane.xlu0 %216
    %v218 = vsel %vm201, %v214, 0.0
    %219 = vadd.xlane.f32.xlu0 %v218
    %v220 = vpop.xlane.xlu0 %219
    %v221 = vmul.f32 %v217, %v208
    %v222 = vmul.f32 %v220, %v208
    %v223 = vadd.f32 %v221, 1e-05
    %v224 = vadd.f32 %v222, 1e-05
    %v225 = vrsqrt.pop %v223
    %v226 = vrsqrt.pop %v224
    %v227 = vmul.f32 %v211, %v225
    %v228 = vmul.f32 %v212, %v226
    %v230 = vlaneseq
    %v231 = vshrl.u32 %v230, 7
    %v232 = vsub.s32 0, %v231
    %v233 = vrot.slane %v199, %v232
    %v235 = vmul.f32 %v227, %v233
    %v236 = vmul.f32 %v228, %v233
    %v238 = vlaneseq
    %v239 = vshrl.u32 %v238, 7
    %v240 = vsub.s32 0, %v239
    %v241 = vrot.slane %v200, %v240
    %v243 = vadd.f32 %v235, %v241
    %v244 = vadd.f32 %v236, %v241
    %v245 = vld [vmem:[%s15] sm:$0x1]
    %v246 = vld [vmem:[%s16] sm:$0x1]
    %v247 = vsel %vm201, %v243, 0.0
    %248 = vadd.xlane.f32.xlu0 %v247
    %v249 = vpop.xlane.xlu0 %248
    %v250 = vsel %vm201, %v244, 0.0
    %251 = vadd.xlane.f32.xlu0 %v250
    %v252 = vpop.xlane.xlu0 %251
    %v253 = vmul.f32 %v249, %v208
    %v254 = vmul.f32 %v252, %v208
    %v255 = vsub.f32 %v243, %v253
    %v256 = vsub.f32 %v244, %v254
    %v257 = vmul.f32 %v255, %v255
    %v258 = vmul.f32 %v256, %v256
    %v259 = vsel %vm201, %v257, 0.0
    %260 = vadd.xlane.f32.xlu0 %v259
    %v261 = vpop.xlane.xlu0 %260
    %v262 = vsel %vm201, %v258, 0.0
    %263 = vadd.xlane.f32.xlu0 %v262
    %v264 = vpop.xlane.xlu0 %263
    %v265 = vmul.f32 %v261, %v208
    %v266 = vmul.f32 %v264, %v208
    %v267 = vadd.f32 %v265, 1e-05
    %v268 = vadd.f32 %v266, 1e-05
    %v269 = vrsqrt.pop %v267
    %v270 = vrsqrt.pop %v268
    %v271 = vmul.f32 %v255, %v269
    %v272 = vmul.f32 %v256, %v270
    %v274 = vlaneseq
    %v275 = vshrl.u32 %v274, 7
    %v276 = vsub.s32 0, %v275
    %v277 = vrot.slane %v245, %v276
    %v279 = vmul.f32 %v271, %v277
    %v280 = vmul.f32 %v272, %v277
    %v282 = vlaneseq
    %v283 = vshrl.u32 %v282, 7
    %v284 = vsub.s32 0, %v283
    %v285 = vrot.slane %v246, %v284
    %v287 = vadd.f32 %v279, %v285
    %v288 = vadd.f32 %v280, %v285
    %v289 = vpack.c.bf16 %v288, %v287
    %v290 = vld [vmem:[%s7] sm:$0xf]
    %v291 = vld [vmem:[%s7 + $0x4] sm:$0xf]
    %v292 = vld [vmem:[%s7 + $0x8] sm:$0xf]
    %v293 = vld [vmem:[%s7 + $0xc] sm:$0xf]
    %v294 = vld [vmem:[%s8] sm:$0x1]
    %v296 = vlaneseq
    %v297 = vshrl.u32 %v296, 7
    %v298 = vsub.s32 0, %v297
    %v299 = vrot.slane %v294, %v298
    %v305 = vunpack.c.l.b16 %v290
    %v306 = vunpack.c.l.b16 %v291
    %v307 = vunpack.c.l.b16 %v292
    %v308 = vunpack.c.l.b16 %v293
    %v309 = vpack.c.b16 %v306, %v305
    %v310 = vpack.c.b16 %v308, %v307
    %v314 = vsel %vm201, %v289, 0
    %316 = vmatprep.subr.bf16.mxu0 0
    %317 = vmatpush1.bf16.msra.mxu0 %v309
    %318 = vmatprep.subr.bf16.mxu0 0
    %319 = vmatpush1.bf16.msra.mxu0 %v310
    %320 = vmatprep.subr.bf16.mxu0 0
    %321 = vmatpush1.bf16.msra.mxu0 0
    %322 = vmatprep.subr.bf16.mxu0 0
    %323 = vmatpush1.bf16.msra.mxu0 0
    %324 = vmatprep.subr.bf16.mxu0 0
    %325 = vmatpush1.bf16.msra.mxu0 0
    %326 = vmatprep.subr.bf16.mxu0 0
    %327 = vmatpush1.bf16.msra.mxu0 0
    %328 = vmatprep.subr.bf16.mxu0 0
    %329 = vmatpush1.bf16.msra.mxu0 0
    %330 = vmatprep.subr.bf16.mxu0 0
    %331 = vmatpush1.bf16.msra.mxu0 0
    %332 = vmatprep.subr.bf16.mxu0 0
    %333 = vmatpush1.bf16.msra.mxu0 0
    %334 = vmatprep.subr.bf16.mxu0 0
    %335 = vmatpush1.bf16.msra.mxu0 0
    %336 = vmatprep.subr.bf16.mxu0 0
    %337 = vmatpush1.bf16.msra.mxu0 0
    %338 = vmatprep.subr.bf16.mxu0 0
    %339 = vmatpush1.bf16.msra.mxu0 0
    %340 = vmatprep.subr.bf16.mxu0 0
    %341 = vmatpush1.bf16.msra.mxu0 0
    %342 = vmatprep.subr.bf16.mxu0 0
    %343 = vmatpush1.bf16.msra.mxu0 0
    %344 = vmatprep.subr.bf16.mxu0 0
    %345 = vmatpush1.bf16.msra.mxu0 0
    %346 = vmatprep.subr.bf16.mxu0 0
    %347 = vmatpush1.bf16.msra.mxu0 0
    %348 = vmatprep.mubr.bf16.mxu0 0
    %349 = vmatmul.mubr.bf16.gmra.mrb[0].mxu0 %v314
    %v350 = vpop.f32.mrb[0].mxu0
    %v351 = vadd.f32 %v299, %v350
    %v352 = vpop.f32.mrb[0].mxu0
    %v353 = vpop.f32.mrb[0].mxu0
    %v354 = vadd.f32 %v299, %v353
    %v355 = vpop.f32.mrb[0].mxu0
    %356 = vdwg.mxu0
    %v357 = vld [vmem:[%s9] sm:$0xf]
    %v358 = vld [vmem:[%s9 + $0x4] sm:$0xf]
    %v359 = vld [vmem:[%s9 + $0x8] sm:$0xf]
    %v360 = vld [vmem:[%s9 + $0xc] sm:$0xf]
    %v361 = vld [vmem:[%s10] sm:$0x1]
    %v363 = vlaneseq
    %v364 = vshrl.u32 %v363, 7
    %v365 = vsub.s32 0, %v364
    %v366 = vrot.slane %v361, %v365
    %v372 = vunpack.c.l.b16 %v357
    %v373 = vunpack.c.l.b16 %v358
    %v374 = vunpack.c.l.b16 %v359
    %v375 = vunpack.c.l.b16 %v360
    %v376 = vpack.c.b16 %v373, %v372
    %v377 = vpack.c.b16 %v375, %v374
    %380 = vmatprep.subr.bf16.mxu0 0
    %381 = vmatpush1.bf16.msra.mxu0 %v376
    %382 = vmatprep.subr.bf16.mxu0 0
    %383 = vmatpush1.bf16.msra.mxu0 %v377
    %384 = vmatprep.subr.bf16.mxu0 0
    %385 = vmatpush1.bf16.msra.mxu0 0
    %386 = vmatprep.subr.bf16.mxu0 0
    %387 = vmatpush1.bf16.msra.mxu0 0
    %388 = vmatprep.subr.bf16.mxu0 0
    %389 = vmatpush1.bf16.msra.mxu0 0
    %390 = vmatprep.subr.bf16.mxu0 0
    %391 = vmatpush1.bf16.msra.mxu0 0
    %392 = vmatprep.subr.bf16.mxu0 0
    %393 = vmatpush1.bf16.msra.mxu0 0
    %394 = vmatprep.subr.bf16.mxu0 0
    %395 = vmatpush1.bf16.msra.mxu0 0
    %396 = vmatprep.subr.bf16.mxu0 0
    %397 = vmatpush1.bf16.msra.mxu0 0
    %398 = vmatprep.subr.bf16.mxu0 0
    %399 = vmatpush1.bf16.msra.mxu0 0
    %400 = vmatprep.subr.bf16.mxu0 0
    %401 = vmatpush1.bf16.msra.mxu0 0
    %402 = vmatprep.subr.bf16.mxu0 0
    %403 = vmatpush1.bf16.msra.mxu0 0
    %404 = vmatprep.subr.bf16.mxu0 0
    %405 = vmatpush1.bf16.msra.mxu0 0
    %406 = vmatprep.subr.bf16.mxu0 0
    %407 = vmatpush1.bf16.msra.mxu0 0
    %408 = vmatprep.subr.bf16.mxu0 0
    %409 = vmatpush1.bf16.msra.mxu0 0
    %410 = vmatprep.subr.bf16.mxu0 0
    %411 = vmatpush1.bf16.msra.mxu0 0
    %412 = vmatprep.mubr.bf16.mxu0 0
    %413 = vmatmul.mubr.bf16.gmra.mrb[0].mxu0 %v314
    %v414 = vpop.f32.mrb[0].mxu0
    %v415 = vadd.f32 %v366, %v414
    %v416 = vpop.f32.mrb[0].mxu0
    %v417 = vpop.f32.mrb[0].mxu0
    %v418 = vadd.f32 %v366, %v417
    %v419 = vpop.f32.mrb[0].mxu0
    %420 = vdwg.mxu0
    %v421 = vld [vmem:[%s11] sm:$0xf]
    %v422 = vld [vmem:[%s11 + $0x4] sm:$0xf]
    %v423 = vld [vmem:[%s11 + $0x8] sm:$0xf]
    %v424 = vld [vmem:[%s11 + $0xc] sm:$0xf]
    %v425 = vld [vmem:[%s12] sm:$0x1]
    %v427 = vlaneseq
    %v428 = vshrl.u32 %v427, 7
    %v429 = vsub.s32 0, %v428
    %v430 = vrot.slane %v425, %v429
    %v436 = vunpack.c.l.b16 %v421
    %v437 = vunpack.c.l.b16 %v422
    %v438 = vunpack.c.l.b16 %v423
    %v439 = vunpack.c.l.b16 %v424
    %v440 = vpack.c.b16 %v437, %v436
    %v441 = vpack.c.b16 %v439, %v438
    %444 = vmatprep.subr.bf16.mxu0 0
    %445 = vmatpush1.bf16.msra.mxu0 %v440
    %446 = vmatprep.subr.bf16.mxu0 0
    %447 = vmatpush1.bf16.msra.mxu0 %v441
    %448 = vmatprep.subr.bf16.mxu0 0
    %449 = vmatpush1.bf16.msra.mxu0 0
    %450 = vmatprep.subr.bf16.mxu0 0
    %451 = vmatpush1.bf16.msra.mxu0 0
    %452 = vmatprep.subr.bf16.mxu0 0
    %453 = vmatpush1.bf16.msra.mxu0 0
    %454 = vmatprep.subr.bf16.mxu0 0
    %455 = vmatpush1.bf16.msra.mxu0 0
    %456 = vmatprep.subr.bf16.mxu0 0
    %457 = vmatpush1.bf16.msra.mxu0 0
    %458 = vmatprep.subr.bf16.mxu0 0
    %459 = vmatpush1.bf16.msra.mxu0 0
    %460 = vmatprep.subr.bf16.mxu0 0
    %461 = vmatpush1.bf16.msra.mxu0 0
    %462 = vmatprep.subr.bf16.mxu0 0
    %463 = vmatpush1.bf16.msra.mxu0 0
    %464 = vmatprep.subr.bf16.mxu0 0
    %465 = vmatpush1.bf16.msra.mxu0 0
    %466 = vmatprep.subr.bf16.mxu0 0
    %467 = vmatpush1.bf16.msra.mxu0 0
    %468 = vmatprep.subr.bf16.mxu0 0
    %469 = vmatpush1.bf16.msra.mxu0 0
    %470 = vmatprep.subr.bf16.mxu0 0
    %471 = vmatpush1.bf16.msra.mxu0 0
    %472 = vmatprep.subr.bf16.mxu0 0
    %473 = vmatpush1.bf16.msra.mxu0 0
    %474 = vmatprep.subr.bf16.mxu0 0
    %475 = vmatpush1.bf16.msra.mxu0 0
    %476 = vmatprep.mubr.bf16.mxu0 0
    %477 = vmatmul.mubr.bf16.gmra.mrb[0].mxu0 %v314
    %v478 = vpop.f32.mrb[0].mxu0
    %v479 = vadd.f32 %v430, %v478
    %v480 = vpop.f32.mrb[0].mxu0
    %v481 = vpop.f32.mrb[0].mxu0
    %v482 = vadd.f32 %v430, %v481
    %v483 = vpop.f32.mrb[0].mxu0
    %484 = vdwg.mxu0
    %v485 = vpack.c.bf16 %v351, %v351
    %v486 = vpack.c.bf16 %v354, %v354
    %v487 = vpack.c.bf16 %v415, %v415
    %v488 = vpack.c.bf16 %v418, %v418
    %v489 = vpack.c.bf16 %v479, %v479
    %v490 = vpack.c.bf16 %v482, %v482
    %vm491 = vcmask 130048
    %v493 = vsel %vm491, %v485, 0
    %v496 = vsel %vm491, %v487, 0
    %498 = vmatprep.subr.bf16.mxu0 0
    %499 = vmatpush1.bf16.xpose.msra.mxu0 %v496
    %500 = vmatprep.subr.bf16.mxu0 0
    %501 = vmatpush1.bf16.xpose.msra.mxu0 0
    %502 = vmatprep.subr.bf16.mxu0 0
    %503 = vmatpush1.bf16.xpose.msra.mxu0 0
    %504 = vmatprep.subr.bf16.mxu0 0
    %505 = vmatpush1.bf16.xpose.msra.mxu0 0
    %506 = vmatprep.subr.bf16.mxu0 0
    %507 = vmatpush1.bf16.xpose.msra.mxu0 0
    %508 = vmatprep.subr.bf16.mxu0 0
    %509 = vmatpush1.bf16.xpose.msra.mxu0 0
    %510 = vmatprep.subr.bf16.mxu0 0
    %511 = vmatpush1.bf16.xpose.msra.mxu0 0
    %512 = vmatprep.subr.bf16.mxu0 0
    %513 = vmatpush1.bf16.xpose.msra.mxu0 0
    %514 = vmatprep.subr.bf16.mxu0 0
    %515 = vmatpush1.bf16.xpose.msra.mxu0 0
    %516 = vmatprep.subr.bf16.mxu0 0
    %517 = vmatpush1.bf16.xpose.msra.mxu0 0
    %518 = vmatprep.subr.bf16.mxu0 0
    %519 = vmatpush1.bf16.xpose.msra.mxu0 0
    %520 = vmatprep.subr.bf16.mxu0 0
    %521 = vmatpush1.bf16.xpose.msra.mxu0 0
    %522 = vmatprep.subr.bf16.mxu0 0
    %523 = vmatpush1.bf16.xpose.msra.mxu0 0
    %524 = vmatprep.subr.bf16.mxu0 0
    %525 = vmatpush1.bf16.xpose.msra.mxu0 0
    %526 = vmatprep.subr.bf16.mxu0 0
    %527 = vmatpush1.bf16.xpose.msra.mxu0 0
    %528 = vmatprep.subr.bf16.mxu0 0
    %529 = vmatpush1.bf16.xpose.msra.mxu0 0
    %530 = vmatprep.mubr.bf16.mxu0 0
    %531 = vmatmul.mubr.bf16.gmra.mrb[0].mxu0 %v493
    %v532 = vpop.f32.mrb[0].mxu0
    %v533 = vadd.f32 0.0, %v532
    %v534 = vpop.f32.mrb[0].mxu0
    %v535 = vpop.f32.mrb[0].mxu0
    %v536 = vpop.f32.mrb[0].mxu0
    %537 = vdwg.mxu0
    %v539 = vsel %vm491, %v486, 0
    %v542 = vsel %vm491, %v488, 0
    %544 = vmatprep.subr.bf16.mxu0 0
    %545 = vmatpush1.bf16.xpose.msra.mxu0 %v542
    %546 = vmatprep.subr.bf16.mxu0 0
    %547 = vmatpush1.bf16.xpose.msra.mxu0 0
    %548 = vmatprep.subr.bf16.mxu0 0
    %549 = vmatpush1.bf16.xpose.msra.mxu0 0
    %550 = vmatprep.subr.bf16.mxu0 0
    %551 = vmatpush1.bf16.xpose.msra.mxu0 0
    %552 = vmatprep.subr.bf16.mxu0 0
    %553 = vmatpush1.bf16.xpose.msra.mxu0 0
    %554 = vmatprep.subr.bf16.mxu0 0
    %555 = vmatpush1.bf16.xpose.msra.mxu0 0
    %556 = vmatprep.subr.bf16.mxu0 0
    %557 = vmatpush1.bf16.xpose.msra.mxu0 0
    %558 = vmatprep.subr.bf16.mxu0 0
    %559 = vmatpush1.bf16.xpose.msra.mxu0 0
    %560 = vmatprep.subr.bf16.mxu0 0
    %561 = vmatpush1.bf16.xpose.msra.mxu0 0
    %562 = vmatprep.subr.bf16.mxu0 0
    %563 = vmatpush1.bf16.xpose.msra.mxu0 0
    %564 = vmatprep.subr.bf16.mxu0 0
    %565 = vmatpush1.bf16.xpose.msra.mxu0 0
    %566 = vmatprep.subr.bf16.mxu0 0
    %567 = vmatpush1.bf16.xpose.msra.mxu0 0
    %568 = vmatprep.subr.bf16.mxu0 0
    %569 = vmatpush1.bf16.xpose.msra.mxu0 0
    %570 = vmatprep.subr.bf16.mxu0 0
    %571 = vmatpush1.bf16.xpose.msra.mxu0 0
    %572 = vmatprep.subr.bf16.mxu0 0
    %573 = vmatpush1.bf16.xpose.msra.mxu0 0
    %574 = vmatprep.subr.bf16.mxu0 0
    %575 = vmatpush1.bf16.xpose.msra.mxu0 0
    %576 = vmatprep.mubr.bf16.mxu0 0
    %577 = vmatmul.mubr.bf16.gmra.mrb[0].mxu0 %v539
    %v578 = vpop.f32.mrb[0].mxu0
    %v579 = vadd.f32 0.0, %v578
    %v580 = vpop.f32.mrb[0].mxu0
    %v581 = vpop.f32.mrb[0].mxu0
    %v582 = vpop.f32.mrb[0].mxu0
    %583 = vdwg.mxu0
    %v584 = vmul.f32 %v533, 0.25
    %v585 = vmul.f32 %v579, 0.25
    %v586 = vadd.f32 %v584, %v194
    %v587 = vadd.f32 %v585, %v195
    %vm588 = vcmask 64512
    %v589 = vsel %vm588, %v586, -inf
    %590 = vmax.xlane.f32.xlu0 %v589
    %v591 = vpop.xlane.xlu0 %590
    %v592 = vsel %vm588, %v587, -inf
    %593 = vmax.xlane.f32.xlu0 %v592
    %v594 = vpop.xlane.xlu0 %593
    %v595 = vsub.f32 %v586, %v591
    %v596 = vsub.f32 %v587, %v594
    %v597 = vmul.f32 %v595, 1.442695
    %v598 = vpow.pop %v597
    %v599 = vmul.f32 %v596, 1.442695
    %v600 = vpow.pop %v599
    %v601 = vsel %vm588, %v598, 0.0
    %602 = vadd.xlane.f32.xlu0 %v601
    %v603 = vpop.xlane.xlu0 %602
    %v604 = vsel %vm588, %v600, 0.0
    %605 = vadd.xlane.f32.xlu0 %v604
    %v606 = vpop.xlane.xlu0 %605
    %v607 = vrcp.pop %v603
    %v608 = vrcp.pop %v606
    %v609 = vmul.f32 %v598, %v607
    %v610 = vmul.f32 %v600, %v608
    %v611 = vpack.c.bf16 %v609, %v609
    %v612 = vpack.c.bf16 %v610, %v610
    %v614 = vsel %vm588, %v611, 0
    %vm616 = vcmask 1043456
    %v618 = vsel %vm616, %v489, 0
    %620 = vmatprep.subr.bf16.mxu0 0
    %621 = vmatpush1.bf16.msra.mxu0 %v618
    %622 = vmatprep.subr.bf16.mxu0 0
    %623 = vmatpush1.bf16.msra.mxu0 0
    %624 = vmatprep.subr.bf16.mxu0 0
    %625 = vmatpush1.bf16.msra.mxu0 0
    %626 = vmatprep.subr.bf16.mxu0 0
    %627 = vmatpush1.bf16.msra.mxu0 0
    %628 = vmatprep.subr.bf16.mxu0 0
    %629 = vmatpush1.bf16.msra.mxu0 0
    %630 = vmatprep.subr.bf16.mxu0 0
    %631 = vmatpush1.bf16.msra.mxu0 0
    %632 = vmatprep.subr.bf16.mxu0 0
    %633 = vmatpush1.bf16.msra.mxu0 0
    %634 = vmatprep.subr.bf16.mxu0 0
    %635 = vmatpush1.bf16.msra.mxu0 0
    %636 = vmatprep.subr.bf16.mxu0 0
    %637 = vmatpush1.bf16.msra.mxu0 0
    %638 = vmatprep.subr.bf16.mxu0 0
    %639 = vmatpush1.bf16.msra.mxu0 0
    %640 = vmatprep.subr.bf16.mxu0 0
    %641 = vmatpush1.bf16.msra.mxu0 0
    %642 = vmatprep.subr.bf16.mxu0 0
    %643 = vmatpush1.bf16.msra.mxu0 0
    %644 = vmatprep.subr.bf16.mxu0 0
    %645 = vmatpush1.bf16.msra.mxu0 0
    %646 = vmatprep.subr.bf16.mxu0 0
    %647 = vmatpush1.bf16.msra.mxu0 0
    %648 = vmatprep.subr.bf16.mxu0 0
    %649 = vmatpush1.bf16.msra.mxu0 0
    %650 = vmatprep.subr.bf16.mxu0 0
    %651 = vmatpush1.bf16.msra.mxu0 0
    %652 = vmatprep.mubr.bf16.mxu0 0
    %653 = vmatmul.mubr.bf16.gmra.mrb[0].mxu0 %v614
    %v654 = vpop.f32.mrb[0].mxu0
    %v655 = vadd.f32 0.0, %v654
    %v656 = vpop.f32.mrb[0].mxu0
    %v657 = vpop.f32.mrb[0].mxu0
    %v658 = vpop.f32.mrb[0].mxu0
    %659 = vdwg.mxu0
    %v661 = vsel %vm588, %v612, 0
    %v664 = vsel %vm616, %v490, 0
    %666 = vmatprep.subr.bf16.mxu0 0
    %667 = vmatpush1.bf16.msra.mxu0 %v664
    %668 = vmatprep.subr.bf16.mxu0 0
    %669 = vmatpush1.bf16.msra.mxu0 0
    %670 = vmatprep.subr.bf16.mxu0 0
    %671 = vmatpush1.bf16.msra.mxu0 0
    %672 = vmatprep.subr.bf16.mxu0 0
    %673 = vmatpush1.bf16.msra.mxu0 0
    %674 = vmatprep.subr.bf16.mxu0 0
    %675 = vmatpush1.bf16.msra.mxu0 0
    %676 = vmatprep.subr.bf16.mxu0 0
    %677 = vmatpush1.bf16.msra.mxu0 0
    %678 = vmatprep.subr.bf16.mxu0 0
    %679 = vmatpush1.bf16.msra.mxu0 0
    %680 = vmatprep.subr.bf16.mxu0 0
    %681 = vmatpush1.bf16.msra.mxu0 0
    %682 = vmatprep.subr.bf16.mxu0 0
    %683 = vmatpush1.bf16.msra.mxu0 0
    %684 = vmatprep.subr.bf16.mxu0 0
    %685 = vmatpush1.bf16.msra.mxu0 0
    %686 = vmatprep.subr.bf16.mxu0 0
    %687 = vmatpush1.bf16.msra.mxu0 0
    %688 = vmatprep.subr.bf16.mxu0 0
    %689 = vmatpush1.bf16.msra.mxu0 0
    %690 = vmatprep.subr.bf16.mxu0 0
    %691 = vmatpush1.bf16.msra.mxu0 0
    %692 = vmatprep.subr.bf16.mxu0 0
    %693 = vmatpush1.bf16.msra.mxu0 0
    %694 = vmatprep.subr.bf16.mxu0 0
    %695 = vmatpush1.bf16.msra.mxu0 0
    %696 = vmatprep.subr.bf16.mxu0 0
    %697 = vmatpush1.bf16.msra.mxu0 0
    %698 = vmatprep.mubr.bf16.mxu0 0
    %699 = vmatmul.mubr.bf16.gmra.mrb[0].mxu0 %v661
    %v700 = vpop.f32.mrb[0].mxu0
    %v701 = vadd.f32 0.0, %v700
    %v702 = vpop.f32.mrb[0].mxu0
    %v703 = vpop.f32.mrb[0].mxu0
    %v704 = vpop.f32.mrb[0].mxu0
    %705 = vdwg.mxu0
    %v706 = vpack.c.bf16 %v701, %v655
    %v707 = vld [vmem:[%s13] sm:$0xf]
    %v708 = vld [vmem:[%s13 + $0x4] sm:$0xf]
    %710 = vrot.lane.b32.xlu0 %v485, 112
    %v711 = vpop.permute.xlu0 %710
    %713 = vrot.lane.b32.xlu0 %v487, 112
    %v714 = vpop.permute.xlu0 %713
    %v716 = vsel %vm491, %v711, 0
    %v719 = vsel %vm491, %v714, 0
    %721 = vmatprep.subr.bf16.mxu0 0
    %722 = vmatpush1.bf16.xpose.msra.mxu0 %v719
    %723 = vmatprep.subr.bf16.mxu0 0
    %724 = vmatpush1.bf16.xpose.msra.mxu0 0
    %725 = vmatprep.subr.bf16.mxu0 0
    %726 = vmatpush1.bf16.xpose.msra.mxu0 0
    %727 = vmatprep.subr.bf16.mxu0 0
    %728 = vmatpush1.bf16.xpose.msra.mxu0 0
    %729 = vmatprep.subr.bf16.mxu0 0
    %730 = vmatpush1.bf16.xpose.msra.mxu0 0
    %731 = vmatprep.subr.bf16.mxu0 0
    %732 = vmatpush1.bf16.xpose.msra.mxu0 0
    %733 = vmatprep.subr.bf16.mxu0 0
    %734 = vmatpush1.bf16.xpose.msra.mxu0 0
    %735 = vmatprep.subr.bf16.mxu0 0
    %736 = vmatpush1.bf16.xpose.msra.mxu0 0
    %737 = vmatprep.subr.bf16.mxu0 0
    %738 = vmatpush1.bf16.xpose.msra.mxu0 0
    %739 = vmatprep.subr.bf16.mxu0 0
    %740 = vmatpush1.bf16.xpose.msra.mxu0 0
    %741 = vmatprep.subr.bf16.mxu0 0
    %742 = vmatpush1.bf16.xpose.msra.mxu0 0
    %743 = vmatprep.subr.bf16.mxu0 0
    %744 = vmatpush1.bf16.xpose.msra.mxu0 0
    %745 = vmatprep.subr.bf16.mxu0 0
    %746 = vmatpush1.bf16.xpose.msra.mxu0 0
    %747 = vmatprep.subr.bf16.mxu0 0
    %748 = vmatpush1.bf16.xpose.msra.mxu0 0
    %749 = vmatprep.subr.bf16.mxu0 0
    %750 = vmatpush1.bf16.xpose.msra.mxu0 0
    %751 = vmatprep.subr.bf16.mxu0 0
    %752 = vmatpush1.bf16.xpose.msra.mxu0 0
    %753 = vmatprep.mubr.bf16.mxu0 0
    %754 = vmatmul.mubr.bf16.gmra.mrb[0].mxu0 %v716
    %v755 = vpop.f32.mrb[0].mxu0
    %v756 = vadd.f32 0.0, %v755
    %v757 = vpop.f32.mrb[0].mxu0
    %v758 = vpop.f32.mrb[0].mxu0
    %v759 = vpop.f32.mrb[0].mxu0
    %760 = vdwg.mxu0
    %762 = vrot.lane.b32.xlu0 %v486, 112
    %v763 = vpop.permute.xlu0 %762
    %765 = vrot.lane.b32.xlu0 %v488, 112
    %v766 = vpop.permute.xlu0 %765
    %v768 = vsel %vm491, %v763, 0
    %v771 = vsel %vm491, %v766, 0
    %773 = vmatprep.subr.bf16.mxu0 0
    %774 = vmatpush1.bf16.xpose.msra.mxu0 %v771
    %775 = vmatprep.subr.bf16.mxu0 0
    %776 = vmatpush1.bf16.xpose.msra.mxu0 0
    %777 = vmatprep.subr.bf16.mxu0 0
    %778 = vmatpush1.bf16.xpose.msra.mxu0 0
    %779 = vmatprep.subr.bf16.mxu0 0
    %780 = vmatpush1.bf16.xpose.msra.mxu0 0
    %781 = vmatprep.subr.bf16.mxu0 0
    %782 = vmatpush1.bf16.xpose.msra.mxu0 0
    %783 = vmatprep.subr.bf16.mxu0 0
    %784 = vmatpush1.bf16.xpose.msra.mxu0 0
    %785 = vmatprep.subr.bf16.mxu0 0
    %786 = vmatpush1.bf16.xpose.msra.mxu0 0
    %787 = vmatprep.subr.bf16.mxu0 0
    %788 = vmatpush1.bf16.xpose.msra.mxu0 0
    %789 = vmatprep.subr.bf16.mxu0 0
    %790 = vmatpush1.bf16.xpose.msra.mxu0 0
    %791 = vmatprep.subr.bf16.mxu0 0
    %792 = vmatpush1.bf16.xpose.msra.mxu0 0
    %793 = vmatprep.subr.bf16.mxu0 0
    %794 = vmatpush1.bf16.xpose.msra.mxu0 0
    %795 = vmatprep.subr.bf16.mxu0 0
    %796 = vmatpush1.bf16.xpose.msra.mxu0 0
    %797 = vmatprep.subr.bf16.mxu0 0
    %798 = vmatpush1.bf16.xpose.msra.mxu0 0
    %799 = vmatprep.subr.bf16.mxu0 0
    %800 = vmatpush1.bf16.xpose.msra.mxu0 0
    %801 = vmatprep.subr.bf16.mxu0 0
    %802 = vmatpush1.bf16.xpose.msra.mxu0 0
    %803 = vmatprep.subr.bf16.mxu0 0
    %804 = vmatpush1.bf16.xpose.msra.mxu0 0
    %805 = vmatprep.mubr.bf16.mxu0 0
    %806 = vmatmul.mubr.bf16.gmra.mrb[0].mxu0 %v768
    %v807 = vpop.f32.mrb[0].mxu0
    %v808 = vadd.f32 0.0, %v807
    %v809 = vpop.f32.mrb[0].mxu0
    %v810 = vpop.f32.mrb[0].mxu0
    %v811 = vpop.f32.mrb[0].mxu0
    %812 = vdwg.mxu0
    %v813 = vmul.f32 %v756, 0.25
    %v814 = vmul.f32 %v808, 0.25
    %v815 = vadd.f32 %v813, %v194
    %v816 = vadd.f32 %v814, %v195
    %v817 = vsel %vm588, %v815, -inf
    %818 = vmax.xlane.f32.xlu0 %v817
    %v819 = vpop.xlane.xlu0 %818
    %v820 = vsel %vm588, %v816, -inf
    %821 = vmax.xlane.f32.xlu0 %v820
    %v822 = vpop.xlane.xlu0 %821
    %v823 = vsub.f32 %v815, %v819
    %v824 = vsub.f32 %v816, %v822
    %v825 = vmul.f32 %v823, 1.442695
    %v826 = vpow.pop %v825
    %v827 = vmul.f32 %v824, 1.442695
    %v828 = vpow.pop %v827
    %v829 = vsel %vm588, %v826, 0.0
    %830 = vadd.xlane.f32.xlu0 %v829
    %v831 = vpop.xlane.xlu0 %830
    %v832 = vsel %vm588, %v828, 0.0
    %833 = vadd.xlane.f32.xlu0 %v832
    %v834 = vpop.xlane.xlu0 %833
    %v835 = vrcp.pop %v831
    %v836 = vrcp.pop %v834
    %v837 = vmul.f32 %v826, %v835
    %v838 = vmul.f32 %v828, %v836
    %v839 = vpack.c.bf16 %v837, %v837
    %v840 = vpack.c.bf16 %v838, %v838
    %842 = vrot.lane.b32.xlu0 %v489, 112
    %v843 = vpop.permute.xlu0 %842
    %v845 = vsel %vm588, %v839, 0
    %v848 = vsel %vm616, %v843, 0
    %850 = vmatprep.subr.bf16.mxu0 0
    %851 = vmatpush1.bf16.msra.mxu0 %v848
    %852 = vmatprep.subr.bf16.mxu0 0
    %853 = vmatpush1.bf16.msra.mxu0 0
    %854 = vmatprep.subr.bf16.mxu0 0
    %855 = vmatpush1.bf16.msra.mxu0 0
    %856 = vmatprep.subr.bf16.mxu0 0
    %857 = vmatpush1.bf16.msra.mxu0 0
    %858 = vmatprep.subr.bf16.mxu0 0
    %859 = vmatpush1.bf16.msra.mxu0 0
    %860 = vmatprep.subr.bf16.mxu0 0
    %861 = vmatpush1.bf16.msra.mxu0 0
    %862 = vmatprep.subr.bf16.mxu0 0
    %863 = vmatpush1.bf16.msra.mxu0 0
    %864 = vmatprep.subr.bf16.mxu0 0
    %865 = vmatpush1.bf16.msra.mxu0 0
    %866 = vmatprep.subr.bf16.mxu0 0
    %867 = vmatpush1.bf16.msra.mxu0 0
    %868 = vmatprep.subr.bf16.mxu0 0
    %869 = vmatpush1.bf16.msra.mxu0 0
    %870 = vmatprep.subr.bf16.mxu0 0
    %871 = vmatpush1.bf16.msra.mxu0 0
    %872 = vmatprep.subr.bf16.mxu0 0
    %873 = vmatpush1.bf16.msra.mxu0 0
    %874 = vmatprep.subr.bf16.mxu0 0
    %875 = vmatpush1.bf16.msra.mxu0 0
    %876 = vmatprep.subr.bf16.mxu0 0
    %877 = vmatpush1.bf16.msra.mxu0 0
    %878 = vmatprep.subr.bf16.mxu0 0
    %879 = vmatpush1.bf16.msra.mxu0 0
    %880 = vmatprep.subr.bf16.mxu0 0
    %881 = vmatpush1.bf16.msra.mxu0 0
    %882 = vmatprep.mubr.bf16.mxu0 0
    %883 = vmatmul.mubr.bf16.gmra.mrb[0].mxu0 %v845
    %v884 = vpop.f32.mrb[0].mxu0
    %v885 = vadd.f32 0.0, %v884
    %v886 = vpop.f32.mrb[0].mxu0
    %v887 = vpop.f32.mrb[0].mxu0
    %v888 = vpop.f32.mrb[0].mxu0
    %889 = vdwg.mxu0
    %891 = vrot.lane.b32.xlu0 %v490, 112
    %v892 = vpop.permute.xlu0 %891
    %v894 = vsel %vm588, %v840, 0
    %v897 = vsel %vm616, %v892, 0
    %899 = vmatprep.subr.bf16.mxu0 0
    %900 = vmatpush1.bf16.msra.mxu0 %v897
    %901 = vmatprep.subr.bf16.mxu0 0
    %902 = vmatpush1.bf16.msra.mxu0 0
    %903 = vmatprep.subr.bf16.mxu0 0
    %904 = vmatpush1.bf16.msra.mxu0 0
    %905 = vmatprep.subr.bf16.mxu0 0
    %906 = vmatpush1.bf16.msra.mxu0 0
    %907 = vmatprep.subr.bf16.mxu0 0
    %908 = vmatpush1.bf16.msra.mxu0 0
    %909 = vmatprep.subr.bf16.mxu0 0
    %910 = vmatpush1.bf16.msra.mxu0 0
    %911 = vmatprep.subr.bf16.mxu0 0
    %912 = vmatpush1.bf16.msra.mxu0 0
    %913 = vmatprep.subr.bf16.mxu0 0
    %914 = vmatpush1.bf16.msra.mxu0 0
    %915 = vmatprep.subr.bf16.mxu0 0
    %916 = vmatpush1.bf16.msra.mxu0 0
    %917 = vmatprep.subr.bf16.mxu0 0
    %918 = vmatpush1.bf16.msra.mxu0 0
    %919 = vmatprep.subr.bf16.mxu0 0
    %920 = vmatpush1.bf16.msra.mxu0 0
    %921 = vmatprep.subr.bf16.mxu0 0
    %922 = vmatpush1.bf16.msra.mxu0 0
    %923 = vmatprep.subr.bf16.mxu0 0
    %924 = vmatpush1.bf16.msra.mxu0 0
    %925 = vmatprep.subr.bf16.mxu0 0
    %926 = vmatpush1.bf16.msra.mxu0 0
    %927 = vmatprep.subr.bf16.mxu0 0
    %928 = vmatpush1.bf16.msra.mxu0 0
    %929 = vmatprep.subr.bf16.mxu0 0
    %930 = vmatpush1.bf16.msra.mxu0 0
    %931 = vmatprep.mubr.bf16.mxu0 0
    %932 = vmatmul.mubr.bf16.gmra.mrb[0].mxu0 %v894
    %v933 = vpop.f32.mrb[0].mxu0
    %v934 = vadd.f32 0.0, %v933
    %v935 = vpop.f32.mrb[0].mxu0
    %v936 = vpop.f32.mrb[0].mxu0
    %v937 = vpop.f32.mrb[0].mxu0
    %938 = vdwg.mxu0
    %v939 = vpack.c.bf16 %v934, %v885
    %s940 = scalar_lea.vmem %s13, 8
    %v941 = vld [vmem:[%s940] sm:$0xf]
    %v942 = vld [vmem:[%s940 + $0x4] sm:$0xf]
    %v945 = vunpack.c.l.b16 %v941
    %v946 = vunpack.c.l.b16 %v942
    %v947 = vpack.c.b16 %v946, %v945
    %v950 = vsel %vm491, %v939, 0
    %952 = vmatprep.subr.bf16.mxu0 0
    %953 = vmatpush1.bf16.msra.mxu0 %v947
    %954 = vmatprep.subr.bf16.mxu0 0
    %955 = vmatpush1.bf16.msra.mxu0 0
    %956 = vmatprep.subr.bf16.mxu0 0
    %957 = vmatpush1.bf16.msra.mxu0 0
    %958 = vmatprep.subr.bf16.mxu0 0
    %959 = vmatpush1.bf16.msra.mxu0 0
    %960 = vmatprep.subr.bf16.mxu0 0
    %961 = vmatpush1.bf16.msra.mxu0 0
    %962 = vmatprep.subr.bf16.mxu0 0
    %963 = vmatpush1.bf16.msra.mxu0 0
    %964 = vmatprep.subr.bf16.mxu0 0
    %965 = vmatpush1.bf16.msra.mxu0 0
    %966 = vmatprep.subr.bf16.mxu0 0
    %967 = vmatpush1.bf16.msra.mxu0 0
    %968 = vmatprep.subr.bf16.mxu0 0
    %969 = vmatpush1.bf16.msra.mxu0 0
    %970 = vmatprep.subr.bf16.mxu0 0
    %971 = vmatpush1.bf16.msra.mxu0 0
    %972 = vmatprep.subr.bf16.mxu0 0
    %973 = vmatpush1.bf16.msra.mxu0 0
    %974 = vmatprep.subr.bf16.mxu0 0
    %975 = vmatpush1.bf16.msra.mxu0 0
    %976 = vmatprep.subr.bf16.mxu0 0
    %977 = vmatpush1.bf16.msra.mxu0 0
    %978 = vmatprep.subr.bf16.mxu0 0
    %979 = vmatpush1.bf16.msra.mxu0 0
    %980 = vmatprep.subr.bf16.mxu0 0
    %981 = vmatpush1.bf16.msra.mxu0 0
    %982 = vmatprep.subr.bf16.mxu0 0
    %983 = vmatpush1.bf16.msra.mxu0 0
    %984 = vmatprep.mubr.bf16.mxu0 0
    %985 = vmatmul.mubr.bf16.gmra.mrb[0].mxu0 %v950
    %v986 = vpop.f32.mrb[0].mxu0
    %v987 = vadd.f32 0.0, %v986
    %v988 = vpop.f32.mrb[0].mxu0
    %v989 = vpop.f32.mrb[0].mxu0
    %v990 = vadd.f32 0.0, %v989
    %v991 = vpop.f32.mrb[0].mxu0
    %992 = vdwg.mxu0
    %v995 = vunpack.c.l.b16 %v707
    %v996 = vunpack.c.l.b16 %v708
    %v997 = vpack.c.b16 %v996, %v995
    %v1000 = vsel %vm491, %v706, 0
    %1002 = vmatprep.subr.bf16.mxu0 0
    %1003 = vmatpush1.bf16.msra.mxu0 %v997
    %1004 = vmatprep.subr.bf16.mxu0 0
    %1005 = vmatpush1.bf16.msra.mxu0 0
    %1006 = vmatprep.subr.bf16.mxu0 0
    %1007 = vmatpush1.bf16.msra.mxu0 0
    %1008 = vmatprep.subr.bf16.mxu0 0
    %1009 = vmatpush1.bf16.msra.mxu0 0
    %1010 = vmatprep.subr.bf16.mxu0 0
    %1011 = vmatpush1.bf16.msra.mxu0 0
    %1012 = vmatprep.subr.bf16.mxu0 0
    %1013 = vmatpush1.bf16.msra.mxu0 0
    %1014 = vmatprep.subr.bf16.mxu0 0
    %1015 = vmatpush1.bf16.msra.mxu0 0
    %1016 = vmatprep.subr.bf16.mxu0 0
    %1017 = vmatpush1.bf16.msra.mxu0 0
    %1018 = vmatprep.subr.bf16.mxu0 0
    %1019 = vmatpush1.bf16.msra.mxu0 0
    %1020 = vmatprep.subr.bf16.mxu0 0
    %1021 = vmatpush1.bf16.msra.mxu0 0
    %1022 = vmatprep.subr.bf16.mxu0 0
    %1023 = vmatpush1.bf16.msra.mxu0 0
    %1024 = vmatprep.subr.bf16.mxu0 0
    %1025 = vmatpush1.bf16.msra.mxu0 0
    %1026 = vmatprep.subr.bf16.mxu0 0
    %1027 = vmatpush1.bf16.msra.mxu0 0
    %1028 = vmatprep.subr.bf16.mxu0 0
    %1029 = vmatpush1.bf16.msra.mxu0 0
    %1030 = vmatprep.subr.bf16.mxu0 0
    %1031 = vmatpush1.bf16.msra.mxu0 0
    %1032 = vmatprep.subr.bf16.mxu0 0
    %1033 = vmatpush1.bf16.msra.mxu0 0
    %1034 = vmatprep.mubr.bf16.mxu0 0
    %1035 = vmatmul.mubr.bf16.gmra.mrb[0].mxu0 %v1000
    %v1036 = vpop.f32.mrb[0].mxu0
    %v1037 = vadd.f32 %v987, %v1036
    %v1038 = vpop.f32.mrb[0].mxu0
    %v1039 = vpop.f32.mrb[0].mxu0
    %v1040 = vadd.f32 %v990, %v1039
    %v1041 = vpop.f32.mrb[0].mxu0
    %1042 = vdwg.mxu0
    %v1043 = vadd.f32 %v243, %v1037
    %v1044 = vadd.f32 %v244, %v1040
    %v1045 = vld [vmem:[%s14] sm:$0x1]
    %v1047 = vlaneseq
    %v1048 = vshrl.u32 %v1047, 7
    %v1049 = vsub.s32 0, %v1048
    %v1050 = vrot.slane %v1045, %v1049
    %v1052 = vadd.f32 %v1043, %v1050
    %v1053 = vadd.f32 %v1044, %v1050
    %v1054 = vld [vmem:[%s17] sm:$0x1]
    %v1055 = vld [vmem:[%s18] sm:$0x1]
    %v1056 = vsel %vm201, %v1052, 0.0
    %1057 = vadd.xlane.f32.xlu0 %v1056
    %v1058 = vpop.xlane.xlu0 %1057
    %v1059 = vsel %vm201, %v1053, 0.0
    %1060 = vadd.xlane.f32.xlu0 %v1059
    %v1061 = vpop.xlane.xlu0 %1060
    %v1062 = vmul.f32 %v1058, %v208
    %v1063 = vmul.f32 %v1061, %v208
    %v1064 = vsub.f32 %v1052, %v1062
    %v1065 = vsub.f32 %v1053, %v1063
    %v1066 = vmul.f32 %v1064, %v1064
    %v1067 = vmul.f32 %v1065, %v1065
    %v1068 = vsel %vm201, %v1066, 0.0
    %1069 = vadd.xlane.f32.xlu0 %v1068
    %v1070 = vpop.xlane.xlu0 %1069
    %v1071 = vsel %vm201, %v1067, 0.0
    %1072 = vadd.xlane.f32.xlu0 %v1071
    %v1073 = vpop.xlane.xlu0 %1072
    %v1074 = vmul.f32 %v1070, %v208
    %v1075 = vmul.f32 %v1073, %v208
    %v1076 = vadd.f32 %v1074, 1e-05
    %v1077 = vadd.f32 %v1075, 1e-05
    %v1078 = vrsqrt.pop %v1076
    %v1079 = vrsqrt.pop %v1077
    %v1080 = vmul.f32 %v1064, %v1078
    %v1081 = vmul.f32 %v1065, %v1079
    %v1083 = vlaneseq
    %v1084 = vshrl.u32 %v1083, 7
    %v1085 = vsub.s32 0, %v1084
    %v1086 = vrot.slane %v1054, %v1085
    %v1088 = vmul.f32 %v1080, %v1086
    %v1089 = vmul.f32 %v1081, %v1086
    %v1091 = vlaneseq
    %v1092 = vshrl.u32 %v1091, 7
    %v1093 = vsub.s32 0, %v1092
    %v1094 = vrot.slane %v1055, %v1093
    %v1096 = vadd.f32 %v1088, %v1094
    %v1097 = vadd.f32 %v1089, %v1094
    %v1098 = vpack.c.bf16 %v1097, %v1096
    %v1099 = vld [vmem:[%s19] sm:$0xf]
    %v1100 = vld [vmem:[%s19 + $0x4] sm:$0xf]
    %v1101 = vld [vmem:[%s19 + $0x8] sm:$0xf]
    %v1102 = vld [vmem:[%s19 + $0xc] sm:$0xf]
    %v1103 = vld [vmem:[%s20] sm:$0x1]
    %v1105 = vlaneseq
    %v1106 = vshrl.u32 %v1105, 7
    %v1107 = vsub.s32 0, %v1106
    %v1108 = vrot.slane %v1103, %v1107
    %v1114 = vunpack.c.l.b16 %v1099
    %v1115 = vunpack.c.l.b16 %v1100
    %v1116 = vunpack.c.l.b16 %v1101
    %v1117 = vunpack.c.l.b16 %v1102
    %v1118 = vpack.c.b16 %v1115, %v1114
    %v1119 = vpack.c.b16 %v1117, %v1116
    %v1123 = vsel %vm201, %v1098, 0
    %1125 = vmatprep.subr.bf16.mxu0 0
    %1126 = vmatpush1.bf16.msra.mxu0 %v1118
    %1127 = vmatprep.subr.bf16.mxu0 0
    %1128 = vmatpush1.bf16.msra.mxu0 %v1119
    %1129 = vmatprep.subr.bf16.mxu0 0
    %1130 = vmatpush1.bf16.msra.mxu0 0
    %1131 = vmatprep.subr.bf16.mxu0 0
    %1132 = vmatpush1.bf16.msra.mxu0 0
    %1133 = vmatprep.subr.bf16.mxu0 0
    %1134 = vmatpush1.bf16.msra.mxu0 0
    %1135 = vmatprep.subr.bf16.mxu0 0
    %1136 = vmatpush1.bf16.msra.mxu0 0
    %1137 = vmatprep.subr.bf16.mxu0 0
    %1138 = vmatpush1.bf16.msra.mxu0 0
    %1139 = vmatprep.subr.bf16.mxu0 0
    %1140 = vmatpush1.bf16.msra.mxu0 0
    %1141 = vmatprep.subr.bf16.mxu0 0
    %1142 = vmatpush1.bf16.msra.mxu0 0
    %1143 = vmatprep.subr.bf16.mxu0 0
    %1144 = vmatpush1.bf16.msra.mxu0 0
    %1145 = vmatprep.subr.bf16.mxu0 0
    %1146 = vmatpush1.bf16.msra.mxu0 0
    %1147 = vmatprep.subr.bf16.mxu0 0
    %1148 = vmatpush1.bf16.msra.mxu0 0
    %1149 = vmatprep.subr.bf16.mxu0 0
    %1150 = vmatpush1.bf16.msra.mxu0 0
    %1151 = vmatprep.subr.bf16.mxu0 0
    %1152 = vmatpush1.bf16.msra.mxu0 0
    %1153 = vmatprep.subr.bf16.mxu0 0
    %1154 = vmatpush1.bf16.msra.mxu0 0
    %1155 = vmatprep.subr.bf16.mxu0 0
    %1156 = vmatpush1.bf16.msra.mxu0 0
    %1157 = vmatprep.mubr.bf16.mxu0 0
    %1158 = vmatmul.mubr.bf16.gmra.mrb[0].mxu0 %v1123
    %v1159 = vpop.f32.mrb[0].mxu0
    %v1160 = vadd.f32 %v1108, %v1159
    %v1161 = vpop.f32.mrb[0].mxu0
    %v1162 = vpop.f32.mrb[0].mxu0
    %v1163 = vadd.f32 %v1108, %v1162
    %v1164 = vpop.f32.mrb[0].mxu0
    %1165 = vdwg.mxu0
    %v1166 = vmul.f32 %v1160, 0.5
    %v1167 = vmul.f32 %v1163, 0.5
    %v1168 = vmul.f32 %v1160, 0.044715
    %v1169 = vmul.f32 %v1163, 0.044715
    %v1170 = vmul.f32 %v1168, %v1160
    %v1171 = vmul.f32 %v1169, %v1163
    %v1172 = vmul.f32 %v1170, %v1160
    %v1173 = vmul.f32 %v1171, %v1163
    %v1174 = vadd.f32 %v1160, %v1172
    %v1175 = vadd.f32 %v1163, %v1173
    %v1176 = vmul.f32 %v1174, 0.7978846
    %v1177 = vmul.f32 %v1175, 0.7978846
    %v1178 = vtanh.pop %v1176
    %v1179 = vtanh.pop %v1177
    %v1180 = vadd.f32 %v1178, 1.0
    %v1181 = vadd.f32 %v1179, 1.0
    %v1182 = vmul.f32 %v1166, %v1180
    %v1183 = vmul.f32 %v1167, %v1181
    %v1184 = vpack.c.bf16 %v1183, %v1182
    %v1185 = vld [vmem:[%s21] sm:$0xf]
    %v1186 = vld [vmem:[%s21 + $0x4] sm:$0xf]
    %v1187 = vld [vmem:[%s21 + $0x8] sm:$0xf]
    %v1188 = vld [vmem:[%s21 + $0xc] sm:$0xf]
    %v1189 = vld [vmem:[%s21 + $0x10] sm:$0xf]
    %v1190 = vld [vmem:[%s21 + $0x14] sm:$0xf]
    %v1191 = vld [vmem:[%s21 + $0x18] sm:$0xf]
    %v1192 = vld [vmem:[%s21 + $0x1c] sm:$0xf]
    %v1193 = vld [vmem:[%s21 + $0x20] sm:$0xf]
    %v1194 = vld [vmem:[%s21 + $0x24] sm:$0xf]
    %v1195 = vld [vmem:[%s21 + $0x28] sm:$0xf]
    %v1196 = vld [vmem:[%s21 + $0x2c] sm:$0xf]
    %v1197 = vld [vmem:[%s21 + $0x30] sm:$0xf]
    %v1198 = vld [vmem:[%s21 + $0x34] sm:$0xf]
    %v1199 = vld [vmem:[%s21 + $0x38] sm:$0xf]
    %v1200 = vld [vmem:[%s21 + $0x3c] sm:$0xf]
    %v1201 = vld [vmem:[%s22] sm:$0x1]
    %v1203 = vlaneseq
    %v1204 = vshrl.u32 %v1203, 7
    %v1205 = vsub.s32 0, %v1204
    %v1206 = vrot.slane %v1201, %v1205
    %v1224 = vunpack.c.l.b16 %v1185
    %v1225 = vunpack.c.l.b16 %v1186
    %v1226 = vunpack.c.l.b16 %v1187
    %v1227 = vunpack.c.l.b16 %v1188
    %v1228 = vunpack.c.l.b16 %v1189
    %v1229 = vunpack.c.l.b16 %v1190
    %v1230 = vunpack.c.l.b16 %v1191
    %v1231 = vunpack.c.l.b16 %v1192
    %v1232 = vunpack.c.l.b16 %v1193
    %v1233 = vunpack.c.l.b16 %v1194
    %v1234 = vunpack.c.l.b16 %v1195
    %v1235 = vunpack.c.l.b16 %v1196
    %v1236 = vunpack.c.l.b16 %v1197
    %v1237 = vunpack.c.l.b16 %v1198
    %v1238 = vunpack.c.l.b16 %v1199
    %v1239 = vunpack.c.l.b16 %v1200
    %v1240 = vpack.c.b16 %v1225, %v1224
    %v1241 = vpack.c.b16 %v1227, %v1226
    %v1242 = vpack.c.b16 %v1229, %v1228
    %v1243 = vpack.c.b16 %v1231, %v1230
    %v1244 = vpack.c.b16 %v1233, %v1232
    %v1245 = vpack.c.b16 %v1235, %v1234
    %v1246 = vpack.c.b16 %v1237, %v1236
    %v1247 = vpack.c.b16 %v1239, %v1238
    %1256 = vmatprep.subr.bf16.mxu0 0
    %1257 = vmatpush1.bf16.msra.mxu0 %v1240
    %1258 = vmatprep.subr.bf16.mxu0 0
    %1259 = vmatpush1.bf16.msra.mxu0 %v1241
    %1260 = vmatprep.subr.bf16.mxu0 0
    %1261 = vmatpush1.bf16.msra.mxu0 %v1242
    %1262 = vmatprep.subr.bf16.mxu0 0
    %1263 = vmatpush1.bf16.msra.mxu0 %v1243
    %1264 = vmatprep.subr.bf16.mxu0 0
    %1265 = vmatpush1.bf16.msra.mxu0 %v1244
    %1266 = vmatprep.subr.bf16.mxu0 0
    %1267 = vmatpush1.bf16.msra.mxu0 %v1245
    %1268 = vmatprep.subr.bf16.mxu0 0
    %1269 = vmatpush1.bf16.msra.mxu0 %v1246
    %1270 = vmatprep.subr.bf16.mxu0 0
    %1271 = vmatpush1.bf16.msra.mxu0 %v1247
    %1272 = vmatprep.subr.bf16.mxu0 0
    %1273 = vmatpush1.bf16.msra.mxu0 0
    %1274 = vmatprep.subr.bf16.mxu0 0
    %1275 = vmatpush1.bf16.msra.mxu0 0
    %1276 = vmatprep.subr.bf16.mxu0 0
    %1277 = vmatpush1.bf16.msra.mxu0 0
    %1278 = vmatprep.subr.bf16.mxu0 0
    %1279 = vmatpush1.bf16.msra.mxu0 0
    %1280 = vmatprep.subr.bf16.mxu0 0
    %1281 = vmatpush1.bf16.msra.mxu0 0
    %1282 = vmatprep.subr.bf16.mxu0 0
    %1283 = vmatpush1.bf16.msra.mxu0 0
    %1284 = vmatprep.subr.bf16.mxu0 0
    %1285 = vmatpush1.bf16.msra.mxu0 0
    %1286 = vmatprep.subr.bf16.mxu0 0
    %1287 = vmatpush1.bf16.msra.mxu0 0
    %1288 = vmatprep.mubr.bf16.mxu0 0
    %1289 = vmatmul.mubr.bf16.gmra.mrb[0].mxu0 %v1184
    %v1290 = vpop.f32.mrb[0].mxu0
    %v1291 = vadd.f32 %v1206, %v1290
    %v1292 = vpop.f32.mrb[0].mxu0
    %v1293 = vpop.f32.mrb[0].mxu0
    %v1294 = vadd.f32 %v1206, %v1293
    %v1295 = vpop.f32.mrb[0].mxu0
    %1296 = vdwg.mxu0
    %v1297 = vadd.f32 %v1052, %v1291
    %v1298 = vadd.f32 %v1053, %v1294
    %s1299 = scalar_lea.vmem %s15, 1
    %v1300 = vld [vmem:[%s1299] sm:$0x1]
    %s1301 = scalar_lea.vmem %s16, 1
    %v1302 = vld [vmem:[%s1301] sm:$0x1]
    %v1303 = vsel %vm201, %v1297, 0.0
    %1304 = vadd.xlane.f32.xlu0 %v1303
    %v1305 = vpop.xlane.xlu0 %1304
    %v1306 = vsel %vm201, %v1298, 0.0
    %1307 = vadd.xlane.f32.xlu0 %v1306
    %v1308 = vpop.xlane.xlu0 %1307
    %v1309 = vmul.f32 %v1305, %v208
    %v1310 = vmul.f32 %v1308, %v208
    %v1311 = vsub.f32 %v1297, %v1309
    %v1312 = vsub.f32 %v1298, %v1310
    %v1313 = vmul.f32 %v1311, %v1311
    %v1314 = vmul.f32 %v1312, %v1312
    %v1315 = vsel %vm201, %v1313, 0.0
    %1316 = vadd.xlane.f32.xlu0 %v1315
    %v1317 = vpop.xlane.xlu0 %1316
    %v1318 = vsel %vm201, %v1314, 0.0
    %1319 = vadd.xlane.f32.xlu0 %v1318
    %v1320 = vpop.xlane.xlu0 %1319
    %v1321 = vmul.f32 %v1317, %v208
    %v1322 = vmul.f32 %v1320, %v208
    %v1323 = vadd.f32 %v1321, 1e-05
    %v1324 = vadd.f32 %v1322, 1e-05
    %v1325 = vrsqrt.pop %v1323
    %v1326 = vrsqrt.pop %v1324
    %v1327 = vmul.f32 %v1311, %v1325
    %v1328 = vmul.f32 %v1312, %v1326
    %v1330 = vlaneseq
    %v1331 = vshrl.u32 %v1330, 7
    %v1332 = vsub.s32 0, %v1331
    %v1333 = vrot.slane %v1300, %v1332
    %v1335 = vmul.f32 %v1327, %v1333
    %v1336 = vmul.f32 %v1328, %v1333
    %v1338 = vlaneseq
    %v1339 = vshrl.u32 %v1338, 7
    %v1340 = vsub.s32 0, %v1339
    %v1341 = vrot.slane %v1302, %v1340
    %v1343 = vadd.f32 %v1335, %v1341
    %v1344 = vadd.f32 %v1336, %v1341
    %v1345 = vpack.c.bf16 %v1344, %v1343
    %s1346 = scalar_lea.vmem %s7, 16
    %v1347 = vld [vmem:[%s1346] sm:$0xf]
    %v1348 = vld [vmem:[%s1346 + $0x4] sm:$0xf]
    %v1349 = vld [vmem:[%s1346 + $0x8] sm:$0xf]
    %v1350 = vld [vmem:[%s1346 + $0xc] sm:$0xf]
    %s1351 = scalar_lea.vmem %s8, 1
    %v1352 = vld [vmem:[%s1351] sm:$0x1]
    %v1354 = vlaneseq
    %v1355 = vshrl.u32 %v1354, 7
    %v1356 = vsub.s32 0, %v1355
    %v1357 = vrot.slane %v1352, %v1356
    %v1363 = vunpack.c.l.b16 %v1347
    %v1364 = vunpack.c.l.b16 %v1348
    %v1365 = vunpack.c.l.b16 %v1349
    %v1366 = vunpack.c.l.b16 %v1350
    %v1367 = vpack.c.b16 %v1364, %v1363
    %v1368 = vpack.c.b16 %v1366, %v1365
    %v1372 = vsel %vm201, %v1345, 0
    %1374 = vmatprep.subr.bf16.mxu0 0
    %1375 = vmatpush1.bf16.msra.mxu0 %v1367
    %1376 = vmatprep.subr.bf16.mxu0 0
    %1377 = vmatpush1.bf16.msra.mxu0 %v1368
    %1378 = vmatprep.subr.bf16.mxu0 0
    %1379 = vmatpush1.bf16.msra.mxu0 0
    %1380 = vmatprep.subr.bf16.mxu0 0
    %1381 = vmatpush1.bf16.msra.mxu0 0
    %1382 = vmatprep.subr.bf16.mxu0 0
    %1383 = vmatpush1.bf16.msra.mxu0 0
    %1384 = vmatprep.subr.bf16.mxu0 0
    %1385 = vmatpush1.bf16.msra.mxu0 0
    %1386 = vmatprep.subr.bf16.mxu0 0
    %1387 = vmatpush1.bf16.msra.mxu0 0
    %1388 = vmatprep.subr.bf16.mxu0 0
    %1389 = vmatpush1.bf16.msra.mxu0 0
    %1390 = vmatprep.subr.bf16.mxu0 0
    %1391 = vmatpush1.bf16.msra.mxu0 0
    %1392 = vmatprep.subr.bf16.mxu0 0
    %1393 = vmatpush1.bf16.msra.mxu0 0
    %1394 = vmatprep.subr.bf16.mxu0 0
    %1395 = vmatpush1.bf16.msra.mxu0 0
    %1396 = vmatprep.subr.bf16.mxu0 0
    %1397 = vmatpush1.bf16.msra.mxu0 0
    %1398 = vmatprep.subr.bf16.mxu0 0
    %1399 = vmatpush1.bf16.msra.mxu0 0
    %1400 = vmatprep.subr.bf16.mxu0 0
    %1401 = vmatpush1.bf16.msra.mxu0 0
    %1402 = vmatprep.subr.bf16.mxu0 0
    %1403 = vmatpush1.bf16.msra.mxu0 0
    %1404 = vmatprep.subr.bf16.mxu0 0
    %1405 = vmatpush1.bf16.msra.mxu0 0
    %1406 = vmatprep.mubr.bf16.mxu0 0
    %1407 = vmatmul.mubr.bf16.gmra.mrb[0].mxu0 %v1372
    %v1408 = vpop.f32.mrb[0].mxu0
    %v1409 = vadd.f32 %v1357, %v1408
    %v1410 = vpop.f32.mrb[0].mxu0
    %v1411 = vpop.f32.mrb[0].mxu0
    %v1412 = vadd.f32 %v1357, %v1411
    %v1413 = vpop.f32.mrb[0].mxu0
    %1414 = vdwg.mxu0
    %s1415 = scalar_lea.vmem %s9, 16
    %v1416 = vld [vmem:[%s1415] sm:$0xf]
    %v1417 = vld [vmem:[%s1415 + $0x4] sm:$0xf]
    %v1418 = vld [vmem:[%s1415 + $0x8] sm:$0xf]
    %v1419 = vld [vmem:[%s1415 + $0xc] sm:$0xf]
    %s1420 = scalar_lea.vmem %s10, 1
    %v1421 = vld [vmem:[%s1420] sm:$0x1]
    %v1423 = vlaneseq
    %v1424 = vshrl.u32 %v1423, 7
    %v1425 = vsub.s32 0, %v1424
    %v1426 = vrot.slane %v1421, %v1425
    %v1432 = vunpack.c.l.b16 %v1416
    %v1433 = vunpack.c.l.b16 %v1417
    %v1434 = vunpack.c.l.b16 %v1418
    %v1435 = vunpack.c.l.b16 %v1419
    %v1436 = vpack.c.b16 %v1433, %v1432
    %v1437 = vpack.c.b16 %v1435, %v1434
    %1440 = vmatprep.subr.bf16.mxu0 0
    %1441 = vmatpush1.bf16.msra.mxu0 %v1436
    %1442 = vmatprep.subr.bf16.mxu0 0
    %1443 = vmatpush1.bf16.msra.mxu0 %v1437
    %1444 = vmatprep.subr.bf16.mxu0 0
    %1445 = vmatpush1.bf16.msra.mxu0 0
    %1446 = vmatprep.subr.bf16.mxu0 0
    %1447 = vmatpush1.bf16.msra.mxu0 0
    %1448 = vmatprep.subr.bf16.mxu0 0
    %1449 = vmatpush1.bf16.msra.mxu0 0
    %1450 = vmatprep.subr.bf16.mxu0 0
    %1451 = vmatpush1.bf16.msra.mxu0 0
    %1452 = vmatprep.subr.bf16.mxu0 0
    %1453 = vmatpush1.bf16.msra.mxu0 0
    %1454 = vmatprep.subr.bf16.mxu0 0
    %1455 = vmatpush1.bf16.msra.mxu0 0
    %1456 = vmatprep.subr.bf16.mxu0 0
    %1457 = vmatpush1.bf16.msra.mxu0 0
    %1458 = vmatprep.subr.bf16.mxu0 0
    %1459 = vmatpush1.bf16.msra.mxu0 0
    %1460 = vmatprep.subr.bf16.mxu0 0
    %1461 = vmatpush1.bf16.msra.mxu0 0
    %1462 = vmatprep.subr.bf16.mxu0 0
    %1463 = vmatpush1.bf16.msra.mxu0 0
    %1464 = vmatprep.subr.bf16.mxu0 0
    %1465 = vmatpush1.bf16.msra.mxu0 0
    %1466 = vmatprep.subr.bf16.mxu0 0
    %1467 = vmatpush1.bf16.msra.mxu0 0
    %1468 = vmatprep.subr.bf16.mxu0 0
    %1469 = vmatpush1.bf16.msra.mxu0 0
    %1470 = vmatprep.subr.bf16.mxu0 0
    %1471 = vmatpush1.bf16.msra.mxu0 0
    %1472 = vmatprep.mubr.bf16.mxu0 0
    %1473 = vmatmul.mubr.bf16.gmra.mrb[0].mxu0 %v1372
    %v1474 = vpop.f32.mrb[0].mxu0
    %v1475 = vadd.f32 %v1426, %v1474
    %v1476 = vpop.f32.mrb[0].mxu0
    %v1477 = vpop.f32.mrb[0].mxu0
    %v1478 = vadd.f32 %v1426, %v1477
    %v1479 = vpop.f32.mrb[0].mxu0
    %1480 = vdwg.mxu0
    %s1481 = scalar_lea.vmem %s11, 16
    %v1482 = vld [vmem:[%s1481] sm:$0xf]
    %v1483 = vld [vmem:[%s1481 + $0x4] sm:$0xf]
    %v1484 = vld [vmem:[%s1481 + $0x8] sm:$0xf]
    %v1485 = vld [vmem:[%s1481 + $0xc] sm:$0xf]
    %s1486 = scalar_lea.vmem %s12, 1
    %v1487 = vld [vmem:[%s1486] sm:$0x1]
    %v1489 = vlaneseq
    %v1490 = vshrl.u32 %v1489, 7
    %v1491 = vsub.s32 0, %v1490
    %v1492 = vrot.slane %v1487, %v1491
    %v1498 = vunpack.c.l.b16 %v1482
    %v1499 = vunpack.c.l.b16 %v1483
    %v1500 = vunpack.c.l.b16 %v1484
    %v1501 = vunpack.c.l.b16 %v1485
    %v1502 = vpack.c.b16 %v1499, %v1498
    %v1503 = vpack.c.b16 %v1501, %v1500
    %1506 = vmatprep.subr.bf16.mxu0 0
    %1507 = vmatpush1.bf16.msra.mxu0 %v1502
    %1508 = vmatprep.subr.bf16.mxu0 0
    %1509 = vmatpush1.bf16.msra.mxu0 %v1503
    %1510 = vmatprep.subr.bf16.mxu0 0
    %1511 = vmatpush1.bf16.msra.mxu0 0
    %1512 = vmatprep.subr.bf16.mxu0 0
    %1513 = vmatpush1.bf16.msra.mxu0 0
    %1514 = vmatprep.subr.bf16.mxu0 0
    %1515 = vmatpush1.bf16.msra.mxu0 0
    %1516 = vmatprep.subr.bf16.mxu0 0
    %1517 = vmatpush1.bf16.msra.mxu0 0
    %1518 = vmatprep.subr.bf16.mxu0 0
    %1519 = vmatpush1.bf16.msra.mxu0 0
    %1520 = vmatprep.subr.bf16.mxu0 0
    %1521 = vmatpush1.bf16.msra.mxu0 0
    %1522 = vmatprep.subr.bf16.mxu0 0
    %1523 = vmatpush1.bf16.msra.mxu0 0
    %1524 = vmatprep.subr.bf16.mxu0 0
    %1525 = vmatpush1.bf16.msra.mxu0 0
    %1526 = vmatprep.subr.bf16.mxu0 0
    %1527 = vmatpush1.bf16.msra.mxu0 0
    %1528 = vmatprep.subr.bf16.mxu0 0
    %1529 = vmatpush1.bf16.msra.mxu0 0
    %1530 = vmatprep.subr.bf16.mxu0 0
    %1531 = vmatpush1.bf16.msra.mxu0 0
    %1532 = vmatprep.subr.bf16.mxu0 0
    %1533 = vmatpush1.bf16.msra.mxu0 0
    %1534 = vmatprep.subr.bf16.mxu0 0
    %1535 = vmatpush1.bf16.msra.mxu0 0
    %1536 = vmatprep.subr.bf16.mxu0 0
    %1537 = vmatpush1.bf16.msra.mxu0 0
    %1538 = vmatprep.mubr.bf16.mxu0 0
    %1539 = vmatmul.mubr.bf16.gmra.mrb[0].mxu0 %v1372
    %v1540 = vpop.f32.mrb[0].mxu0
    %v1541 = vadd.f32 %v1492, %v1540
    %v1542 = vpop.f32.mrb[0].mxu0
    %v1543 = vpop.f32.mrb[0].mxu0
    %v1544 = vadd.f32 %v1492, %v1543
    %v1545 = vpop.f32.mrb[0].mxu0
    %1546 = vdwg.mxu0
    %v1547 = vpack.c.bf16 %v1409, %v1409
    %v1548 = vpack.c.bf16 %v1412, %v1412
    %v1549 = vpack.c.bf16 %v1475, %v1475
    %v1550 = vpack.c.bf16 %v1478, %v1478
    %v1551 = vpack.c.bf16 %v1541, %v1541
    %v1552 = vpack.c.bf16 %v1544, %v1544
    %v1554 = vsel %vm491, %v1547, 0
    %v1557 = vsel %vm491, %v1549, 0
    %1559 = vmatprep.subr.bf16.mxu0 0
    %1560 = vmatpush1.bf16.xpose.msra.mxu0 %v1557
    %1561 = vmatprep.subr.bf16.mxu0 0
    %1562 = vmatpush1.bf16.xpose.msra.mxu0 0
    %1563 = vmatprep.subr.bf16.mxu0 0
    %1564 = vmatpush1.bf16.xpose.msra.mxu0 0
    %1565 = vmatprep.subr.bf16.mxu0 0
    %1566 = vmatpush1.bf16.xpose.msra.mxu0 0
    %1567 = vmatprep.subr.bf16.mxu0 0
    %1568 = vmatpush1.bf16.xpose.msra.mxu0 0
    %1569 = vmatprep.subr.bf16.mxu0 0
    %1570 = vmatpush1.bf16.xpose.msra.mxu0 0
    %1571 = vmatprep.subr.bf16.mxu0 0
    %1572 = vmatpush1.bf16.xpose.msra.mxu0 0
    %1573 = vmatprep.subr.bf16.mxu0 0
    %1574 = vmatpush1.bf16.xpose.msra.mxu0 0
    %1575 = vmatprep.subr.bf16.mxu0 0
    %1576 = vmatpush1.bf16.xpose.msra.mxu0 0
    %1577 = vmatprep.subr.bf16.mxu0 0
    %1578 = vmatpush1.bf16.xpose.msra.mxu0 0
    %1579 = vmatprep.subr.bf16.mxu0 0
    %1580 = vmatpush1.bf16.xpose.msra.mxu0 0
    %1581 = vmatprep.subr.bf16.mxu0 0
    %1582 = vmatpush1.bf16.xpose.msra.mxu0 0
    %1583 = vmatprep.subr.bf16.mxu0 0
    %1584 = vmatpush1.bf16.xpose.msra.mxu0 0
    %1585 = vmatprep.subr.bf16.mxu0 0
    %1586 = vmatpush1.bf16.xpose.msra.mxu0 0
    %1587 = vmatprep.subr.bf16.mxu0 0
    %1588 = vmatpush1.bf16.xpose.msra.mxu0 0
    %1589 = vmatprep.subr.bf16.mxu0 0
    %1590 = vmatpush1.bf16.xpose.msra.mxu0 0
    %1591 = vmatprep.mubr.bf16.mxu0 0
    %1592 = vmatmul.mubr.bf16.gmra.mrb[0].mxu0 %v1554
    %v1593 = vpop.f32.mrb[0].mxu0
    %v1594 = vadd.f32 0.0, %v1593
    %v1595 = vpop.f32.mrb[0].mxu0
    %v1596 = vpop.f32.mrb[0].mxu0
    %v1597 = vpop.f32.mrb[0].mxu0
    %1598 = vdwg.mxu0
    %v1600 = vsel %vm491, %v1548, 0
    %v1603 = vsel %vm491, %v1550, 0
    %1605 = vmatprep.subr.bf16.mxu0 0
    %1606 = vmatpush1.bf16.xpose.msra.mxu0 %v1603
    %1607 = vmatprep.subr.bf16.mxu0 0
    %1608 = vmatpush1.bf16.xpose.msra.mxu0 0
    %1609 = vmatprep.subr.bf16.mxu0 0
    %1610 = vmatpush1.bf16.xpose.msra.mxu0 0
    %1611 = vmatprep.subr.bf16.mxu0 0
    %1612 = vmatpush1.bf16.xpose.msra.mxu0 0
    %1613 = vmatprep.subr.bf16.mxu0 0
    %1614 = vmatpush1.bf16.xpose.msra.mxu0 0
    %1615 = vmatprep.subr.bf16.mxu0 0
    %1616 = vmatpush1.bf16.xpose.msra.mxu0 0
    %1617 = vmatprep.subr.bf16.mxu0 0
    %1618 = vmatpush1.bf16.xpose.msra.mxu0 0
    %1619 = vmatprep.subr.bf16.mxu0 0
    %1620 = vmatpush1.bf16.xpose.msra.mxu0 0
    %1621 = vmatprep.subr.bf16.mxu0 0
    %1622 = vmatpush1.bf16.xpose.msra.mxu0 0
    %1623 = vmatprep.subr.bf16.mxu0 0
    %1624 = vmatpush1.bf16.xpose.msra.mxu0 0
    %1625 = vmatprep.subr.bf16.mxu0 0
    %1626 = vmatpush1.bf16.xpose.msra.mxu0 0
    %1627 = vmatprep.subr.bf16.mxu0 0
    %1628 = vmatpush1.bf16.xpose.msra.mxu0 0
    %1629 = vmatprep.subr.bf16.mxu0 0
    %1630 = vmatpush1.bf16.xpose.msra.mxu0 0
    %1631 = vmatprep.subr.bf16.mxu0 0
    %1632 = vmatpush1.bf16.xpose.msra.mxu0 0
    %1633 = vmatprep.subr.bf16.mxu0 0
    %1634 = vmatpush1.bf16.xpose.msra.mxu0 0
    %1635 = vmatprep.subr.bf16.mxu0 0
    %1636 = vmatpush1.bf16.xpose.msra.mxu0 0
    %1637 = vmatprep.mubr.bf16.mxu0 0
    %1638 = vmatmul.mubr.bf16.gmra.mrb[0].mxu0 %v1600
    %v1639 = vpop.f32.mrb[0].mxu0
    %v1640 = vadd.f32 0.0, %v1639
    %v1641 = vpop.f32.mrb[0].mxu0
    %v1642 = vpop.f32.mrb[0].mxu0
    %v1643 = vpop.f32.mrb[0].mxu0
    %1644 = vdwg.mxu0
    %v1645 = vmul.f32 %v1594, 0.25
    %v1646 = vmul.f32 %v1640, 0.25
    %v1647 = vadd.f32 %v1645, %v194
    %v1648 = vadd.f32 %v1646, %v195
    %v1649 = vsel %vm588, %v1647, -inf
    %1650 = vmax.xlane.f32.xlu0 %v1649
    %v1651 = vpop.xlane.xlu0 %1650
    %v1652 = vsel %vm588, %v1648, -inf
    %1653 = vmax.xlane.f32.xlu0 %v1652
    %v1654 = vpop.xlane.xlu0 %1653
    %v1655 = vsub.f32 %v1647, %v1651
    %v1656 = vsub.f32 %v1648, %v1654
    %v1657 = vmul.f32 %v1655, 1.442695
    %v1658 = vpow.pop %v1657
    %v1659 = vmul.f32 %v1656, 1.442695
    %v1660 = vpow.pop %v1659
    %v1661 = vsel %vm588, %v1658, 0.0
    %1662 = vadd.xlane.f32.xlu0 %v1661
    %v1663 = vpop.xlane.xlu0 %1662
    %v1664 = vsel %vm588, %v1660, 0.0
    %1665 = vadd.xlane.f32.xlu0 %v1664
    %v1666 = vpop.xlane.xlu0 %1665
    %v1667 = vrcp.pop %v1663
    %v1668 = vrcp.pop %v1666
    %v1669 = vmul.f32 %v1658, %v1667
    %v1670 = vmul.f32 %v1660, %v1668
    %v1671 = vpack.c.bf16 %v1669, %v1669
    %v1672 = vpack.c.bf16 %v1670, %v1670
    %v1674 = vsel %vm588, %v1671, 0
    %v1677 = vsel %vm616, %v1551, 0
    %1679 = vmatprep.subr.bf16.mxu0 0
    %1680 = vmatpush1.bf16.msra.mxu0 %v1677
    %1681 = vmatprep.subr.bf16.mxu0 0
    %1682 = vmatpush1.bf16.msra.mxu0 0
    %1683 = vmatprep.subr.bf16.mxu0 0
    %1684 = vmatpush1.bf16.msra.mxu0 0
    %1685 = vmatprep.subr.bf16.mxu0 0
    %1686 = vmatpush1.bf16.msra.mxu0 0
    %1687 = vmatprep.subr.bf16.mxu0 0
    %1688 = vmatpush1.bf16.msra.mxu0 0
    %1689 = vmatprep.subr.bf16.mxu0 0
    %1690 = vmatpush1.bf16.msra.mxu0 0
    %1691 = vmatprep.subr.bf16.mxu0 0
    %1692 = vmatpush1.bf16.msra.mxu0 0
    %1693 = vmatprep.subr.bf16.mxu0 0
    %1694 = vmatpush1.bf16.msra.mxu0 0
    %1695 = vmatprep.subr.bf16.mxu0 0
    %1696 = vmatpush1.bf16.msra.mxu0 0
    %1697 = vmatprep.subr.bf16.mxu0 0
    %1698 = vmatpush1.bf16.msra.mxu0 0
    %1699 = vmatprep.subr.bf16.mxu0 0
    %1700 = vmatpush1.bf16.msra.mxu0 0
    %1701 = vmatprep.subr.bf16.mxu0 0
    %1702 = vmatpush1.bf16.msra.mxu0 0
    %1703 = vmatprep.subr.bf16.mxu0 0
    %1704 = vmatpush1.bf16.msra.mxu0 0
    %1705 = vmatprep.subr.bf16.mxu0 0
    %1706 = vmatpush1.bf16.msra.mxu0 0
    %1707 = vmatprep.subr.bf16.mxu0 0
    %1708 = vmatpush1.bf16.msra.mxu0 0
    %1709 = vmatprep.subr.bf16.mxu0 0
    %1710 = vmatpush1.bf16.msra.mxu0 0
    %1711 = vmatprep.mubr.bf16.mxu0 0
    %1712 = vmatmul.mubr.bf16.gmra.mrb[0].mxu0 %v1674
    %v1713 = vpop.f32.mrb[0].mxu0
    %v1714 = vadd.f32 0.0, %v1713
    %v1715 = vpop.f32.mrb[0].mxu0
    %v1716 = vpop.f32.mrb[0].mxu0
    %v1717 = vpop.f32.mrb[0].mxu0
    %1718 = vdwg.mxu0
    %v1720 = vsel %vm588, %v1672, 0
    %v1723 = vsel %vm616, %v1552, 0
    %1725 = vmatprep.subr.bf16.mxu0 0
    %1726 = vmatpush1.bf16.msra.mxu0 %v1723
    %1727 = vmatprep.subr.bf16.mxu0 0
    %1728 = vmatpush1.bf16.msra.mxu0 0
    %1729 = vmatprep.subr.bf16.mxu0 0
    %1730 = vmatpush1.bf16.msra.mxu0 0
    %1731 = vmatprep.subr.bf16.mxu0 0
    %1732 = vmatpush1.bf16.msra.mxu0 0
    %1733 = vmatprep.subr.bf16.mxu0 0
    %1734 = vmatpush1.bf16.msra.mxu0 0
    %1735 = vmatprep.subr.bf16.mxu0 0
    %1736 = vmatpush1.bf16.msra.mxu0 0
    %1737 = vmatprep.subr.bf16.mxu0 0
    %1738 = vmatpush1.bf16.msra.mxu0 0
    %1739 = vmatprep.subr.bf16.mxu0 0
    %1740 = vmatpush1.bf16.msra.mxu0 0
    %1741 = vmatprep.subr.bf16.mxu0 0
    %1742 = vmatpush1.bf16.msra.mxu0 0
    %1743 = vmatprep.subr.bf16.mxu0 0
    %1744 = vmatpush1.bf16.msra.mxu0 0
    %1745 = vmatprep.subr.bf16.mxu0 0
    %1746 = vmatpush1.bf16.msra.mxu0 0
    %1747 = vmatprep.subr.bf16.mxu0 0
    %1748 = vmatpush1.bf16.msra.mxu0 0
    %1749 = vmatprep.subr.bf16.mxu0 0
    %1750 = vmatpush1.bf16.msra.mxu0 0
    %1751 = vmatprep.subr.bf16.mxu0 0
    %1752 = vmatpush1.bf16.msra.mxu0 0
    %1753 = vmatprep.subr.bf16.mxu0 0
    %1754 = vmatpush1.bf16.msra.mxu0 0
    %1755 = vmatprep.subr.bf16.mxu0 0
    %1756 = vmatpush1.bf16.msra.mxu0 0
    %1757 = vmatprep.mubr.bf16.mxu0 0
    %1758 = vmatmul.mubr.bf16.gmra.mrb[0].mxu0 %v1720
    %v1759 = vpop.f32.mrb[0].mxu0
    %v1760 = vadd.f32 0.0, %v1759
    %v1761 = vpop.f32.mrb[0].mxu0
    %v1762 = vpop.f32.mrb[0].mxu0
    %v1763 = vpop.f32.mrb[0].mxu0
    %1764 = vdwg.mxu0
    %v1765 = vpack.c.bf16 %v1760, %v1714
    %s1766 = scalar_lea.vmem %s13, 16
    %v1767 = vld [vmem:[%s1766] sm:$0xf]
    %v1768 = vld [vmem:[%s1766 + $0x4] sm:$0xf]
    %1770 = vrot.lane.b32.xlu0 %v1547, 112
    %v1771 = vpop.permute.xlu0 %1770
    %1773 = vrot.lane.b32.xlu0 %v1549, 112
    %v1774 = vpop.permute.xlu0 %1773
    %v1776 = vsel %vm491, %v1771, 0
    %v1779 = vsel %vm491, %v1774, 0
    %1781 = vmatprep.subr.bf16.mxu0 0
    %1782 = vmatpush1.bf16.xpose.msra.mxu0 %v1779
    %1783 = vmatprep.subr.bf16.mxu0 0
    %1784 = vmatpush1.bf16.xpose.msra.mxu0 0
    %1785 = vmatprep.subr.bf16.mxu0 0
    %1786 = vmatpush1.bf16.xpose.msra.mxu0 0
    %1787 = vmatprep.subr.bf16.mxu0 0
    %1788 = vmatpush1.bf16.xpose.msra.mxu0 0
    %1789 = vmatprep.subr.bf16.mxu0 0
    %1790 = vmatpush1.bf16.xpose.msra.mxu0 0
    %1791 = vmatprep.subr.bf16.mxu0 0
    %1792 = vmatpush1.bf16.xpose.msra.mxu0 0
    %1793 = vmatprep.subr.bf16.mxu0 0
    %1794 = vmatpush1.bf16.xpose.msra.mxu0 0
    %1795 = vmatprep.subr.bf16.mxu0 0
    %1796 = vmatpush1.bf16.xpose.msra.mxu0 0
    %1797 = vmatprep.subr.bf16.mxu0 0
    %1798 = vmatpush1.bf16.xpose.msra.mxu0 0
    %1799 = vmatprep.subr.bf16.mxu0 0
    %1800 = vmatpush1.bf16.xpose.msra.mxu0 0
    %1801 = vmatprep.subr.bf16.mxu0 0
    %1802 = vmatpush1.bf16.xpose.msra.mxu0 0
    %1803 = vmatprep.subr.bf16.mxu0 0
    %1804 = vmatpush1.bf16.xpose.msra.mxu0 0
    %1805 = vmatprep.subr.bf16.mxu0 0
    %1806 = vmatpush1.bf16.xpose.msra.mxu0 0
    %1807 = vmatprep.subr.bf16.mxu0 0
    %1808 = vmatpush1.bf16.xpose.msra.mxu0 0
    %1809 = vmatprep.subr.bf16.mxu0 0
    %1810 = vmatpush1.bf16.xpose.msra.mxu0 0
    %1811 = vmatprep.subr.bf16.mxu0 0
    %1812 = vmatpush1.bf16.xpose.msra.mxu0 0
    %1813 = vmatprep.mubr.bf16.mxu0 0
    %1814 = vmatmul.mubr.bf16.gmra.mrb[0].mxu0 %v1776
    %v1815 = vpop.f32.mrb[0].mxu0
    %v1816 = vadd.f32 0.0, %v1815
    %v1817 = vpop.f32.mrb[0].mxu0
    %v1818 = vpop.f32.mrb[0].mxu0
    %v1819 = vpop.f32.mrb[0].mxu0
    %1820 = vdwg.mxu0
    %1822 = vrot.lane.b32.xlu0 %v1548, 112
    %v1823 = vpop.permute.xlu0 %1822
    %1825 = vrot.lane.b32.xlu0 %v1550, 112
    %v1826 = vpop.permute.xlu0 %1825
    %v1828 = vsel %vm491, %v1823, 0
    %v1831 = vsel %vm491, %v1826, 0
    %1833 = vmatprep.subr.bf16.mxu0 0
    %1834 = vmatpush1.bf16.xpose.msra.mxu0 %v1831
    %1835 = vmatprep.subr.bf16.mxu0 0
    %1836 = vmatpush1.bf16.xpose.msra.mxu0 0
    %1837 = vmatprep.subr.bf16.mxu0 0
    %1838 = vmatpush1.bf16.xpose.msra.mxu0 0
    %1839 = vmatprep.subr.bf16.mxu0 0
    %1840 = vmatpush1.bf16.xpose.msra.mxu0 0
    %1841 = vmatprep.subr.bf16.mxu0 0
    %1842 = vmatpush1.bf16.xpose.msra.mxu0 0
    %1843 = vmatprep.subr.bf16.mxu0 0
    %1844 = vmatpush1.bf16.xpose.msra.mxu0 0
    %1845 = vmatprep.subr.bf16.mxu0 0
    %1846 = vmatpush1.bf16.xpose.msra.mxu0 0
    %1847 = vmatprep.subr.bf16.mxu0 0
    %1848 = vmatpush1.bf16.xpose.msra.mxu0 0
    %1849 = vmatprep.subr.bf16.mxu0 0
    %1850 = vmatpush1.bf16.xpose.msra.mxu0 0
    %1851 = vmatprep.subr.bf16.mxu0 0
    %1852 = vmatpush1.bf16.xpose.msra.mxu0 0
    %1853 = vmatprep.subr.bf16.mxu0 0
    %1854 = vmatpush1.bf16.xpose.msra.mxu0 0
    %1855 = vmatprep.subr.bf16.mxu0 0
    %1856 = vmatpush1.bf16.xpose.msra.mxu0 0
    %1857 = vmatprep.subr.bf16.mxu0 0
    %1858 = vmatpush1.bf16.xpose.msra.mxu0 0
    %1859 = vmatprep.subr.bf16.mxu0 0
    %1860 = vmatpush1.bf16.xpose.msra.mxu0 0
    %1861 = vmatprep.subr.bf16.mxu0 0
    %1862 = vmatpush1.bf16.xpose.msra.mxu0 0
    %1863 = vmatprep.subr.bf16.mxu0 0
    %1864 = vmatpush1.bf16.xpose.msra.mxu0 0
    %1865 = vmatprep.mubr.bf16.mxu0 0
    %1866 = vmatmul.mubr.bf16.gmra.mrb[0].mxu0 %v1828
    %v1867 = vpop.f32.mrb[0].mxu0
    %v1868 = vadd.f32 0.0, %v1867
    %v1869 = vpop.f32.mrb[0].mxu0
    %v1870 = vpop.f32.mrb[0].mxu0
    %v1871 = vpop.f32.mrb[0].mxu0
    %1872 = vdwg.mxu0
    %v1873 = vmul.f32 %v1816, 0.25
    %v1874 = vmul.f32 %v1868, 0.25
    %v1875 = vadd.f32 %v1873, %v194
    %v1876 = vadd.f32 %v1874, %v195
    %v1877 = vsel %vm588, %v1875, -inf
    %1878 = vmax.xlane.f32.xlu0 %v1877
    %v1879 = vpop.xlane.xlu0 %1878
    %v1880 = vsel %vm588, %v1876, -inf
    %1881 = vmax.xlane.f32.xlu0 %v1880
    %v1882 = vpop.xlane.xlu0 %1881
    %v1883 = vsub.f32 %v1875, %v1879
    %v1884 = vsub.f32 %v1876, %v1882
    %v1885 = vmul.f32 %v1883, 1.442695
    %v1886 = vpow.pop %v1885
    %v1887 = vmul.f32 %v1884, 1.442695
    %v1888 = vpow.pop %v1887
    %v1889 = vsel %vm588, %v1886, 0.0
    %1890 = vadd.xlane.f32.xlu0 %v1889
    %v1891 = vpop.xlane.xlu0 %1890
    %v1892 = vsel %vm588, %v1888, 0.0
    %1893 = vadd.xlane.f32.xlu0 %v1892
    %v1894 = vpop.xlane.xlu0 %1893
    %v1895 = vrcp.pop %v1891
    %v1896 = vrcp.pop %v1894
    %v1897 = vmul.f32 %v1886, %v1895
    %v1898 = vmul.f32 %v1888, %v1896
    %v1899 = vpack.c.bf16 %v1897, %v1897
    %v1900 = vpack.c.bf16 %v1898, %v1898
    %1902 = vrot.lane.b32.xlu0 %v1551, 112
    %v1903 = vpop.permute.xlu0 %1902
    %v1905 = vsel %vm588, %v1899, 0
    %v1908 = vsel %vm616, %v1903, 0
    %1910 = vmatprep.subr.bf16.mxu0 0
    %1911 = vmatpush1.bf16.msra.mxu0 %v1908
    %1912 = vmatprep.subr.bf16.mxu0 0
    %1913 = vmatpush1.bf16.msra.mxu0 0
    %1914 = vmatprep.subr.bf16.mxu0 0
    %1915 = vmatpush1.bf16.msra.mxu0 0
    %1916 = vmatprep.subr.bf16.mxu0 0
    %1917 = vmatpush1.bf16.msra.mxu0 0
    %1918 = vmatprep.subr.bf16.mxu0 0
    %1919 = vmatpush1.bf16.msra.mxu0 0
    %1920 = vmatprep.subr.bf16.mxu0 0
    %1921 = vmatpush1.bf16.msra.mxu0 0
    %1922 = vmatprep.subr.bf16.mxu0 0
    %1923 = vmatpush1.bf16.msra.mxu0 0
    %1924 = vmatprep.subr.bf16.mxu0 0
    %1925 = vmatpush1.bf16.msra.mxu0 0
    %1926 = vmatprep.subr.bf16.mxu0 0
    %1927 = vmatpush1.bf16.msra.mxu0 0
    %1928 = vmatprep.subr.bf16.mxu0 0
    %1929 = vmatpush1.bf16.msra.mxu0 0
    %1930 = vmatprep.subr.bf16.mxu0 0
    %1931 = vmatpush1.bf16.msra.mxu0 0
    %1932 = vmatprep.subr.bf16.mxu0 0
    %1933 = vmatpush1.bf16.msra.mxu0 0
    %1934 = vmatprep.subr.bf16.mxu0 0
    %1935 = vmatpush1.bf16.msra.mxu0 0
    %1936 = vmatprep.subr.bf16.mxu0 0
    %1937 = vmatpush1.bf16.msra.mxu0 0
    %1938 = vmatprep.subr.bf16.mxu0 0
    %1939 = vmatpush1.bf16.msra.mxu0 0
    %1940 = vmatprep.subr.bf16.mxu0 0
    %1941 = vmatpush1.bf16.msra.mxu0 0
    %1942 = vmatprep.mubr.bf16.mxu0 0
    %1943 = vmatmul.mubr.bf16.gmra.mrb[0].mxu0 %v1905
    %v1944 = vpop.f32.mrb[0].mxu0
    %v1945 = vadd.f32 0.0, %v1944
    %v1946 = vpop.f32.mrb[0].mxu0
    %v1947 = vpop.f32.mrb[0].mxu0
    %v1948 = vpop.f32.mrb[0].mxu0
    %1949 = vdwg.mxu0
    %1951 = vrot.lane.b32.xlu0 %v1552, 112
    %v1952 = vpop.permute.xlu0 %1951
    %v1954 = vsel %vm588, %v1900, 0
    %v1957 = vsel %vm616, %v1952, 0
    %1959 = vmatprep.subr.bf16.mxu0 0
    %1960 = vmatpush1.bf16.msra.mxu0 %v1957
    %1961 = vmatprep.subr.bf16.mxu0 0
    %1962 = vmatpush1.bf16.msra.mxu0 0
    %1963 = vmatprep.subr.bf16.mxu0 0
    %1964 = vmatpush1.bf16.msra.mxu0 0
    %1965 = vmatprep.subr.bf16.mxu0 0
    %1966 = vmatpush1.bf16.msra.mxu0 0
    %1967 = vmatprep.subr.bf16.mxu0 0
    %1968 = vmatpush1.bf16.msra.mxu0 0
    %1969 = vmatprep.subr.bf16.mxu0 0
    %1970 = vmatpush1.bf16.msra.mxu0 0
    %1971 = vmatprep.subr.bf16.mxu0 0
    %1972 = vmatpush1.bf16.msra.mxu0 0
    %1973 = vmatprep.subr.bf16.mxu0 0
    %1974 = vmatpush1.bf16.msra.mxu0 0
    %1975 = vmatprep.subr.bf16.mxu0 0
    %1976 = vmatpush1.bf16.msra.mxu0 0
    %1977 = vmatprep.subr.bf16.mxu0 0
    %1978 = vmatpush1.bf16.msra.mxu0 0
    %1979 = vmatprep.subr.bf16.mxu0 0
    %1980 = vmatpush1.bf16.msra.mxu0 0
    %1981 = vmatprep.subr.bf16.mxu0 0
    %1982 = vmatpush1.bf16.msra.mxu0 0
    %1983 = vmatprep.subr.bf16.mxu0 0
    %1984 = vmatpush1.bf16.msra.mxu0 0
    %1985 = vmatprep.subr.bf16.mxu0 0
    %1986 = vmatpush1.bf16.msra.mxu0 0
    %1987 = vmatprep.subr.bf16.mxu0 0
    %1988 = vmatpush1.bf16.msra.mxu0 0
    %1989 = vmatprep.subr.bf16.mxu0 0
    %1990 = vmatpush1.bf16.msra.mxu0 0
    %1991 = vmatprep.mubr.bf16.mxu0 0
    %1992 = vmatmul.mubr.bf16.gmra.mrb[0].mxu0 %v1954
    %v1993 = vpop.f32.mrb[0].mxu0
    %v1994 = vadd.f32 0.0, %v1993
    %v1995 = vpop.f32.mrb[0].mxu0
    %v1996 = vpop.f32.mrb[0].mxu0
    %v1997 = vpop.f32.mrb[0].mxu0
    %1998 = vdwg.mxu0
    %v1999 = vpack.c.bf16 %v1994, %v1945
    %s2000 = scalar_lea.vmem %s13, 24
    %v2001 = vld [vmem:[%s2000] sm:$0xf]
    %v2002 = vld [vmem:[%s2000 + $0x4] sm:$0xf]
    %v2005 = vunpack.c.l.b16 %v2001
    %v2006 = vunpack.c.l.b16 %v2002
    %v2007 = vpack.c.b16 %v2006, %v2005
    %v2010 = vsel %vm491, %v1999, 0
    %2012 = vmatprep.subr.bf16.mxu0 0
    %2013 = vmatpush1.bf16.msra.mxu0 %v2007
    %2014 = vmatprep.subr.bf16.mxu0 0
    %2015 = vmatpush1.bf16.msra.mxu0 0
    %2016 = vmatprep.subr.bf16.mxu0 0
    %2017 = vmatpush1.bf16.msra.mxu0 0
    %2018 = vmatprep.subr.bf16.mxu0 0
    %2019 = vmatpush1.bf16.msra.mxu0 0
    %2020 = vmatprep.subr.bf16.mxu0 0
    %2021 = vmatpush1.bf16.msra.mxu0 0
    %2022 = vmatprep.subr.bf16.mxu0 0
    %2023 = vmatpush1.bf16.msra.mxu0 0
    %2024 = vmatprep.subr.bf16.mxu0 0
    %2025 = vmatpush1.bf16.msra.mxu0 0
    %2026 = vmatprep.subr.bf16.mxu0 0
    %2027 = vmatpush1.bf16.msra.mxu0 0
    %2028 = vmatprep.subr.bf16.mxu0 0
    %2029 = vmatpush1.bf16.msra.mxu0 0
    %2030 = vmatprep.subr.bf16.mxu0 0
    %2031 = vmatpush1.bf16.msra.mxu0 0
    %2032 = vmatprep.subr.bf16.mxu0 0
    %2033 = vmatpush1.bf16.msra.mxu0 0
    %2034 = vmatprep.subr.bf16.mxu0 0
    %2035 = vmatpush1.bf16.msra.mxu0 0
    %2036 = vmatprep.subr.bf16.mxu0 0
    %2037 = vmatpush1.bf16.msra.mxu0 0
    %2038 = vmatprep.subr.bf16.mxu0 0
    %2039 = vmatpush1.bf16.msra.mxu0 0
    %2040 = vmatprep.subr.bf16.mxu0 0
    %2041 = vmatpush1.bf16.msra.mxu0 0
    %2042 = vmatprep.subr.bf16.mxu0 0
    %2043 = vmatpush1.bf16.msra.mxu0 0
    %2044 = vmatprep.mubr.bf16.mxu0 0
    %2045 = vmatmul.mubr.bf16.gmra.mrb[0].mxu0 %v2010
    %v2046 = vpop.f32.mrb[0].mxu0
    %v2047 = vadd.f32 0.0, %v2046
    %v2048 = vpop.f32.mrb[0].mxu0
    %v2049 = vpop.f32.mrb[0].mxu0
    %v2050 = vadd.f32 0.0, %v2049
    %v2051 = vpop.f32.mrb[0].mxu0
    %2052 = vdwg.mxu0
    %v2055 = vunpack.c.l.b16 %v1767
    %v2056 = vunpack.c.l.b16 %v1768
    %v2057 = vpack.c.b16 %v2056, %v2055
    %v2060 = vsel %vm491, %v1765, 0
    %2062 = vmatprep.subr.bf16.mxu0 0
    %2063 = vmatpush1.bf16.msra.mxu0 %v2057
    %2064 = vmatprep.subr.bf16.mxu0 0
    %2065 = vmatpush1.bf16.msra.mxu0 0
    %2066 = vmatprep.subr.bf16.mxu0 0
    %2067 = vmatpush1.bf16.msra.mxu0 0
    %2068 = vmatprep.subr.bf16.mxu0 0
    %2069 = vmatpush1.bf16.msra.mxu0 0
    %2070 = vmatprep.subr.bf16.mxu0 0
    %2071 = vmatpush1.bf16.msra.mxu0 0
    %2072 = vmatprep.subr.bf16.mxu0 0
    %2073 = vmatpush1.bf16.msra.mxu0 0
    %2074 = vmatprep.subr.bf16.mxu0 0
    %2075 = vmatpush1.bf16.msra.mxu0 0
    %2076 = vmatprep.subr.bf16.mxu0 0
    %2077 = vmatpush1.bf16.msra.mxu0 0
    %2078 = vmatprep.subr.bf16.mxu0 0
    %2079 = vmatpush1.bf16.msra.mxu0 0
    %2080 = vmatprep.subr.bf16.mxu0 0
    %2081 = vmatpush1.bf16.msra.mxu0 0
    %2082 = vmatprep.subr.bf16.mxu0 0
    %2083 = vmatpush1.bf16.msra.mxu0 0
    %2084 = vmatprep.subr.bf16.mxu0 0
    %2085 = vmatpush1.bf16.msra.mxu0 0
    %2086 = vmatprep.subr.bf16.mxu0 0
    %2087 = vmatpush1.bf16.msra.mxu0 0
    %2088 = vmatprep.subr.bf16.mxu0 0
    %2089 = vmatpush1.bf16.msra.mxu0 0
    %2090 = vmatprep.subr.bf16.mxu0 0
    %2091 = vmatpush1.bf16.msra.mxu0 0
    %2092 = vmatprep.subr.bf16.mxu0 0
    %2093 = vmatpush1.bf16.msra.mxu0 0
    %2094 = vmatprep.mubr.bf16.mxu0 0
    %2095 = vmatmul.mubr.bf16.gmra.mrb[0].mxu0 %v2060
    %v2096 = vpop.f32.mrb[0].mxu0
    %v2097 = vadd.f32 %v2047, %v2096
    %v2098 = vpop.f32.mrb[0].mxu0
    %v2099 = vpop.f32.mrb[0].mxu0
    %v2100 = vadd.f32 %v2050, %v2099
    %v2101 = vpop.f32.mrb[0].mxu0
    %2102 = vdwg.mxu0
    %v2103 = vadd.f32 %v1297, %v2097
    %v2104 = vadd.f32 %v1298, %v2100
    %s2105 = scalar_lea.vmem %s14, 1
    %v2106 = vld [vmem:[%s2105] sm:$0x1]
    %v2108 = vlaneseq
    %v2109 = vshrl.u32 %v2108, 7
    %v2110 = vsub.s32 0, %v2109
    %v2111 = vrot.slane %v2106, %v2110
    %v2113 = vadd.f32 %v2103, %v2111
    %v2114 = vadd.f32 %v2104, %v2111
    %s2115 = scalar_lea.vmem %s17, 1
    %v2116 = vld [vmem:[%s2115] sm:$0x1]
    %s2117 = scalar_lea.vmem %s18, 1
    %v2118 = vld [vmem:[%s2117] sm:$0x1]
    %v2119 = vsel %vm201, %v2113, 0.0
    %2120 = vadd.xlane.f32.xlu0 %v2119
    %v2121 = vpop.xlane.xlu0 %2120
    %v2122 = vsel %vm201, %v2114, 0.0
    %2123 = vadd.xlane.f32.xlu0 %v2122
    %v2124 = vpop.xlane.xlu0 %2123
    %v2125 = vmul.f32 %v2121, %v208
    %v2126 = vmul.f32 %v2124, %v208
    %v2127 = vsub.f32 %v2113, %v2125
    %v2128 = vsub.f32 %v2114, %v2126
    %v2129 = vmul.f32 %v2127, %v2127
    %v2130 = vmul.f32 %v2128, %v2128
    %v2131 = vsel %vm201, %v2129, 0.0
    %2132 = vadd.xlane.f32.xlu0 %v2131
    %v2133 = vpop.xlane.xlu0 %2132
    %v2134 = vsel %vm201, %v2130, 0.0
    %2135 = vadd.xlane.f32.xlu0 %v2134
    %v2136 = vpop.xlane.xlu0 %2135
    %v2137 = vmul.f32 %v2133, %v208
    %v2138 = vmul.f32 %v2136, %v208
    %v2139 = vadd.f32 %v2137, 1e-05
    %v2140 = vadd.f32 %v2138, 1e-05
    %v2141 = vrsqrt.pop %v2139
    %v2142 = vrsqrt.pop %v2140
    %v2143 = vmul.f32 %v2127, %v2141
    %v2144 = vmul.f32 %v2128, %v2142
    %v2146 = vlaneseq
    %v2147 = vshrl.u32 %v2146, 7
    %v2148 = vsub.s32 0, %v2147
    %v2149 = vrot.slane %v2116, %v2148
    %v2151 = vmul.f32 %v2143, %v2149
    %v2152 = vmul.f32 %v2144, %v2149
    %v2154 = vlaneseq
    %v2155 = vshrl.u32 %v2154, 7
    %v2156 = vsub.s32 0, %v2155
    %v2157 = vrot.slane %v2118, %v2156
    %v2159 = vadd.f32 %v2151, %v2157
    %v2160 = vadd.f32 %v2152, %v2157
    %v2161 = vpack.c.bf16 %v2160, %v2159
    %s2162 = scalar_lea.vmem %s19, 16
    %v2163 = vld [vmem:[%s2162] sm:$0xf]
    %v2164 = vld [vmem:[%s2162 + $0x4] sm:$0xf]
    %v2165 = vld [vmem:[%s2162 + $0x8] sm:$0xf]
    %v2166 = vld [vmem:[%s2162 + $0xc] sm:$0xf]
    %s2167 = scalar_lea.vmem %s20, 1
    %v2168 = vld [vmem:[%s2167] sm:$0x1]
    %v2170 = vlaneseq
    %v2171 = vshrl.u32 %v2170, 7
    %v2172 = vsub.s32 0, %v2171
    %v2173 = vrot.slane %v2168, %v2172
    %v2179 = vunpack.c.l.b16 %v2163
    %v2180 = vunpack.c.l.b16 %v2164
    %v2181 = vunpack.c.l.b16 %v2165
    %v2182 = vunpack.c.l.b16 %v2166
    %v2183 = vpack.c.b16 %v2180, %v2179
    %v2184 = vpack.c.b16 %v2182, %v2181
    %v2188 = vsel %vm201, %v2161, 0
    %2190 = vmatprep.subr.bf16.mxu0 0
    %2191 = vmatpush1.bf16.msra.mxu0 %v2183
    %2192 = vmatprep.subr.bf16.mxu0 0
    %2193 = vmatpush1.bf16.msra.mxu0 %v2184
    %2194 = vmatprep.subr.bf16.mxu0 0
    %2195 = vmatpush1.bf16.msra.mxu0 0
    %2196 = vmatprep.subr.bf16.mxu0 0
    %2197 = vmatpush1.bf16.msra.mxu0 0
    %2198 = vmatprep.subr.bf16.mxu0 0
    %2199 = vmatpush1.bf16.msra.mxu0 0
    %2200 = vmatprep.subr.bf16.mxu0 0
    %2201 = vmatpush1.bf16.msra.mxu0 0
    %2202 = vmatprep.subr.bf16.mxu0 0
    %2203 = vmatpush1.bf16.msra.mxu0 0
    %2204 = vmatprep.subr.bf16.mxu0 0
    %2205 = vmatpush1.bf16.msra.mxu0 0
    %2206 = vmatprep.subr.bf16.mxu0 0
    %2207 = vmatpush1.bf16.msra.mxu0 0
    %2208 = vmatprep.subr.bf16.mxu0 0
    %2209 = vmatpush1.bf16.msra.mxu0 0
    %2210 = vmatprep.subr.bf16.mxu0 0
    %2211 = vmatpush1.bf16.msra.mxu0 0
    %2212 = vmatprep.subr.bf16.mxu0 0
    %2213 = vmatpush1.bf16.msra.mxu0 0
    %2214 = vmatprep.subr.bf16.mxu0 0
    %2215 = vmatpush1.bf16.msra.mxu0 0
    %2216 = vmatprep.subr.bf16.mxu0 0
    %2217 = vmatpush1.bf16.msra.mxu0 0
    %2218 = vmatprep.subr.bf16.mxu0 0
    %2219 = vmatpush1.bf16.msra.mxu0 0
    %2220 = vmatprep.subr.bf16.mxu0 0
    %2221 = vmatpush1.bf16.msra.mxu0 0
    %2222 = vmatprep.mubr.bf16.mxu0 0
    %2223 = vmatmul.mubr.bf16.gmra.mrb[0].mxu0 %v2188
    %v2224 = vpop.f32.mrb[0].mxu0
    %v2225 = vadd.f32 %v2173, %v2224
    %v2226 = vpop.f32.mrb[0].mxu0
    %v2227 = vpop.f32.mrb[0].mxu0
    %v2228 = vadd.f32 %v2173, %v2227
    %v2229 = vpop.f32.mrb[0].mxu0
    %2230 = vdwg.mxu0
    %v2231 = vmul.f32 %v2225, 0.5
    %v2232 = vmul.f32 %v2228, 0.5
    %v2233 = vmul.f32 %v2225, 0.044715
    %v2234 = vmul.f32 %v2228, 0.044715
    %v2235 = vmul.f32 %v2233, %v2225
    %v2236 = vmul.f32 %v2234, %v2228
    %v2237 = vmul.f32 %v2235, %v2225
    %v2238 = vmul.f32 %v2236, %v2228
    %v2239 = vadd.f32 %v2225, %v2237
    %v2240 = vadd.f32 %v2228, %v2238
    %v2241 = vmul.f32 %v2239, 0.7978846
    %v2242 = vmul.f32 %v2240, 0.7978846
    %v2243 = vtanh.pop %v2241
    %v2244 = vtanh.pop %v2242
    %v2245 = vadd.f32 %v2243, 1.0
    %v2246 = vadd.f32 %v2244, 1.0
    %v2247 = vmul.f32 %v2231, %v2245
    %v2248 = vmul.f32 %v2232, %v2246
    %v2249 = vpack.c.bf16 %v2248, %v2247
    %s2250 = scalar_lea.vmem %s21, 64
    %v2251 = vld [vmem:[%s2250] sm:$0xf]
    %v2252 = vld [vmem:[%s2250 + $0x4] sm:$0xf]
    %v2253 = vld [vmem:[%s2250 + $0x8] sm:$0xf]
    %v2254 = vld [vmem:[%s2250 + $0xc] sm:$0xf]
    %v2255 = vld [vmem:[%s2250 + $0x10] sm:$0xf]
    %v2256 = vld [vmem:[%s2250 + $0x14] sm:$0xf]
    %v2257 = vld [vmem:[%s2250 + $0x18] sm:$0xf]
    %v2258 = vld [vmem:[%s2250 + $0x1c] sm:$0xf]
    %v2259 = vld [vmem:[%s2250 + $0x20] sm:$0xf]
    %v2260 = vld [vmem:[%s2250 + $0x24] sm:$0xf]
    %v2261 = vld [vmem:[%s2250 + $0x28] sm:$0xf]
    %v2262 = vld [vmem:[%s2250 + $0x2c] sm:$0xf]
    %v2263 = vld [vmem:[%s2250 + $0x30] sm:$0xf]
    %v2264 = vld [vmem:[%s2250 + $0x34] sm:$0xf]
    %v2265 = vld [vmem:[%s2250 + $0x38] sm:$0xf]
    %v2266 = vld [vmem:[%s2250 + $0x3c] sm:$0xf]
    %s2267 = scalar_lea.vmem %s22, 1
    %v2268 = vld [vmem:[%s2267] sm:$0x1]
    %v2270 = vlaneseq
    %v2271 = vshrl.u32 %v2270, 7
    %v2272 = vsub.s32 0, %v2271
    %v2273 = vrot.slane %v2268, %v2272
    %v2291 = vunpack.c.l.b16 %v2251
    %v2292 = vunpack.c.l.b16 %v2252
    %v2293 = vunpack.c.l.b16 %v2253
    %v2294 = vunpack.c.l.b16 %v2254
    %v2295 = vunpack.c.l.b16 %v2255
    %v2296 = vunpack.c.l.b16 %v2256
    %v2297 = vunpack.c.l.b16 %v2257
    %v2298 = vunpack.c.l.b16 %v2258
    %v2299 = vunpack.c.l.b16 %v2259
    %v2300 = vunpack.c.l.b16 %v2260
    %v2301 = vunpack.c.l.b16 %v2261
    %v2302 = vunpack.c.l.b16 %v2262
    %v2303 = vunpack.c.l.b16 %v2263
    %v2304 = vunpack.c.l.b16 %v2264
    %v2305 = vunpack.c.l.b16 %v2265
    %v2306 = vunpack.c.l.b16 %v2266
    %v2307 = vpack.c.b16 %v2292, %v2291
    %v2308 = vpack.c.b16 %v2294, %v2293
    %v2309 = vpack.c.b16 %v2296, %v2295
    %v2310 = vpack.c.b16 %v2298, %v2297
    %v2311 = vpack.c.b16 %v2300, %v2299
    %v2312 = vpack.c.b16 %v2302, %v2301
    %v2313 = vpack.c.b16 %v2304, %v2303
    %v2314 = vpack.c.b16 %v2306, %v2305
    %2323 = vmatprep.subr.bf16.mxu0 0
    %2324 = vmatpush1.bf16.msra.mxu0 %v2307
    %2325 = vmatprep.subr.bf16.mxu0 0
    %2326 = vmatpush1.bf16.msra.mxu0 %v2308
    %2327 = vmatprep.subr.bf16.mxu0 0
    %2328 = vmatpush1.bf16.msra.mxu0 %v2309
    %2329 = vmatprep.subr.bf16.mxu0 0
    %2330 = vmatpush1.bf16.msra.mxu0 %v2310
    %2331 = vmatprep.subr.bf16.mxu0 0
    %2332 = vmatpush1.bf16.msra.mxu0 %v2311
    %2333 = vmatprep.subr.bf16.mxu0 0
    %2334 = vmatpush1.bf16.msra.mxu0 %v2312
    %2335 = vmatprep.subr.bf16.mxu0 0
    %2336 = vmatpush1.bf16.msra.mxu0 %v2313
    %2337 = vmatprep.subr.bf16.mxu0 0
    %2338 = vmatpush1.bf16.msra.mxu0 %v2314
    %2339 = vmatprep.subr.bf16.mxu0 0
    %2340 = vmatpush1.bf16.msra.mxu0 0
    %2341 = vmatprep.subr.bf16.mxu0 0
    %2342 = vmatpush1.bf16.msra.mxu0 0
    %2343 = vmatprep.subr.bf16.mxu0 0
    %2344 = vmatpush1.bf16.msra.mxu0 0
    %2345 = vmatprep.subr.bf16.mxu0 0
    %2346 = vmatpush1.bf16.msra.mxu0 0
    %2347 = vmatprep.subr.bf16.mxu0 0
    %2348 = vmatpush1.bf16.msra.mxu0 0
    %2349 = vmatprep.subr.bf16.mxu0 0
    %2350 = vmatpush1.bf16.msra.mxu0 0
    %2351 = vmatprep.subr.bf16.mxu0 0
    %2352 = vmatpush1.bf16.msra.mxu0 0
    %2353 = vmatprep.subr.bf16.mxu0 0
    %2354 = vmatpush1.bf16.msra.mxu0 0
    %2355 = vmatprep.mubr.bf16.mxu0 0
    %2356 = vmatmul.mubr.bf16.gmra.mrb[0].mxu0 %v2249
    %v2357 = vpop.f32.mrb[0].mxu0
    %v2358 = vadd.f32 %v2273, %v2357
    %v2359 = vpop.f32.mrb[0].mxu0
    %v2360 = vpop.f32.mrb[0].mxu0
    %v2361 = vadd.f32 %v2273, %v2360
    %v2362 = vpop.f32.mrb[0].mxu0
    %2363 = vdwg.mxu0
    %v2364 = vadd.f32 %v2113, %v2358
    %v2365 = vadd.f32 %v2114, %v2361
    %v2366 = vld [vmem:[#allocation5] sm:$0xff]
    %v2367 = vld [vmem:[#allocation5 + $0x8] sm:$0xff]
    %v2368 = vmul.f32 %v2364, %v2366
    %v2369 = vmul.f32 %v2365, %v2367
    %v2370 = vsel %vm201, %v2368, 0.0
    %2371 = vadd.xlane.f32.xlu0 %v2370
    %v2372 = vpop.xlane.xlu0 %2371
    %v2373 = vsel %vm201, %v2369, 0.0
    %2374 = vadd.xlane.f32.xlu0 %v2373
    %v2375 = vpop.xlane.xlu0 %2374
    %v2376 = vld [vmem:[#allocation7] sm:$0xff]
    %v2377 = vld [vmem:[#allocation7 + $0x8] sm:$0xff]
    %v2378 = vmul.f32 %v2364, %v2376
    %v2379 = vmul.f32 %v2365, %v2377
    %v2380 = vsel %vm201, %v2378, 0.0
    %2381 = vadd.xlane.f32.xlu0 %v2380
    %v2382 = vpop.xlane.xlu0 %2381
    %v2383 = vsel %vm201, %v2379, 0.0
    %2384 = vadd.xlane.f32.xlu0 %v2383
    %v2385 = vpop.xlane.xlu0 %2384
    %v2386 = vcvt.s32.f32 %v153
    %v2387 = vsub.f32 0.0, %v2372
    %v2388 = vsub.f32 0.0, %v2375
    %v2389 = vmax.f32 %v2387, 0.0
    %v2390 = vmax.f32 %v2388, 0.0
    %v2391 = vand.u32 2147483647, %v2387
    %v2392 = vand.u32 2147483647, %v2388
    %v2393 = vsub.f32 0.0, %v2391
    %v2394 = vsub.f32 0.0, %v2392
    %v2395 = vmul.f32 %v2393, 1.442695
    %v2396 = vpow.pop %v2395
    %v2397 = vmul.f32 %v2394, 1.442695
    %v2398 = vpow.pop %v2397
    %v2399 = vadd.f32 %v2396, 1.0
    %v2400 = vlog2.pop %v2399
    %v2401 = vmul.f32 %v2400, 0.6931472
    %v2402 = vmul.f32 -0.5, %v2396
    %v2403 = vadd.f32 %v2402, 1.0
    %v2404 = vmul.f32 %v2403, %v2396
    %v2405 = vand.u32 2147483647, %v2396
    %vm2406 = vcmp.lt.f32.partialorder %v2405, 0.0004427343
    %v2407 = vsel %vm2406, %v2404, %v2401
    %v2408 = vadd.f32 %v2398, 1.0
    %v2409 = vlog2.pop %v2408
    %v2410 = vmul.f32 %v2409, 0.6931472
    %v2411 = vmul.f32 -0.5, %v2398
    %v2412 = vadd.f32 %v2411, 1.0
    %v2413 = vmul.f32 %v2412, %v2398
    %v2414 = vand.u32 2147483647, %v2398
    %vm2415 = vcmp.lt.f32.partialorder %v2414, 0.0004427343
    %v2416 = vsel %vm2415, %v2413, %v2410
    %v2417 = vadd.f32 %v2389, %v2407
    %v2418 = vadd.f32 %v2390, %v2416
    %v2420 = vlaneseq
    %v2421 = vshrl.u32 %v2420, 7
    %v2422 = vsub.s32 0, %v2421
    %v2423 = vrot.slane %v2386, %v2422
    %2425 = vbcast.lane.b32.xlu0 %v2423, 256
    %v2426 = vpop.permute.xlu0 %2425
    %v2427 = vlaneseq
    %v2428 = vshrl.u32 %v2427, 7
    %v2429 = vsub.s32 1, %v2428
    %v2430 = vrot.slane %v2386, %v2429
    %2432 = vbcast.lane.b32.xlu0 %v2430, 256
    %v2433 = vpop.permute.xlu0 %2432
    %v2436 = vmul.f32 %v2417, %v2426
    %v2437 = vmul.f32 %v2418, %v2433
    %2440 = vset.pattern.permute.xlu0 0
    %2441 = vperm.xlu0 %2440, %v2436
    %v2442 = vpop.permute.xlu0 %2441
    %2443 = vset.pattern.permute.xlu0 0
    %2444 = vperm.xlu0 %2443, %v2437
    %v2445 = vpop.permute.xlu0 %2444
    %v2446 = vlaneseq
    %v2447 = vshrl.u32 %v2446, 7
    %v2448 = vsub.s32 %v151, %v2447
    %v2449 = vrot.slane %v2442, %v2448
    %v2450 = vlaneseq
    %v2451 = vshrl.u32 %v2450, 7
    %v2452 = vsub.s32 %v151, %v2451
    %v2453 = vrot.slane %v2445, %v2452
    %vm2454 = vcmask 1041409
    %v2455 = vsel %vm2454, %v2453, %v2449
    %vm2457 = vcmask 58368
    %v2458 = vsel %vm2457, %v2455, 0.0
    %2459 = vadd.xlane.f32.xlu0 %v2458
    %v2460 = vpop.xlane.xlu0 %2459
    %vm2461 = vcmask 1041408
    %v2462 = vsel %vm2461, %v2460, 0.0
    %v2463 = vrot.slane %v2462, 4
    %v2464 = vadd.f32 %v2462, %v2463
    %v2465 = vrot.slane %v2464, 2
    %v2466 = vadd.f32 %v2464, %v2465
    %v2467 = vrot.slane %v2466, 1
    %v2468 = vadd.f32 %v2466, %v2467
    %vm2469 = vcmask 0
    %2470 = vst.msk [vmem:[#allocation11] sm:$0x1] %vm2469, %v2468
    %v2471 = vmax.f32 %v2382, 0.0
    %v2472 = vmax.f32 %v2385, 0.0
    %v2473 = vand.u32 2147483647, %v2382
    %v2474 = vand.u32 2147483647, %v2385
    %v2475 = vsub.f32 0.0, %v2473
    %v2476 = vsub.f32 0.0, %v2474
    %v2477 = vmul.f32 %v2475, 1.442695
    %v2478 = vpow.pop %v2477
    %v2479 = vmul.f32 %v2476, 1.442695
    %v2480 = vpow.pop %v2479
    %v2481 = vadd.f32 %v2478, 1.0
    %v2482 = vlog2.pop %v2481
    %v2483 = vmul.f32 %v2482, 0.6931472
    %v2484 = vmul.f32 -0.5, %v2478
    %v2485 = vadd.f32 %v2484, 1.0
    %v2486 = vmul.f32 %v2485, %v2478
    %v2487 = vand.u32 2147483647, %v2478
    %vm2488 = vcmp.lt.f32.partialorder %v2487, 0.0004427343
    %v2489 = vsel %vm2488, %v2486, %v2483
    %v2490 = vadd.f32 %v2480, 1.0
    %v2491 = vlog2.pop %v2490
    %v2492 = vmul.f32 %v2491, 0.6931472
    %v2493 = vmul.f32 -0.5, %v2480
    %v2494 = vadd.f32 %v2493, 1.0
    %v2495 = vmul.f32 %v2494, %v2480
    %v2496 = vand.u32 2147483647, %v2480
    %vm2497 = vcmp.lt.f32.partialorder %v2496, 0.0004427343
    %v2498 = vsel %vm2497, %v2495, %v2492
    %v2499 = vadd.f32 %v2471, %v2489
    %v2500 = vadd.f32 %v2472, %v2498
    %v2501 = vmul.f32 %v2499, %v2426
    %v2502 = vmul.f32 %v2500, %v2433
    %2505 = vset.pattern.permute.xlu0 0
    %2506 = vperm.xlu0 %2505, %v2501
    %v2507 = vpop.permute.xlu0 %2506
    %2508 = vset.pattern.permute.xlu0 0
    %2509 = vperm.xlu0 %2508, %v2502
    %v2510 = vpop.permute.xlu0 %2509
    %v2511 = vlaneseq
    %v2512 = vshrl.u32 %v2511, 7
    %v2513 = vsub.s32 %v151, %v2512
    %v2514 = vrot.slane %v2507, %v2513
    %v2515 = vlaneseq
    %v2516 = vshrl.u32 %v2515, 7
    %v2517 = vsub.s32 %v151, %v2516
    %v2518 = vrot.slane %v2510, %v2517
    %v2519 = vsel %vm2454, %v2518, %v2514
    %v2521 = vsel %vm2457, %v2519, 0.0
    %2522 = vadd.xlane.f32.xlu0 %v2521
    %v2523 = vpop.xlane.xlu0 %2522
    %v2524 = vsel %vm2461, %v2523, 0.0
    %v2525 = vrot.slane %v2524, 4
    %v2526 = vadd.f32 %v2524, %v2525
    %v2527 = vrot.slane %v2526, 2
    %v2528 = vadd.f32 %v2526, %v2527
    %v2529 = vrot.slane %v2528, 1
    %v2530 = vadd.f32 %v2528, %v2529
    %2531 = vst.msk [vmem:[#allocation12] sm:$0x1] %vm2469, %v2530
    %v2532 = vsel %vm2457, %v2386, 0.0
    %2533 = vadd.xlane.f32.xlu0 %v2532
    %v2534 = vpop.xlane.xlu0 %2533
    %v2535 = vsel %vm2461, %v2534, 0.0
    %v2536 = vrot.slane %v2535, 4
    %v2537 = vadd.f32 %v2535, %v2536
    %v2538 = vrot.slane %v2537, 2
    %v2539 = vadd.f32 %v2537, %v2538
    %v2540 = vrot.slane %v2539, 1
    %v2541 = vadd.f32 %v2539, %v2540
    %2542 = vst.msk [vmem:[#allocation14] sm:$0x1] %vm2469, %v2541
    // Predicated region
    $region114: #{tpu_custom_call.1} parent=1 // pred_check
      _
    $region115: #{tpu_custom_call.1} parent=1 // pred_check_branch
      %2544 = sbr.rel (0) target = $region117
    $region116: #{tpu_custom_call.1} parent=1 // pred_region
      %s2546 = ssub.s32 16, 16
      %2547 = vsyncadd [#allocation4], %s2546
      %s2549 = sshll.u32 [#allocation11], 4
      %s2550 = int_to_ptr.vmem [resolvable:$true] %s2549
      %2552 = dma.vmem_to_hbm [thread:$0]  %s2550, 16, %s23, [#allocation4]
    $region117: #{tpu_custom_call.1} parent=1 // pred_fallthru
      _
    // Predicated region
    $region118: #{tpu_custom_call.1} parent=1 // pred_check
      _
    $region119: #{tpu_custom_call.1} parent=1 // pred_check_branch
      %2554 = sbr.rel (0) target = $region121
    $region120: #{tpu_custom_call.1} parent=1 // pred_region
      %s2556 = ssub.s32 16, 16
      %2557 = vsyncadd [#allocation13], %s2556
      %s2559 = sshll.u32 [#allocation12], 4
      %s2560 = int_to_ptr.vmem [resolvable:$true] %s2559
      %2562 = dma.vmem_to_hbm [thread:$0]  %s2560, 16, %s24, [#allocation13]
    $region121: #{tpu_custom_call.1} parent=1 // pred_fallthru
      _
    // Predicated region
    $region122: #{tpu_custom_call.1} parent=1 // pred_check
      _
    $region123: #{tpu_custom_call.1} parent=1 // pred_check_branch
      %2564 = sbr.rel (0) target = $region125
    $region124: #{tpu_custom_call.1} parent=1 // pred_region
      %s2566 = ssub.s32 16, 16
      %2567 = vsyncadd [#allocation13], %s2566
      %s2569 = sshll.u32 [#allocation14], 4
      %s2570 = int_to_ptr.vmem [resolvable:$true] %s2569
      %2572 = dma.vmem_to_hbm [thread:$0]  %s2570, 16, %s25, [#allocation13]
    $region125: #{tpu_custom_call.1} parent=1 // pred_fallthru
      _
    // Predicated region
    $region126: #{tpu_custom_call.1} parent=1 // pred_check
      _
    $region127: #{tpu_custom_call.1} parent=1 // pred_check_branch
      %2574 = sbr.rel (0) target = $region129
    $region128: #{tpu_custom_call.1} parent=1 // pred_region
      %2575 = dma.done [#allocation4], 16
    $region129: #{tpu_custom_call.1} parent=1 // pred_fallthru
      _
    // Predicated region
    $region130: #{tpu_custom_call.1} parent=1 // pred_check
      _
    $region131: #{tpu_custom_call.1} parent=1 // pred_check_branch
      %2577 = sbr.rel (0) target = $region133
    $region132: #{tpu_custom_call.1} parent=1 // pred_region
      %2578 = dma.done [#allocation13], 16
    $region133: #{tpu_custom_call.1} parent=1 // pred_fallthru
      _
    // Predicated region
    $region134: #{tpu_custom_call.1} parent=1 // pred_check
      _
    $region135: #{tpu_custom_call.1} parent=1 // pred_check_branch
      %2580 = sbr.rel (0) target = $region137
    $region136: #{tpu_custom_call.1} parent=1 // pred_region
      %2581 = dma.done [#allocation13], 16
    $region137: #{tpu_custom_call.1} parent=1 // pred_fallthru
      _
    %2582 = vsyncpa [#allocation3], 1
    %2583 = vsyncpa [#allocation6], 1
    %2584 = vsyncpa [#allocation9], 1
    %2585 = vsyncpa [#allocation4], 1
    %2586 = vsyncpa [#allocation13], 1

</llo_original>
